<compile_context>
chip_gen: v5e
topology: v5e:2x2
jax: 0.10.0
libtpu: 0.0.40
codegen_flags: <defaults>
</compile_context>

<pallas_src>
import functools
import math

import jax
import jax.numpy as jnp
from jax.experimental import pallas as pl
from jax.experimental.pallas import tpu as pltpu

_BN_EPS = 1e-5
_BN_SCALE = 1.0 / math.sqrt(1.0 + _BN_EPS)  # gamma=1, beta=0, mean=0, var=1


def _round_up(x, m):
    return ((x + m - 1) // m) * m


# ----------------------------------------------------------------------------
# Pallas kernel: tiled batched matmul with fused affine (+ tanh) epilogue
# ----------------------------------------------------------------------------
def _fused_matmul_kernel(p_ref, w_ref, scale_ref, shift_ref, o_ref, acc_ref,
                         *, tanh):
    # grid = (B, Mt, Nt, Kt); K is the innermost (reduction) axis.
    @pl.when(pl.program_id(3) == 0)
    def _():
        acc_ref[...] = jnp.zeros_like(acc_ref)

    acc_ref[...] += jnp.dot(p_ref[...], w_ref[...],
                            preferred_element_type=jnp.float32)

    @pl.when(pl.program_id(3) == pl.num_programs(3) - 1)
    def _():
        y = acc_ref[...] * scale_ref[...] + shift_ref[...]
        if tanh:
            y = jnp.tanh(y)
        o_ref[...] = y.astype(o_ref.dtype)


def _tile_plan(B, M, Kp, Np):
    """Pick (TM, TN, TK, Mp, vmem_limit_bytes) for one fused-matmul layer."""
    TM = min(512, _round_up(M, 16))              # bf16 sublane packing
    Mp = _round_up(M, TM)
    Mt = Mp // TM

    # Lane-dense output; prefer 256-wide N tiles (v6e/v7x 256x256 MXU).
    TN = 256 if (Np % 256 == 0) else 128
    # v7x megacore: expose >= 2 iterations on some parallel axis if possible.
    if B * Mt * (Np // TN) < 2 and Np >= 256:
        TN = 128

    def footprint(tk):
        return (2 * (TM * tk + tk * TN) * 2      # bf16 input tiles, 2x buffered
                + 2 * TM * TN * 2                # bf16 output tile, 2x buffered
                + TM * TN * 4                    # f32 accumulator scratch
                + 4 * 2 * TN * 4)                # scale/shift tiles

    budget = 20 * 1024 * 1024
    # Adaptive K tiling: small-M (deep) layers run K untiled so the grid
    # collapses to a single step; large-M layers use MXU-friendly K tiles.
    cands = ([Kp] if M <= 512 else []) + [k for k in (512, 256, 128)
                                          if Kp % k == 0]
    TK = next((k for k in cands if footprint(k) <= budget), cands[-1])

    vmem_limit = int(min(32 * 1024 * 1024,
                         max(8 * 1024 * 1024,
                             footprint(TK) + 4 * 1024 * 1024)))
    return TM, TN, TK, Mp, vmem_limit


def fused_matmul(patches, w, scale, shift, co, *, tanh=False):
    """patches [B,M,K] bf16 @ w [B,Kp,Np] bf16 (pre-padded) -> [B,M,co] bf16.

    scale/shift [1,Np] f32 are applied per output channel in the epilogue
    (bias, or eval-mode BatchNorm fold); optional tanh for the last layer.
    """
    B, M, K = patches.shape
    Kp, Np = w.shape[1], w.shape[2]
    TM, TN, TK, Mp, vmem_limit = _tile_plan(B, M, Kp, Np)

    patches = jnp.pad(patches, ((0, 0), (0, Mp - M), (0, Kp - K)))

    grid = (B, Mp // TM, Np // TN, Kp // TK)
    out = pl.pallas_call(
        functools.partial(_fused_matmul_kernel, tanh=tanh),
        out_shape=jax.ShapeDtypeStruct((B, Mp, Np), jnp.bfloat16),
        grid_spec=pltpu.PrefetchScalarGridSpec(
            num_scalar_prefetch=0,
            grid=grid,
            in_specs=[
                pl.BlockSpec((pl.Squeezed(), TM, TK),
                             lambda b, i, j, k: (b, i, k)),
                pl.BlockSpec((pl.Squeezed(), TK, TN),
                             lambda b, i, j, k: (b, k, j)),
                pl.BlockSpec((1, TN), lambda b, i, j, k: (0, j)),
                pl.BlockSpec((1, TN), lambda b, i, j, k: (0, j)),
            ],
            out_specs=pl.BlockSpec((pl.Squeezed(), TM, TN),
                                   lambda b, i, j, k: (b, i, j)),
            scratch_shapes=[pltpu.VMEM((TM, TN), jnp.float32)],
        ),
        compiler_params=pltpu.CompilerParams(
            dimension_semantics=("parallel", "parallel", "parallel",
                                 "arbitrary"),
            vmem_limit_bytes=vmem_limit,
        ),
    )(patches, w, scale, shift)
    return out[:, :M, :co]


# ----------------------------------------------------------------------------
# Glue: activations + patch extraction (NHWC, bf16, static slices only)
# ----------------------------------------------------------------------------
def _activate(x, act):
    if act == "leaky":
        return jnp.where(x > 0, x, 0.2 * x)     # LeakyReLU(0.2)
    if act == "relu":
        return jnp.maximum(x, 0.0)
    return x


def _extract_patches_s2(x):
    """im2col for Conv2d(k=4, s=2, p=1) on NHWC input via 16 static slices."""
    N, H, W, C = x.shape
    Ho, Wo = H // 2, W // 2
    xp = jnp.pad(x, ((0, 0), (1, 1), (1, 1), (0, 0)))
    taps = []
    for kh in range(4):
        for kw in range(4):
            taps.append(xp[:, kh:kh + 2 * Ho - 1:2, kw:kw + 2 * Wo - 1:2, :])
    p = jnp.stack(taps, axis=3)                  # [N, Ho, Wo, 16, C]
    return p.reshape(N * Ho * Wo, 16 * C), N, Ho, Wo


def _extract_convT_phase_patches(x):
    """ConvT(k=4,s=2,p=1) as 4 output-phase 2x2 convs: patches [4, N*H*W, 4C]."""
    N, H, W, C = x.shape
    xp = jnp.pad(x, ((0, 0), (1, 1), (1, 1), (0, 0)))
    phases = []
    for ph in (0, 1):
        for pw in (0, 1):
            taps = [xp[:, ph + r:ph + r + H, pw + s:pw + s + W, :]
                    for r in (0, 1) for s in (0, 1)]
            p = jnp.stack(taps, axis=3)          # [N, H, W, 4, C]
            phases.append(p.reshape(N * H * W, 4 * C))
    return jnp.stack(phases, axis=0)             # [4, M, 4*C]


def conv_down(x, p, co, act=None):
    """LeakyReLU? -> Conv2d(k=4,s=2,p=1) -> scale/shift (bias or folded BN)."""
    x = _activate(x, act)
    patches, N, Ho, Wo = _extract_patches_s2(x)
    out = fused_matmul(patches.astype(jnp.bfloat16)[None],
                       p["w"], p["scale"], p["shift"], co)
    return out[0].reshape(N, Ho, Wo, co)


def conv_up(x, p, co, act=None, tanh=False):
    """ReLU? -> ConvTranspose2d(k=4,s=2,p=1) -> scale/shift (+ tanh)."""
    x = _activate(x, act)
    N, H, W, _ = x.shape
    patches = _extract_convT_phase_patches(x).astype(jnp.bfloat16)  # [4,M,4C]
    out = fused_matmul(patches, p["w"], p["scale"], p["shift"], co, tanh=tanh)
    out = out.reshape(2, 2, N, H, W, co)         # (ph, pw, N, H, W, Co), bf16
    out = out.transpose(2, 3, 0, 4, 1, 5)        # (N, H, ph, W, pw, Co)
    return out.reshape(N, 2 * H, 2 * W, co)


# ----------------------------------------------------------------------------
# Parameters: matmul-ready layouts, pre-padded to (Kp, Np), bf16 weights
# ----------------------------------------------------------------------------
def _affine(co, bias_vec):
    if bias_vec is None:   # bias=False -> eval-mode BatchNorm fold
        return (jnp.full((1, co), _BN_SCALE, jnp.float32),
                jnp.zeros((1, co), jnp.float32))
    return jnp.ones((1, co), jnp.float32), bias_vec.reshape(1, co)


def _convT_phase_weights(wT):
    """PyTorch ConvT weight [Ci,Co,4,4] -> per-phase matmul weights [4,4Ci,Co].

    Even output rows:  y[2m]   = x[m-1]*wT[3] + x[m]*wT[1]
    Odd  output rows:  y[2m+1] = x[m]*wT[2]   + x[m+1]*wT[0]   (same along W).
    """
    ci, co = wT.shape[0], wT.shape[1]
    mats = []
    for ph in (0, 1):
        ridx = jnp.array([3, 1]) if ph == 0 else jnp.array([2, 0])
        for pw in (0, 1):
            cidx = jnp.array([3, 1]) if pw == 0 else jnp.array([2, 0])
            sub = wT[:, :, ridx, :][:, :, :, cidx]          # [Ci, Co, 2, 2]
            mats.append(sub.transpose(2, 3, 0, 1).reshape(4 * ci, co))
    return jnp.stack(mats, axis=0)                          # [4, 4*Ci, Co]


def _pad_knp(w, scale, shift, K, co):
    Kp, Np = _round_up(K, 128), _round_up(co, 128)
    w = jnp.pad(w, ((0, 0), (0, Kp - K), (0, Np - co)))
    scale = jnp.pad(scale, ((0, 0), (0, Np - co)))   # padded channels -> 0
    shift = jnp.pad(shift, ((0, 0), (0, Np - co)))
    return w.astype(jnp.bfloat16), scale, shift


def _conv_params(key, ci, co, bias):
    kw_, kb = jax.random.split(key)
    w = jax.random.normal(kw_, (co, ci, 4, 4), jnp.float32) * 0.02
    w_mat = w.transpose(2, 3, 1, 0).reshape(16 * ci, co)[None]   # [1, 16Ci, Co]
    b = jax.random.normal(kb, (co,), jnp.float32) * 0.02 if bias else None
    scale, shift = _affine(co, b)
    w_mat, scale, shift = _pad_knp(w_mat, scale, shift, 16 * ci, co)
    return {"w": w_mat, "scale": scale, "shift": shift}


def _convT_params(key, ci, co, bias):
    kw_, kb = jax.random.split(key)
    wT = jax.random.normal(kw_, (ci, co, 4, 4), jnp.float32) * 0.02
    w_ph = _convT_phase_weights(wT)                               # [4, 4Ci, Co]
    b = jax.random.normal(kb, (co,), jnp.float32) * 0.02 if bias else None
    scale, shift = _affine(co, b)
    w_ph, scale, shift = _pad_knp(w_ph, scale, shift, 4 * ci, co)
    return {"w": w_ph, "scale": scale, "shift": shift}


def _feat_list(opt):
    feats = [opt["nb_feat_init_G"]]
    for _ in range(opt["nb_down_G"] - 2):
        feats.append(min(feats[-1] * 2, 512))
    return feats


def init_params(opt, key):
    feats = _feat_list(opt)
    keys = iter(jax.random.split(key, 64))
    params = {}
    params["down0"] = _conv_params(next(keys), opt["ch_inp"], feats[0], bias=True)
    params["up0"] = _convT_params(next(keys), feats[0] * 2, opt["ch_tar"], bias=True)
    for i in range(1, opt["nb_down_G"] - 1):
        params[f"down{i}"] = _conv_params(next(keys), feats[i - 1], feats[i], bias=False)
        params[f"up{i}"] = _convT_params(next(keys), feats[i] * 2, feats[i - 1], bias=False)
    nc_in, nc_out = feats[-1], min(feats[-1] * 2, 512)
    params["center_conv"] = _conv_params(next(keys), nc_in, nc_out, bias=True)
    params["center_convT"] = _convT_params(next(keys), nc_out, nc_in, bias=False)
    return params


# ----------------------------------------------------------------------------
# Forward pass (mirrors UnetGenerator.forward; NHWC + bf16 internally)
# ----------------------------------------------------------------------------
def unet_forward(x, params, opt):
    nbd = opt["nb_down_G"]
    feats = _feat_list(opt)
    nc_out = min(feats[-1] * 2, 512)

    h = jnp.transpose(x, (0, 2, 3, 1)).astype(jnp.bfloat16)   # NCHW->NHWC once

    skips = [h]
    # block_down_0: Conv(bias=True), no pre-activation, no BN
    h = conv_down(h, params["down0"], feats[0], act=None)
    skips.append(h)
    # block_down_i: LeakyReLU -> Conv(bias=False) -> BN
    for i in range(1, nbd - 1):
        h = conv_down(h, params[f"down{i}"], feats[i], act="leaky")
        skips.append(h)

    # block_center: LeakyReLU -> Conv(bias) -> ReLU -> ConvT -> BN -> Dropout
    h = conv_down(h, params["center_conv"], nc_out, act="leaky")
    h = conv_up(h, params["center_convT"], feats[-1], act="relu")

    # up path with skip connections
    for j in range(nbd - 1):
        tmp = jnp.concatenate([h, skips[-j - 1]], axis=-1)
        idx = nbd - j - 2
        if idx == 0:
            # block_up_0: ConvT(bias=True) -> Tanh  (no pre-activation)
            h = conv_up(tmp, params["up0"], opt["ch_tar"], act=None, tanh=True)
        else:
            # block_up_i: ReLU -> ConvT(bias=False) -> BN (-> Dropout=identity)
            h = conv_up(tmp, params[f"up{idx}"], feats[idx - 1], act="relu")

    return jnp.transpose(h, (0, 3, 1, 2)).astype(jnp.float32)  # NHWC -> NCHW


# ----------------------------------------------------------------------------
if __name__ == "__main__":
    opt = dict(ch_inp=4, ch_tar=4, nb_feat_init_G=8, nb_down_G=4)

    key = jax.random.PRNGKey(0)
    k_params, k_x = jax.random.split(key)
    params = init_params(opt, k_params)
    x = jax.random.normal(k_x, (2, opt["ch_inp"], 16, 16), jnp.float32)

    fwd = jax.jit(functools.partial(unet_forward, opt=opt))
    out = jax.block_until_ready(fwd(x, params))

    assert out.shape == (2, opt["ch_tar"], 16, 16), out.shape
    assert bool(jnp.all(jnp.isfinite(out)))
    assert bool(jnp.all(jnp.abs(out) <= 1.0 + 1e-6))  # tanh-bounded output
    print("KERNEL_OK")
</pallas_src>

<mosaic_0001>
module attributes {stable_mosaic.version = 11 : i64} {
  func.func @_fused_matmul_kernel(%arg0: i32, %arg1: i32, %arg2: i32, %arg3: i32, %arg4: memref<1x128x128xbf16, #tpu.memory_space<vmem>>, %arg5: memref<1x128x128xbf16, #tpu.memory_space<vmem>>, %arg6: memref<1x128xf32, #tpu.memory_space<vmem>>, %arg7: memref<1x128xf32, #tpu.memory_space<vmem>>, %arg8: memref<1x128x128xbf16, #tpu.memory_space<vmem>>, %arg9: memref<128x128xf32, #tpu.memory_space<vmem>>) attributes {dimension_semantics = [#tpu.dimension_semantics<parallel>, #tpu.dimension_semantics<parallel>, #tpu.dimension_semantics<parallel>, #tpu.dimension_semantics<arbitrary>], iteration_bounds = array<i64: 1, 1, 1, 1>, scalar_prefetch = 0 : i64, scratch_operands = 1 : i64, tpu.core_type = #tpu.core_type<tc>, window_params = [{transform_indices = @transform_0, window_bounds = array<i64: 1, 128, 128>}, {transform_indices = @transform_1, window_bounds = array<i64: 1, 128, 128>}, {transform_indices = @transform_2, window_bounds = array<i64: 1, 128>}, {transform_indices = @transform_3, window_bounds = array<i64: 1, 128>}, {transform_indices = @transform_4, window_bounds = array<i64: 1, 128, 128>}]} {
    %c0_i32 = arith.constant 0 : i32
    %0 = arith.cmpi eq, %arg3, %c0_i32 : i32
    %1 = arith.extui %0 : i1 to i32
    %c0_i32_0 = arith.constant 0 : i32
    %2 = arith.cmpi ne, %1, %c0_i32_0 : i32
    scf.if %2 {
      %cst_12 = arith.constant 0.000000e+00 : f32
      %14 = vector.broadcast %cst_12 : f32 to vector<128x128xf32>
      %c0_13 = arith.constant 0 : index
      %c0_14 = arith.constant 0 : index
      %15 = vector.load %arg9[%c0_13, %c0_14] : memref<128x128xf32, #tpu.memory_space<vmem>>, vector<128x128xf32>
      tpu.vector_store %arg9[%c0_13, %c0_14], %14 {strides = array<i32>} : memref<128x128xf32, #tpu.memory_space<vmem>>, vector<128x128xf32>,
    } else {
    }
    %c0 = arith.constant 0 : index
    %c0_1 = arith.constant 0 : index
    %3 = vector.load %arg9[%c0, %c0_1] : memref<128x128xf32, #tpu.memory_space<vmem>>, vector<128x128xf32>
    %c0_2 = arith.constant 0 : index
    %c0_3 = arith.constant 0 : index
    %c0_4 = arith.constant 0 : index
    %4 = vector.load %arg4[%c0_2, %c0_3, %c0_4] : memref<1x128x128xbf16, #tpu.memory_space<vmem>>, vector<1x128x128xbf16>
    %5 = vector.shape_cast %4 : vector<1x128x128xbf16> to vector<128x128xbf16>
    %c0_5 = arith.constant 0 : index
    %c0_6 = arith.constant 0 : index
    %c0_7 = arith.constant 0 : index
    %6 = vector.load %arg5[%c0_5, %c0_6, %c0_7] : memref<1x128x128xbf16, #tpu.memory_space<vmem>>, vector<1x128x128xbf16>
    %7 = vector.shape_cast %6 : vector<1x128x128xbf16> to vector<128x128xbf16>
    %cst = arith.constant dense<0.000000e+00> : vector<128x128xf32>
    %8 = tpu.matmul %5, %7, %cst {dimension_numbers = #tpu.dot_dimension_numbers<[1], [0], [0], [1], [0, 0, 1, 1], [], []>} : vector<128x128xbf16>, vector<128x128xbf16>, vector<128x128xf32> -> vector<128x128xf32>
    %9 = arith.addf %3, %8 : vector<128x128xf32>
    %c0_8 = arith.constant 0 : index
    %c0_9 = arith.constant 0 : index
    %10 = vector.load %arg9[%c0_8, %c0_9] : memref<128x128xf32, #tpu.memory_space<vmem>>, vector<128x128xf32>
    tpu.vector_store %arg9[%c0_8, %c0_9], %9 {strides = array<i32>} : memref<128x128xf32, #tpu.memory_space<vmem>>, vector<128x128xf32>,
    %c0_i32_10 = arith.constant 0 : i32
    %11 = arith.cmpi eq, %arg3, %c0_i32_10 : i32
    %12 = arith.extui %11 : i1 to i32
    %c0_i32_11 = arith.constant 0 : i32
    %13 = arith.cmpi ne, %12, %c0_i32_11 : i32
    scf.if %13 {
      %c0_12 = arith.constant 0 : index
      %c0_13 = arith.constant 0 : index
      %14 = vector.load %arg9[%c0_12, %c0_13] : memref<128x128xf32, #tpu.memory_space<vmem>>, vector<128x128xf32>
      %c0_14 = arith.constant 0 : index
      %c0_15 = arith.constant 0 : index
      %15 = vector.load %arg6[%c0_14, %c0_15] : memref<1x128xf32, #tpu.memory_space<vmem>>, vector<1x128xf32>
      %16 = vector.broadcast %15 : vector<1x128xf32> to vector<128x128xf32>
      %17 = arith.mulf %14, %16 : vector<128x128xf32>
      %c0_16 = arith.constant 0 : index
      %c0_17 = arith.constant 0 : index
      %18 = vector.load %arg7[%c0_16, %c0_17] : memref<1x128xf32, #tpu.memory_space<vmem>>, vector<1x128xf32>
      %19 = vector.broadcast %18 : vector<1x128xf32> to vector<128x128xf32>
      %20 = arith.addf %17, %19 : vector<128x128xf32>
      %21 = arith.truncf %20 : vector<128x128xf32> to vector<128x128xbf16>
      %c0_18 = arith.constant 0 : index
      %c0_19 = arith.constant 0 : index
      %c0_20 = arith.constant 0 : index
      %22 = vector.load %arg8[%c0_18, %c0_19, %c0_20] : memref<1x128x128xbf16, #tpu.memory_space<vmem>>, vector<1x128x128xbf16>
      %23 = vector.shape_cast %22 : vector<1x128x128xbf16> to vector<128x128xbf16>
      %24 = vector.shape_cast %21 : vector<128x128xbf16> to vector<1x128x128xbf16>
      tpu.vector_store %arg8[%c0_18, %c0_19, %c0_20], %24 {strides = array<i32>} : memref<1x128x128xbf16, #tpu.memory_space<vmem>>, vector<1x128x128xbf16>,
    } else {
    }
    return
  }
  func.func @transform_0(%arg0: i32, %arg1: i32, %arg2: i32, %arg3: i32) -> (i32, i32, i32) {
    %c0_i32 = arith.constant 0 : i32
    return %arg0, %arg1, %arg3 : i32, i32, i32
  }
  func.func @transform_1(%arg0: i32, %arg1: i32, %arg2: i32, %arg3: i32) -> (i32, i32, i32) {
    %c0_i32 = arith.constant 0 : i32
    return %arg0, %arg3, %arg2 : i32, i32, i32
  }
  func.func @transform_2(%arg0: i32, %arg1: i32, %arg2: i32, %arg3: i32) -> (i32, i32) {
    %c0_i32 = arith.constant 0 : i32
    %c0_i32_0 = arith.constant 0 : i32
    return %c0_i32, %arg2 : i32, i32
  }
  func.func @transform_3(%arg0: i32, %arg1: i32, %arg2: i32, %arg3: i32) -> (i32, i32) {
    %c0_i32 = arith.constant 0 : i32
    %c0_i32_0 = arith.constant 0 : i32
    return %c0_i32, %arg2 : i32, i32
  }
  func.func @transform_4(%arg0: i32, %arg1: i32, %arg2: i32, %arg3: i32) -> (i32, i32, i32) {
    %c0_i32 = arith.constant 0 : i32
    return %arg0, %arg1, %arg2 : i32, i32, i32
  }
}

module attributes {stable_mosaic.version = 11 : i64} {
  func.func @_fused_matmul_kernel(%arg0: i32, %arg1: i32, %arg2: i32, %arg3: i32, %arg4: memref<1x32x128xbf16, #tpu.memory_space<vmem>>, %arg5: memref<1x128x128xbf16, #tpu.memory_space<vmem>>, %arg6: memref<1x128xf32, #tpu.memory_space<vmem>>, %arg7: memref<1x128xf32, #tpu.memory_space<vmem>>, %arg8: memref<1x32x128xbf16, #tpu.memory_space<vmem>>, %arg9: memref<32x128xf32, #tpu.memory_space<vmem>>) attributes {dimension_semantics = [#tpu.dimension_semantics<parallel>, #tpu.dimension_semantics<parallel>, #tpu.dimension_semantics<parallel>, #tpu.dimension_semantics<arbitrary>], iteration_bounds = array<i64: 1, 1, 1, 1>, scalar_prefetch = 0 : i64, scratch_operands = 1 : i64, tpu.core_type = #tpu.core_type<tc>, window_params = [{transform_indices = @transform_0, window_bounds = array<i64: 1, 32, 128>}, {transform_indices = @transform_1, window_bounds = array<i64: 1, 128, 128>}, {transform_indices = @transform_2, window_bounds = array<i64: 1, 128>}, {transform_indices = @transform_3, window_bounds = array<i64: 1, 128>}, {transform_indices = @transform_4, window_bounds = array<i64: 1, 32, 128>}]} {
    %c0_i32 = arith.constant 0 : i32
    %0 = arith.cmpi eq, %arg3, %c0_i32 : i32
    %1 = arith.extui %0 : i1 to i32
    %c0_i32_0 = arith.constant 0 : i32
    %2 = arith.cmpi ne, %1, %c0_i32_0 : i32
    scf.if %2 {
      %cst_12 = arith.constant 0.000000e+00 : f32
      %14 = vector.broadcast %cst_12 : f32 to vector<32x128xf32>
      %c0_13 = arith.constant 0 : index
      %c0_14 = arith.constant 0 : index
      %15 = vector.load %arg9[%c0_13, %c0_14] : memref<32x128xf32, #tpu.memory_space<vmem>>, vector<32x128xf32>
      tpu.vector_store %arg9[%c0_13, %c0_14], %14 {strides = array<i32>} : memref<32x128xf32, #tpu.memory_space<vmem>>, vector<32x128xf32>,
    } else {
    }
    %c0 = arith.constant 0 : index
    %c0_1 = arith.constant 0 : index
    %3 = vector.load %arg9[%c0, %c0_1] : memref<32x128xf32, #tpu.memory_space<vmem>>, vector<32x128xf32>
    %c0_2 = arith.constant 0 : index
    %c0_3 = arith.constant 0 : index
    %c0_4 = arith.constant 0 : index
    %4 = vector.load %arg4[%c0_2, %c0_3, %c0_4] : memref<1x32x128xbf16, #tpu.memory_space<vmem>>, vector<1x32x128xbf16>
    %5 = vector.shape_cast %4 : vector<1x32x128xbf16> to vector<32x128xbf16>
    %c0_5 = arith.constant 0 : index
    %c0_6 = arith.constant 0 : index
    %c0_7 = arith.constant 0 : index
    %6 = vector.load %arg5[%c0_5, %c0_6, %c0_7] : memref<1x128x128xbf16, #tpu.memory_space<vmem>>, vector<1x128x128xbf16>
    %7 = vector.shape_cast %6 : vector<1x128x128xbf16> to vector<128x128xbf16>
    %cst = arith.constant dense<0.000000e+00> : vector<32x128xf32>
    %8 = tpu.matmul %5, %7, %cst {dimension_numbers = #tpu.dot_dimension_numbers<[1], [0], [0], [1], [0, 0, 1, 1], [], []>} : vector<32x128xbf16>, vector<128x128xbf16>, vector<32x128xf32> -> vector<32x128xf32>
    %9 = arith.addf %3, %8 : vector<32x128xf32>
    %c0_8 = arith.constant 0 : index
    %c0_9 = arith.constant 0 : index
    %10 = vector.load %arg9[%c0_8, %c0_9] : memref<32x128xf32, #tpu.memory_space<vmem>>, vector<32x128xf32>
    tpu.vector_store %arg9[%c0_8, %c0_9], %9 {strides = array<i32>} : memref<32x128xf32, #tpu.memory_space<vmem>>, vector<32x128xf32>,
    %c0_i32_10 = arith.constant 0 : i32
    %11 = arith.cmpi eq, %arg3, %c0_i32_10 : i32
    %12 = arith.extui %11 : i1 to i32
    %c0_i32_11 = arith.constant 0 : i32
    %13 = arith.cmpi ne, %12, %c0_i32_11 : i32
    scf.if %13 {
      %c0_12 = arith.constant 0 : index
      %c0_13 = arith.constant 0 : index
      %14 = vector.load %arg9[%c0_12, %c0_13] : memref<32x128xf32, #tpu.memory_space<vmem>>, vector<32x128xf32>
      %c0_14 = arith.constant 0 : index
      %c0_15 = arith.constant 0 : index
      %15 = vector.load %arg6[%c0_14, %c0_15] : memref<1x128xf32, #tpu.memory_space<vmem>>, vector<1x128xf32>
      %16 = vector.broadcast %15 : vector<1x128xf32> to vector<32x128xf32>
      %17 = arith.mulf %14, %16 : vector<32x128xf32>
      %c0_16 = arith.constant 0 : index
      %c0_17 = arith.constant 0 : index
      %18 = vector.load %arg7[%c0_16, %c0_17] : memref<1x128xf32, #tpu.memory_space<vmem>>, vector<1x128xf32>
      %19 = vector.broadcast %18 : vector<1x128xf32> to vector<32x128xf32>
      %20 = arith.addf %17, %19 : vector<32x128xf32>
      %21 = arith.truncf %20 : vector<32x128xf32> to vector<32x128xbf16>
      %c0_18 = arith.constant 0 : index
      %c0_19 = arith.constant 0 : index
      %c0_20 = arith.constant 0 : index
      %22 = vector.load %arg8[%c0_18, %c0_19, %c0_20] : memref<1x32x128xbf16, #tpu.memory_space<vmem>>, vector<1x32x128xbf16>
      %23 = vector.shape_cast %22 : vector<1x32x128xbf16> to vector<32x128xbf16>
      %24 = vector.shape_cast %21 : vector<32x128xbf16> to vector<1x32x128xbf16>
      tpu.vector_store %arg8[%c0_18, %c0_19, %c0_20], %24 {strides = array<i32>} : memref<1x32x128xbf16, #tpu.memory_space<vmem>>, vector<1x32x128xbf16>,
    } else {
    }
    return
  }
  func.func @transform_0(%arg0: i32, %arg1: i32, %arg2: i32, %arg3: i32) -> (i32, i32, i32) {
    %c0_i32 = arith.constant 0 : i32
    return %arg0, %arg1, %arg3 : i32, i32, i32
  }
  func.func @transform_1(%arg0: i32, %arg1: i32, %arg2: i32, %arg3: i32) -> (i32, i32, i32) {
    %c0_i32 = arith.constant 0 : i32
    return %arg0, %arg3, %arg2 : i32, i32, i32
  }
  func.func @transform_2(%arg0: i32, %arg1: i32, %arg2: i32, %arg3: i32) -> (i32, i32) {
    %c0_i32 = arith.constant 0 : i32
    %c0_i32_0 = arith.constant 0 : i32
    return %c0_i32, %arg2 : i32, i32
  }
  func.func @transform_3(%arg0: i32, %arg1: i32, %arg2: i32, %arg3: i32) -> (i32, i32) {
    %c0_i32 = arith.constant 0 : i32
    %c0_i32_0 = arith.constant 0 : i32
    return %c0_i32, %arg2 : i32, i32
  }
  func.func @transform_4(%arg0: i32, %arg1: i32, %arg2: i32, %arg3: i32) -> (i32, i32, i32) {
    %c0_i32 = arith.constant 0 : i32
    return %arg0, %arg1, %arg2 : i32, i32, i32
  }
}

module attributes {stable_mosaic.version = 11 : i64} {
  func.func @_fused_matmul_kernel(%arg0: i32, %arg1: i32, %arg2: i32, %arg3: i32, %arg4: memref<1x16x256xbf16, #tpu.memory_space<vmem>>, %arg5: memref<1x256x128xbf16, #tpu.memory_space<vmem>>, %arg6: memref<1x128xf32, #tpu.memory_space<vmem>>, %arg7: memref<1x128xf32, #tpu.memory_space<vmem>>, %arg8: memref<1x16x128xbf16, #tpu.memory_space<vmem>>, %arg9: memref<16x128xf32, #tpu.memory_space<vmem>>) attributes {dimension_semantics = [#tpu.dimension_semantics<parallel>, #tpu.dimension_semantics<parallel>, #tpu.dimension_semantics<parallel>, #tpu.dimension_semantics<arbitrary>], iteration_bounds = array<i64: 1, 1, 1, 1>, scalar_prefetch = 0 : i64, scratch_operands = 1 : i64, tpu.core_type = #tpu.core_type<tc>, window_params = [{transform_indices = @transform_0, window_bounds = array<i64: 1, 16, 256>}, {transform_indices = @transform_1, window_bounds = array<i64: 1, 256, 128>}, {transform_indices = @transform_2, window_bounds = array<i64: 1, 128>}, {transform_indices = @transform_3, window_bounds = array<i64: 1, 128>}, {transform_indices = @transform_4, window_bounds = array<i64: 1, 16, 128>}]} {
    %c0_i32 = arith.constant 0 : i32
    %0 = arith.cmpi eq, %arg3, %c0_i32 : i32
    %1 = arith.extui %0 : i1 to i32
    %c0_i32_0 = arith.constant 0 : i32
    %2 = arith.cmpi ne, %1, %c0_i32_0 : i32
    scf.if %2 {
      %cst_12 = arith.constant 0.000000e+00 : f32
      %14 = vector.broadcast %cst_12 : f32 to vector<16x128xf32>
      %c0_13 = arith.constant 0 : index
      %c0_14 = arith.constant 0 : index
      %15 = vector.load %arg9[%c0_13, %c0_14] : memref<16x128xf32, #tpu.memory_space<vmem>>, vector<16x128xf32>
      tpu.vector_store %arg9[%c0_13, %c0_14], %14 {strides = array<i32>} : memref<16x128xf32, #tpu.memory_space<vmem>>, vector<16x128xf32>,
    } else {
    }
    %c0 = arith.constant 0 : index
    %c0_1 = arith.constant 0 : index
    %3 = vector.load %arg9[%c0, %c0_1] : memref<16x128xf32, #tpu.memory_space<vmem>>, vector<16x128xf32>
    %c0_2 = arith.constant 0 : index
    %c0_3 = arith.constant 0 : index
    %c0_4 = arith.constant 0 : index
    %4 = vector.load %arg4[%c0_2, %c0_3, %c0_4] : memref<1x16x256xbf16, #tpu.memory_space<vmem>>, vector<1x16x256xbf16>
    %5 = vector.shape_cast %4 : vector<1x16x256xbf16> to vector<16x256xbf16>
    %c0_5 = arith.constant 0 : index
    %c0_6 = arith.constant 0 : index
    %c0_7 = arith.constant 0 : index
    %6 = vector.load %arg5[%c0_5, %c0_6, %c0_7] : memref<1x256x128xbf16, #tpu.memory_space<vmem>>, vector<1x256x128xbf16>
    %7 = vector.shape_cast %6 : vector<1x256x128xbf16> to vector<256x128xbf16>
    %cst = arith.constant dense<0.000000e+00> : vector<16x128xf32>
    %8 = tpu.matmul %5, %7, %cst {dimension_numbers = #tpu.dot_dimension_numbers<[1], [0], [0], [1], [0, 0, 1, 1], [], []>} : vector<16x256xbf16>, vector<256x128xbf16>, vector<16x128xf32> -> vector<16x128xf32>
    %9 = arith.addf %3, %8 : vector<16x128xf32>
    %c0_8 = arith.constant 0 : index
    %c0_9 = arith.constant 0 : index
    %10 = vector.load %arg9[%c0_8, %c0_9] : memref<16x128xf32, #tpu.memory_space<vmem>>, vector<16x128xf32>
    tpu.vector_store %arg9[%c0_8, %c0_9], %9 {strides = array<i32>} : memref<16x128xf32, #tpu.memory_space<vmem>>, vector<16x128xf32>,
    %c0_i32_10 = arith.constant 0 : i32
    %11 = arith.cmpi eq, %arg3, %c0_i32_10 : i32
    %12 = arith.extui %11 : i1 to i32
    %c0_i32_11 = arith.constant 0 : i32
    %13 = arith.cmpi ne, %12, %c0_i32_11 : i32
    scf.if %13 {
      %c0_12 = arith.constant 0 : index
      %c0_13 = arith.constant 0 : index
      %14 = vector.load %arg9[%c0_12, %c0_13] : memref<16x128xf32, #tpu.memory_space<vmem>>, vector<16x128xf32>
      %c0_14 = arith.constant 0 : index
      %c0_15 = arith.constant 0 : index
      %15 = vector.load %arg6[%c0_14, %c0_15] : memref<1x128xf32, #tpu.memory_space<vmem>>, vector<1x128xf32>
      %16 = vector.broadcast %15 : vector<1x128xf32> to vector<16x128xf32>
      %17 = arith.mulf %14, %16 : vector<16x128xf32>
      %c0_16 = arith.constant 0 : index
      %c0_17 = arith.constant 0 : index
      %18 = vector.load %arg7[%c0_16, %c0_17] : memref<1x128xf32, #tpu.memory_space<vmem>>, vector<1x128xf32>
      %19 = vector.broadcast %18 : vector<1x128xf32> to vector<16x128xf32>
      %20 = arith.addf %17, %19 : vector<16x128xf32>
      %21 = arith.truncf %20 : vector<16x128xf32> to vector<16x128xbf16>
      %c0_18 = arith.constant 0 : index
      %c0_19 = arith.constant 0 : index
      %c0_20 = arith.constant 0 : index
      %22 = vector.load %arg8[%c0_18, %c0_19, %c0_20] : memref<1x16x128xbf16, #tpu.memory_space<vmem>>, vector<1x16x128xbf16>
      %23 = vector.shape_cast %22 : vector<1x16x128xbf16> to vector<16x128xbf16>
      %24 = vector.shape_cast %21 : vector<16x128xbf16> to vector<1x16x128xbf16>
      tpu.vector_store %arg8[%c0_18, %c0_19, %c0_20], %24 {strides = array<i32>} : memref<1x16x128xbf16, #tpu.memory_space<vmem>>, vector<1x16x128xbf16>,
    } else {
    }
    return
  }
  func.func @transform_0(%arg0: i32, %arg1: i32, %arg2: i32, %arg3: i32) -> (i32, i32, i32) {
    %c0_i32 = arith.constant 0 : i32
    return %arg0, %arg1, %arg3 : i32, i32, i32
  }
  func.func @transform_1(%arg0: i32, %arg1: i32, %arg2: i32, %arg3: i32) -> (i32, i32, i32) {
    %c0_i32 = arith.constant 0 : i32
    return %arg0, %arg3, %arg2 : i32, i32, i32
  }
  func.func @transform_2(%arg0: i32, %arg1: i32, %arg2: i32, %arg3: i32) -> (i32, i32) {
    %c0_i32 = arith.constant 0 : i32
    %c0_i32_0 = arith.constant 0 : i32
    return %c0_i32, %arg2 : i32, i32
  }
  func.func @transform_3(%arg0: i32, %arg1: i32, %arg2: i32, %arg3: i32) -> (i32, i32) {
    %c0_i32 = arith.constant 0 : i32
    %c0_i32_0 = arith.constant 0 : i32
    return %c0_i32, %arg2 : i32, i32
  }
  func.func @transform_4(%arg0: i32, %arg1: i32, %arg2: i32, %arg3: i32) -> (i32, i32, i32) {
    %c0_i32 = arith.constant 0 : i32
    return %arg0, %arg1, %arg2 : i32, i32, i32
  }
}

module attributes {stable_mosaic.version = 11 : i64} {
  func.func @_fused_matmul_kernel(%arg0: i32, %arg1: i32, %arg2: i32, %arg3: i32, %arg4: memref<1x16x512xbf16, #tpu.memory_space<vmem>>, %arg5: memref<1x512x128xbf16, #tpu.memory_space<vmem>>, %arg6: memref<1x128xf32, #tpu.memory_space<vmem>>, %arg7: memref<1x128xf32, #tpu.memory_space<vmem>>, %arg8: memref<1x16x128xbf16, #tpu.memory_space<vmem>>, %arg9: memref<16x128xf32, #tpu.memory_space<vmem>>) attributes {dimension_semantics = [#tpu.dimension_semantics<parallel>, #tpu.dimension_semantics<parallel>, #tpu.dimension_semantics<parallel>, #tpu.dimension_semantics<arbitrary>], iteration_bounds = array<i64: 1, 1, 1, 1>, scalar_prefetch = 0 : i64, scratch_operands = 1 : i64, tpu.core_type = #tpu.core_type<tc>, window_params = [{transform_indices = @transform_0, window_bounds = array<i64: 1, 16, 512>}, {transform_indices = @transform_1, window_bounds = array<i64: 1, 512, 128>}, {transform_indices = @transform_2, window_bounds = array<i64: 1, 128>}, {transform_indices = @transform_3, window_bounds = array<i64: 1, 128>}, {transform_indices = @transform_4, window_bounds = array<i64: 1, 16, 128>}]} {
    %c0_i32 = arith.constant 0 : i32
    %0 = arith.cmpi eq, %arg3, %c0_i32 : i32
    %1 = arith.extui %0 : i1 to i32
    %c0_i32_0 = arith.constant 0 : i32
    %2 = arith.cmpi ne, %1, %c0_i32_0 : i32
    scf.if %2 {
      %cst_12 = arith.constant 0.000000e+00 : f32
      %14 = vector.broadcast %cst_12 : f32 to vector<16x128xf32>
      %c0_13 = arith.constant 0 : index
      %c0_14 = arith.constant 0 : index
      %15 = vector.load %arg9[%c0_13, %c0_14] : memref<16x128xf32, #tpu.memory_space<vmem>>, vector<16x128xf32>
      tpu.vector_store %arg9[%c0_13, %c0_14], %14 {strides = array<i32>} : memref<16x128xf32, #tpu.memory_space<vmem>>, vector<16x128xf32>,
    } else {
    }
    %c0 = arith.constant 0 : index
    %c0_1 = arith.constant 0 : index
    %3 = vector.load %arg9[%c0, %c0_1] : memref<16x128xf32, #tpu.memory_space<vmem>>, vector<16x128xf32>
    %c0_2 = arith.constant 0 : index
    %c0_3 = arith.constant 0 : index
    %c0_4 = arith.constant 0 : index
    %4 = vector.load %arg4[%c0_2, %c0_3, %c0_4] : memref<1x16x512xbf16, #tpu.memory_space<vmem>>, vector<1x16x512xbf16>
    %5 = vector.shape_cast %4 : vector<1x16x512xbf16> to vector<16x512xbf16>
    %c0_5 = arith.constant 0 : index
    %c0_6 = arith.constant 0 : index
    %c0_7 = arith.constant 0 : index
    %6 = vector.load %arg5[%c0_5, %c0_6, %c0_7] : memref<1x512x128xbf16, #tpu.memory_space<vmem>>, vector<1x512x128xbf16>
    %7 = vector.shape_cast %6 : vector<1x512x128xbf16> to vector<512x128xbf16>
    %cst = arith.constant dense<0.000000e+00> : vector<16x128xf32>
    %8 = tpu.matmul %5, %7, %cst {dimension_numbers = #tpu.dot_dimension_numbers<[1], [0], [0], [1], [0, 0, 1, 1], [], []>} : vector<16x512xbf16>, vector<512x128xbf16>, vector<16x128xf32> -> vector<16x128xf32>
    %9 = arith.addf %3, %8 : vector<16x128xf32>
    %c0_8 = arith.constant 0 : index
    %c0_9 = arith.constant 0 : index
    %10 = vector.load %arg9[%c0_8, %c0_9] : memref<16x128xf32, #tpu.memory_space<vmem>>, vector<16x128xf32>
    tpu.vector_store %arg9[%c0_8, %c0_9], %9 {strides = array<i32>} : memref<16x128xf32, #tpu.memory_space<vmem>>, vector<16x128xf32>,
    %c0_i32_10 = arith.constant 0 : i32
    %11 = arith.cmpi eq, %arg3, %c0_i32_10 : i32
    %12 = arith.extui %11 : i1 to i32
    %c0_i32_11 = arith.constant 0 : i32
    %13 = arith.cmpi ne, %12, %c0_i32_11 : i32
    scf.if %13 {
      %c0_12 = arith.constant 0 : index
      %c0_13 = arith.constant 0 : index
      %14 = vector.load %arg9[%c0_12, %c0_13] : memref<16x128xf32, #tpu.memory_space<vmem>>, vector<16x128xf32>
      %c0_14 = arith.constant 0 : index
      %c0_15 = arith.constant 0 : index
      %15 = vector.load %arg6[%c0_14, %c0_15] : memref<1x128xf32, #tpu.memory_space<vmem>>, vector<1x128xf32>
      %16 = vector.broadcast %15 : vector<1x128xf32> to vector<16x128xf32>
      %17 = arith.mulf %14, %16 : vector<16x128xf32>
      %c0_16 = arith.constant 0 : index
      %c0_17 = arith.constant 0 : index
      %18 = vector.load %arg7[%c0_16, %c0_17] : memref<1x128xf32, #tpu.memory_space<vmem>>, vector<1x128xf32>
      %19 = vector.broadcast %18 : vector<1x128xf32> to vector<16x128xf32>
      %20 = arith.addf %17, %19 : vector<16x128xf32>
      %21 = arith.truncf %20 : vector<16x128xf32> to vector<16x128xbf16>
      %c0_18 = arith.constant 0 : index
      %c0_19 = arith.constant 0 : index
      %c0_20 = arith.constant 0 : index
      %22 = vector.load %arg8[%c0_18, %c0_19, %c0_20] : memref<1x16x128xbf16, #tpu.memory_space<vmem>>, vector<1x16x128xbf16>
      %23 = vector.shape_cast %22 : vector<1x16x128xbf16> to vector<16x128xbf16>
      %24 = vector.shape_cast %21 : vector<16x128xbf16> to vector<1x16x128xbf16>
      tpu.vector_store %arg8[%c0_18, %c0_19, %c0_20], %24 {strides = array<i32>} : memref<1x16x128xbf16, #tpu.memory_space<vmem>>, vector<1x16x128xbf16>,
    } else {
    }
    return
  }
  func.func @transform_0(%arg0: i32, %arg1: i32, %arg2: i32, %arg3: i32) -> (i32, i32, i32) {
    %c0_i32 = arith.constant 0 : i32
    return %arg0, %arg1, %arg3 : i32, i32, i32
  }
  func.func @transform_1(%arg0: i32, %arg1: i32, %arg2: i32, %arg3: i32) -> (i32, i32, i32) {
    %c0_i32 = arith.constant 0 : i32
    return %arg0, %arg3, %arg2 : i32, i32, i32
  }
  func.func @transform_2(%arg0: i32, %arg1: i32, %arg2: i32, %arg3: i32) -> (i32, i32) {
    %c0_i32 = arith.constant 0 : i32
    %c0_i32_0 = arith.constant 0 : i32
    return %c0_i32, %arg2 : i32, i32
  }
  func.func @transform_3(%arg0: i32, %arg1: i32, %arg2: i32, %arg3: i32) -> (i32, i32) {
    %c0_i32 = arith.constant 0 : i32
    %c0_i32_0 = arith.constant 0 : i32
    return %c0_i32, %arg2 : i32, i32
  }
  func.func @transform_4(%arg0: i32, %arg1: i32, %arg2: i32, %arg3: i32) -> (i32, i32, i32) {
    %c0_i32 = arith.constant 0 : i32
    return %arg0, %arg1, %arg2 : i32, i32, i32
  }
}

module attributes {stable_mosaic.version = 11 : i64} {
  func.func @_fused_matmul_kernel(%arg0: i32, %arg1: i32, %arg2: i32, %arg3: i32, %arg4: memref<1x16x256xbf16, #tpu.memory_space<vmem>>, %arg5: memref<1x256x128xbf16, #tpu.memory_space<vmem>>, %arg6: memref<1x128xf32, #tpu.memory_space<vmem>>, %arg7: memref<1x128xf32, #tpu.memory_space<vmem>>, %arg8: memref<1x16x128xbf16, #tpu.memory_space<vmem>>, %arg9: memref<16x128xf32, #tpu.memory_space<vmem>>) attributes {dimension_semantics = [#tpu.dimension_semantics<parallel>, #tpu.dimension_semantics<parallel>, #tpu.dimension_semantics<parallel>, #tpu.dimension_semantics<arbitrary>], iteration_bounds = array<i64: 4, 1, 1, 1>, scalar_prefetch = 0 : i64, scratch_operands = 1 : i64, tpu.core_type = #tpu.core_type<tc>, window_params = [{transform_indices = @transform_0, window_bounds = array<i64: 1, 16, 256>}, {transform_indices = @transform_1, window_bounds = array<i64: 1, 256, 128>}, {transform_indices = @transform_2, window_bounds = array<i64: 1, 128>}, {transform_indices = @transform_3, window_bounds = array<i64: 1, 128>}, {transform_indices = @transform_4, window_bounds = array<i64: 1, 16, 128>}]} {
    %c0_i32 = arith.constant 0 : i32
    %0 = arith.cmpi eq, %arg3, %c0_i32 : i32
    %1 = arith.extui %0 : i1 to i32
    %c0_i32_0 = arith.constant 0 : i32
    %2 = arith.cmpi ne, %1, %c0_i32_0 : i32
    scf.if %2 {
      %cst_12 = arith.constant 0.000000e+00 : f32
      %14 = vector.broadcast %cst_12 : f32 to vector<16x128xf32>
      %c0_13 = arith.constant 0 : index
      %c0_14 = arith.constant 0 : index
      %15 = vector.load %arg9[%c0_13, %c0_14] : memref<16x128xf32, #tpu.memory_space<vmem>>, vector<16x128xf32>
      tpu.vector_store %arg9[%c0_13, %c0_14], %14 {strides = array<i32>} : memref<16x128xf32, #tpu.memory_space<vmem>>, vector<16x128xf32>,
    } else {
    }
    %c0 = arith.constant 0 : index
    %c0_1 = arith.constant 0 : index
    %3 = vector.load %arg9[%c0, %c0_1] : memref<16x128xf32, #tpu.memory_space<vmem>>, vector<16x128xf32>
    %c0_2 = arith.constant 0 : index
    %c0_3 = arith.constant 0 : index
    %c0_4 = arith.constant 0 : index
    %4 = vector.load %arg4[%c0_2, %c0_3, %c0_4] : memref<1x16x256xbf16, #tpu.memory_space<vmem>>, vector<1x16x256xbf16>
    %5 = vector.shape_cast %4 : vector<1x16x256xbf16> to vector<16x256xbf16>
    %c0_5 = arith.constant 0 : index
    %c0_6 = arith.constant 0 : index
    %c0_7 = arith.constant 0 : index
    %6 = vector.load %arg5[%c0_5, %c0_6, %c0_7] : memref<1x256x128xbf16, #tpu.memory_space<vmem>>, vector<1x256x128xbf16>
    %7 = vector.shape_cast %6 : vector<1x256x128xbf16> to vector<256x128xbf16>
    %cst = arith.constant dense<0.000000e+00> : vector<16x128xf32>
    %8 = tpu.matmul %5, %7, %cst {dimension_numbers = #tpu.dot_dimension_numbers<[1], [0], [0], [1], [0, 0, 1, 1], [], []>} : vector<16x256xbf16>, vector<256x128xbf16>, vector<16x128xf32> -> vector<16x128xf32>
    %9 = arith.addf %3, %8 : vector<16x128xf32>
    %c0_8 = arith.constant 0 : index
    %c0_9 = arith.constant 0 : index
    %10 = vector.load %arg9[%c0_8, %c0_9] : memref<16x128xf32, #tpu.memory_space<vmem>>, vector<16x128xf32>
    tpu.vector_store %arg9[%c0_8, %c0_9], %9 {strides = array<i32>} : memref<16x128xf32, #tpu.memory_space<vmem>>, vector<16x128xf32>,
    %c0_i32_10 = arith.constant 0 : i32
    %11 = arith.cmpi eq, %arg3, %c0_i32_10 : i32
    %12 = arith.extui %11 : i1 to i32
    %c0_i32_11 = arith.constant 0 : i32
    %13 = arith.cmpi ne, %12, %c0_i32_11 : i32
    scf.if %13 {
      %c0_12 = arith.constant 0 : index
      %c0_13 = arith.constant 0 : index
      %14 = vector.load %arg9[%c0_12, %c0_13] : memref<16x128xf32, #tpu.memory_space<vmem>>, vector<16x128xf32>
      %c0_14 = arith.constant 0 : index
      %c0_15 = arith.constant 0 : index
      %15 = vector.load %arg6[%c0_14, %c0_15] : memref<1x128xf32, #tpu.memory_space<vmem>>, vector<1x128xf32>
      %16 = vector.broadcast %15 : vector<1x128xf32> to vector<16x128xf32>
      %17 = arith.mulf %14, %16 : vector<16x128xf32>
      %c0_16 = arith.constant 0 : index
      %c0_17 = arith.constant 0 : index
      %18 = vector.load %arg7[%c0_16, %c0_17] : memref<1x128xf32, #tpu.memory_space<vmem>>, vector<1x128xf32>
      %19 = vector.broadcast %18 : vector<1x128xf32> to vector<16x128xf32>
      %20 = arith.addf %17, %19 : vector<16x128xf32>
      %21 = arith.truncf %20 : vector<16x128xf32> to vector<16x128xbf16>
      %c0_18 = arith.constant 0 : index
      %c0_19 = arith.constant 0 : index
      %c0_20 = arith.constant 0 : index
      %22 = vector.load %arg8[%c0_18, %c0_19, %c0_20] : memref<1x16x128xbf16, #tpu.memory_space<vmem>>, vector<1x16x128xbf16>
      %23 = vector.shape_cast %22 : vector<1x16x128xbf16> to vector<16x128xbf16>
      %24 = vector.shape_cast %21 : vector<16x128xbf16> to vector<1x16x128xbf16>
      tpu.vector_store %arg8[%c0_18, %c0_19, %c0_20], %24 {strides = array<i32>} : memref<1x16x128xbf16, #tpu.memory_space<vmem>>, vector<1x16x128xbf16>,
    } else {
    }
    return
  }
  func.func @transform_0(%arg0: i32, %arg1: i32, %arg2: i32, %arg3: i32) -> (i32, i32, i32) {
    %c0_i32 = arith.constant 0 : i32
    return %arg0, %arg1, %arg3 : i32, i32, i32
  }
  func.func @transform_1(%arg0: i32, %arg1: i32, %arg2: i32, %arg3: i32) -> (i32, i32, i32) {
    %c0_i32 = arith.constant 0 : i32
    return %arg0, %arg3, %arg2 : i32, i32, i32
  }
  func.func @transform_2(%arg0: i32, %arg1: i32, %arg2: i32, %arg3: i32) -> (i32, i32) {
    %c0_i32 = arith.constant 0 : i32
    %c0_i32_0 = arith.constant 0 : i32
    return %c0_i32, %arg2 : i32, i32
  }
  func.func @transform_3(%arg0: i32, %arg1: i32, %arg2: i32, %arg3: i32) -> (i32, i32) {
    %c0_i32 = arith.constant 0 : i32
    %c0_i32_0 = arith.constant 0 : i32
    return %c0_i32, %arg2 : i32, i32
  }
  func.func @transform_4(%arg0: i32, %arg1: i32, %arg2: i32, %arg3: i32) -> (i32, i32, i32) {
    %c0_i32 = arith.constant 0 : i32
    return %arg0, %arg1, %arg2 : i32, i32, i32
  }
}

module attributes {stable_mosaic.version = 11 : i64} {
  func.func @_fused_matmul_kernel(%arg0: i32, %arg1: i32, %arg2: i32, %arg3: i32, %arg4: memref<1x32x128xbf16, #tpu.memory_space<vmem>>, %arg5: memref<1x128x128xbf16, #tpu.memory_space<vmem>>, %arg6: memref<1x128xf32, #tpu.memory_space<vmem>>, %arg7: memref<1x128xf32, #tpu.memory_space<vmem>>, %arg8: memref<1x32x128xbf16, #tpu.memory_space<vmem>>, %arg9: memref<32x128xf32, #tpu.memory_space<vmem>>) attributes {dimension_semantics = [#tpu.dimension_semantics<parallel>, #tpu.dimension_semantics<parallel>, #tpu.dimension_semantics<parallel>, #tpu.dimension_semantics<arbitrary>], iteration_bounds = array<i64: 4, 1, 1, 1>, scalar_prefetch = 0 : i64, scratch_operands = 1 : i64, tpu.core_type = #tpu.core_type<tc>, window_params = [{transform_indices = @transform_0, window_bounds = array<i64: 1, 32, 128>}, {transform_indices = @transform_1, window_bounds = array<i64: 1, 128, 128>}, {transform_indices = @transform_2, window_bounds = array<i64: 1, 128>}, {transform_indices = @transform_3, window_bounds = array<i64: 1, 128>}, {transform_indices = @transform_4, window_bounds = array<i64: 1, 32, 128>}]} {
    %c0_i32 = arith.constant 0 : i32
    %0 = arith.cmpi eq, %arg3, %c0_i32 : i32
    %1 = arith.extui %0 : i1 to i32
    %c0_i32_0 = arith.constant 0 : i32
    %2 = arith.cmpi ne, %1, %c0_i32_0 : i32
    scf.if %2 {
      %cst_12 = arith.constant 0.000000e+00 : f32
      %14 = vector.broadcast %cst_12 : f32 to vector<32x128xf32>
      %c0_13 = arith.constant 0 : index
      %c0_14 = arith.constant 0 : index
      %15 = vector.load %arg9[%c0_13, %c0_14] : memref<32x128xf32, #tpu.memory_space<vmem>>, vector<32x128xf32>
      tpu.vector_store %arg9[%c0_13, %c0_14], %14 {strides = array<i32>} : memref<32x128xf32, #tpu.memory_space<vmem>>, vector<32x128xf32>,
    } else {
    }
    %c0 = arith.constant 0 : index
    %c0_1 = arith.constant 0 : index
    %3 = vector.load %arg9[%c0, %c0_1] : memref<32x128xf32, #tpu.memory_space<vmem>>, vector<32x128xf32>
    %c0_2 = arith.constant 0 : index
    %c0_3 = arith.constant 0 : index
    %c0_4 = arith.constant 0 : index
    %4 = vector.load %arg4[%c0_2, %c0_3, %c0_4] : memref<1x32x128xbf16, #tpu.memory_space<vmem>>, vector<1x32x128xbf16>
    %5 = vector.shape_cast %4 : vector<1x32x128xbf16> to vector<32x128xbf16>
    %c0_5 = arith.constant 0 : index
    %c0_6 = arith.constant 0 : index
    %c0_7 = arith.constant 0 : index
    %6 = vector.load %arg5[%c0_5, %c0_6, %c0_7] : memref<1x128x128xbf16, #tpu.memory_space<vmem>>, vector<1x128x128xbf16>
    %7 = vector.shape_cast %6 : vector<1x128x128xbf16> to vector<128x128xbf16>
    %cst = arith.constant dense<0.000000e+00> : vector<32x128xf32>
    %8 = tpu.matmul %5, %7, %cst {dimension_numbers = #tpu.dot_dimension_numbers<[1], [0], [0], [1], [0, 0, 1, 1], [], []>} : vector<32x128xbf16>, vector<128x128xbf16>, vector<32x128xf32> -> vector<32x128xf32>
    %9 = arith.addf %3, %8 : vector<32x128xf32>
    %c0_8 = arith.constant 0 : index
    %c0_9 = arith.constant 0 : index
    %10 = vector.load %arg9[%c0_8, %c0_9] : memref<32x128xf32, #tpu.memory_space<vmem>>, vector<32x128xf32>
    tpu.vector_store %arg9[%c0_8, %c0_9], %9 {strides = array<i32>} : memref<32x128xf32, #tpu.memory_space<vmem>>, vector<32x128xf32>,
    %c0_i32_10 = arith.constant 0 : i32
    %11 = arith.cmpi eq, %arg3, %c0_i32_10 : i32
    %12 = arith.extui %11 : i1 to i32
    %c0_i32_11 = arith.constant 0 : i32
    %13 = arith.cmpi ne, %12, %c0_i32_11 : i32
    scf.if %13 {
      %c0_12 = arith.constant 0 : index
      %c0_13 = arith.constant 0 : index
      %14 = vector.load %arg9[%c0_12, %c0_13] : memref<32x128xf32, #tpu.memory_space<vmem>>, vector<32x128xf32>
      %c0_14 = arith.constant 0 : index
      %c0_15 = arith.constant 0 : index
      %15 = vector.load %arg6[%c0_14, %c0_15] : memref<1x128xf32, #tpu.memory_space<vmem>>, vector<1x128xf32>
      %16 = vector.broadcast %15 : vector<1x128xf32> to vector<32x128xf32>
      %17 = arith.mulf %14, %16 : vector<32x128xf32>
      %c0_16 = arith.constant 0 : index
      %c0_17 = arith.constant 0 : index
      %18 = vector.load %arg7[%c0_16, %c0_17] : memref<1x128xf32, #tpu.memory_space<vmem>>, vector<1x128xf32>
      %19 = vector.broadcast %18 : vector<1x128xf32> to vector<32x128xf32>
      %20 = arith.addf %17, %19 : vector<32x128xf32>
      %21 = arith.truncf %20 : vector<32x128xf32> to vector<32x128xbf16>
      %c0_18 = arith.constant 0 : index
      %c0_19 = arith.constant 0 : index
      %c0_20 = arith.constant 0 : index
      %22 = vector.load %arg8[%c0_18, %c0_19, %c0_20] : memref<1x32x128xbf16, #tpu.memory_space<vmem>>, vector<1x32x128xbf16>
      %23 = vector.shape_cast %22 : vector<1x32x128xbf16> to vector<32x128xbf16>
      %24 = vector.shape_cast %21 : vector<32x128xbf16> to vector<1x32x128xbf16>
      tpu.vector_store %arg8[%c0_18, %c0_19, %c0_20], %24 {strides = array<i32>} : memref<1x32x128xbf16, #tpu.memory_space<vmem>>, vector<1x32x128xbf16>,
    } else {
    }
    return
  }
  func.func @transform_0(%arg0: i32, %arg1: i32, %arg2: i32, %arg3: i32) -> (i32, i32, i32) {
    %c0_i32 = arith.constant 0 : i32
    return %arg0, %arg1, %arg3 : i32, i32, i32
  }
  func.func @transform_1(%arg0: i32, %arg1: i32, %arg2: i32, %arg3: i32) -> (i32, i32, i32) {
    %c0_i32 = arith.constant 0 : i32
    return %arg0, %arg3, %arg2 : i32, i32, i32
  }
  func.func @transform_2(%arg0: i32, %arg1: i32, %arg2: i32, %arg3: i32) -> (i32, i32) {
    %c0_i32 = arith.constant 0 : i32
    %c0_i32_0 = arith.constant 0 : i32
    return %c0_i32, %arg2 : i32, i32
  }
  func.func @transform_3(%arg0: i32, %arg1: i32, %arg2: i32, %arg3: i32) -> (i32, i32) {
    %c0_i32 = arith.constant 0 : i32
    %c0_i32_0 = arith.constant 0 : i32
    return %c0_i32, %arg2 : i32, i32
  }
  func.func @transform_4(%arg0: i32, %arg1: i32, %arg2: i32, %arg3: i32) -> (i32, i32, i32) {
    %c0_i32 = arith.constant 0 : i32
    return %arg0, %arg1, %arg2 : i32, i32, i32
  }
}

module attributes {stable_mosaic.version = 11 : i64} {
  func.func @_fused_matmul_kernel(%arg0: i32, %arg1: i32, %arg2: i32, %arg3: i32, %arg4: memref<1x128x128xbf16, #tpu.memory_space<vmem>>, %arg5: memref<1x128x128xbf16, #tpu.memory_space<vmem>>, %arg6: memref<1x128xf32, #tpu.memory_space<vmem>>, %arg7: memref<1x128xf32, #tpu.memory_space<vmem>>, %arg8: memref<1x128x128xbf16, #tpu.memory_space<vmem>>, %arg9: memref<128x128xf32, #tpu.memory_space<vmem>>) attributes {dimension_semantics = [#tpu.dimension_semantics<parallel>, #tpu.dimension_semantics<parallel>, #tpu.dimension_semantics<parallel>, #tpu.dimension_semantics<arbitrary>], iteration_bounds = array<i64: 4, 1, 1, 1>, scalar_prefetch = 0 : i64, scratch_operands = 1 : i64, tpu.core_type = #tpu.core_type<tc>, window_params = [{transform_indices = @transform_0, window_bounds = array<i64: 1, 128, 128>}, {transform_indices = @transform_1, window_bounds = array<i64: 1, 128, 128>}, {transform_indices = @transform_2, window_bounds = array<i64: 1, 128>}, {transform_indices = @transform_3, window_bounds = array<i64: 1, 128>}, {transform_indices = @transform_4, window_bounds = array<i64: 1, 128, 128>}]} {
    %c0_i32 = arith.constant 0 : i32
    %0 = arith.cmpi eq, %arg3, %c0_i32 : i32
    %1 = arith.extui %0 : i1 to i32
    %c0_i32_0 = arith.constant 0 : i32
    %2 = arith.cmpi ne, %1, %c0_i32_0 : i32
    scf.if %2 {
      %cst_12 = arith.constant 0.000000e+00 : f32
      %14 = vector.broadcast %cst_12 : f32 to vector<128x128xf32>
      %c0_13 = arith.constant 0 : index
      %c0_14 = arith.constant 0 : index
      %15 = vector.load %arg9[%c0_13, %c0_14] : memref<128x128xf32, #tpu.memory_space<vmem>>, vector<128x128xf32>
      tpu.vector_store %arg9[%c0_13, %c0_14], %14 {strides = array<i32>} : memref<128x128xf32, #tpu.memory_space<vmem>>, vector<128x128xf32>,
    } else {
    }
    %c0 = arith.constant 0 : index
    %c0_1 = arith.constant 0 : index
    %3 = vector.load %arg9[%c0, %c0_1] : memref<128x128xf32, #tpu.memory_space<vmem>>, vector<128x128xf32>
    %c0_2 = arith.constant 0 : index
    %c0_3 = arith.constant 0 : index
    %c0_4 = arith.constant 0 : index
    %4 = vector.load %arg4[%c0_2, %c0_3, %c0_4] : memref<1x128x128xbf16, #tpu.memory_space<vmem>>, vector<1x128x128xbf16>
    %5 = vector.shape_cast %4 : vector<1x128x128xbf16> to vector<128x128xbf16>
    %c0_5 = arith.constant 0 : index
    %c0_6 = arith.constant 0 : index
    %c0_7 = arith.constant 0 : index
    %6 = vector.load %arg5[%c0_5, %c0_6, %c0_7] : memref<1x128x128xbf16, #tpu.memory_space<vmem>>, vector<1x128x128xbf16>
    %7 = vector.shape_cast %6 : vector<1x128x128xbf16> to vector<128x128xbf16>
    %cst = arith.constant dense<0.000000e+00> : vector<128x128xf32>
    %8 = tpu.matmul %5, %7, %cst {dimension_numbers = #tpu.dot_dimension_numbers<[1], [0], [0], [1], [0, 0, 1, 1], [], []>} : vector<128x128xbf16>, vector<128x128xbf16>, vector<128x128xf32> -> vector<128x128xf32>
    %9 = arith.addf %3, %8 : vector<128x128xf32>
    %c0_8 = arith.constant 0 : index
    %c0_9 = arith.constant 0 : index
    %10 = vector.load %arg9[%c0_8, %c0_9] : memref<128x128xf32, #tpu.memory_space<vmem>>, vector<128x128xf32>
    tpu.vector_store %arg9[%c0_8, %c0_9], %9 {strides = array<i32>} : memref<128x128xf32, #tpu.memory_space<vmem>>, vector<128x128xf32>,
    %c0_i32_10 = arith.constant 0 : i32
    %11 = arith.cmpi eq, %arg3, %c0_i32_10 : i32
    %12 = arith.extui %11 : i1 to i32
    %c0_i32_11 = arith.constant 0 : i32
    %13 = arith.cmpi ne, %12, %c0_i32_11 : i32
    scf.if %13 {
      %c0_12 = arith.constant 0 : index
      %c0_13 = arith.constant 0 : index
      %14 = vector.load %arg9[%c0_12, %c0_13] : memref<128x128xf32, #tpu.memory_space<vmem>>, vector<128x128xf32>
      %c0_14 = arith.constant 0 : index
      %c0_15 = arith.constant 0 : index
      %15 = vector.load %arg6[%c0_14, %c0_15] : memref<1x128xf32, #tpu.memory_space<vmem>>, vector<1x128xf32>
      %16 = vector.broadcast %15 : vector<1x128xf32> to vector<128x128xf32>
      %17 = arith.mulf %14, %16 : vector<128x128xf32>
      %c0_16 = arith.constant 0 : index
      %c0_17 = arith.constant 0 : index
      %18 = vector.load %arg7[%c0_16, %c0_17] : memref<1x128xf32, #tpu.memory_space<vmem>>, vector<1x128xf32>
      %19 = vector.broadcast %18 : vector<1x128xf32> to vector<128x128xf32>
      %20 = arith.addf %17, %19 : vector<128x128xf32>
      %21 = math.tanh %20 : vector<128x128xf32>
      %22 = arith.truncf %21 : vector<128x128xf32> to vector<128x128xbf16>
      %c0_18 = arith.constant 0 : index
      %c0_19 = arith.constant 0 : index
      %c0_20 = arith.constant 0 : index
      %23 = vector.load %arg8[%c0_18, %c0_19, %c0_20] : memref<1x128x128xbf16, #tpu.memory_space<vmem>>, vector<1x128x128xbf16>
      %24 = vector.shape_cast %23 : vector<1x128x128xbf16> to vector<128x128xbf16>
      %25 = vector.shape_cast %22 : vector<128x128xbf16> to vector<1x128x128xbf16>
      tpu.vector_store %arg8[%c0_18, %c0_19, %c0_20], %25 {strides = array<i32>} : memref<1x128x128xbf16, #tpu.memory_space<vmem>>, vector<1x128x128xbf16>,
    } else {
    }
    return
  }
  func.func @transform_0(%arg0: i32, %arg1: i32, %arg2: i32, %arg3: i32) -> (i32, i32, i32) {
    %c0_i32 = arith.constant 0 : i32
    return %arg0, %arg1, %arg3 : i32, i32, i32
  }
  func.func @transform_1(%arg0: i32, %arg1: i32, %arg2: i32, %arg3: i32) -> (i32, i32, i32) {
    %c0_i32 = arith.constant 0 : i32
    return %arg0, %arg3, %arg2 : i32, i32, i32
  }
  func.func @transform_2(%arg0: i32, %arg1: i32, %arg2: i32, %arg3: i32) -> (i32, i32) {
    %c0_i32 = arith.constant 0 : i32
    %c0_i32_0 = arith.constant 0 : i32
    return %c0_i32, %arg2 : i32, i32
  }
  func.func @transform_3(%arg0: i32, %arg1: i32, %arg2: i32, %arg3: i32) -> (i32, i32) {
    %c0_i32 = arith.constant 0 : i32
    %c0_i32_0 = arith.constant 0 : i32
    return %c0_i32, %arg2 : i32, i32
  }
  func.func @transform_4(%arg0: i32, %arg1: i32, %arg2: i32, %arg3: i32) -> (i32, i32, i32) {
    %c0_i32 = arith.constant 0 : i32
    return %arg0, %arg1, %arg2 : i32, i32, i32
  }
}

</mosaic_0001>

<llo_original>
// kernel: unet_forward.8
$region0: #{unet_forward.8}
  #allocation0 [shape = 'u32[]', space=smem, size = 0x4, offset = 0x4, fixed_abs, tag = 'smem constant byte address 0x4 - core index']
  #allocation1 [shape = 'u32[72,128]{1,0:T(1,128)}', space=vmem, size = 0x9000, scoped, tag = 'internal scratch']
  #allocation2 [shape = 'f32[128,128]{1,0:T(8,128)}', space=vmem, size = 0x10000, scoped, tag = 'scratch operand']
  %s0 = inlined_call_operand.vmem [shape: bf16[1,128,128], index: 0, kind: input, shape index: {}]
  %s1 = inlined_call_operand.vmem [shape: bf16[1,128,128], index: 1, kind: input, shape index: {}]
  %s2 = inlined_call_operand.vmem [shape: f32[1,128], index: 2, kind: input, shape index: {}]
  %s3 = inlined_call_operand.vmem [shape: f32[1,128], index: 3, kind: input, shape index: {}]
  %s4 = inlined_call_operand.vmem [shape: bf16[1,128,128], index: 4, kind: output, shape index: {}]
  %s5 = sld [smem:[#allocation0]]
  $region34: #{unet_forward.8} parent=0
    _
  %s7 = ssub.s32 1, %s5
  %s8 = scalar_select 0, %s7, %s5
  // Predicated region
  $region2: #{unet_forward.8} parent=0 // pred_check
    _
  $region3: #{unet_forward.8} parent=0 // pred_check_branch
    %10 = sbr.rel (0) target = $region5
  $region4: #{unet_forward.8} parent=0 // pred_region
    _
  $region5: #{unet_forward.8} parent=0 // pred_fallthru
    _
  // Predicated region
  $region6: #{unet_forward.8} parent=0 // pred_check
    _
  $region7: #{unet_forward.8} parent=0 // pred_check_branch
    %12 = sbr.rel (0) target = $region9
  $region8: #{unet_forward.8} parent=0 // pred_region
    _
  $region9: #{unet_forward.8} parent=0 // pred_fallthru
    _
  // Predicated region
  $region10: #{unet_forward.8} parent=0 // pred_check
    _
  $region11: #{unet_forward.8} parent=0 // pred_check_branch
    %14 = sbr.rel (0) target = $region13
  $region12: #{unet_forward.8} parent=0 // pred_region
    _
  $region13: #{unet_forward.8} parent=0 // pred_fallthru
    _
  // Predicated region
  $region14: #{unet_forward.8} parent=0 // pred_check
    _
  $region15: #{unet_forward.8} parent=0 // pred_check_branch
    %16 = sbr.rel (0) target = $region17
  $region16: #{unet_forward.8} parent=0 // pred_region
    _
  $region17: #{unet_forward.8} parent=0 // pred_fallthru
    _
  %p17 = scmp.eq.s32.totalorder 0, 0
  // Predicated region
  $region18: #{unet_forward.8} parent=0 // pred_check
    %p18 = pneg %p17
  $region19: #{unet_forward.8} parent=0 // pred_check_branch
    %20 = sbr.rel (%p18) target = $region21
  $region20: #{unet_forward.8} parent=0 // pred_region
    %21 = vst [vmem:[#allocation2] sm:$0xff] 0.0
    %22 = vst [vmem:[#allocation2 + $0x8] sm:$0xff] 0.0
    %23 = vst [vmem:[#allocation2 + $0x10] sm:$0xff] 0.0
    %24 = vst [vmem:[#allocation2 + $0x18] sm:$0xff] 0.0
    %25 = vst [vmem:[#allocation2 + $0x20] sm:$0xff] 0.0
    %26 = vst [vmem:[#allocation2 + $0x28] sm:$0xff] 0.0
    %27 = vst [vmem:[#allocation2 + $0x30] sm:$0xff] 0.0
    %28 = vst [vmem:[#allocation2 + $0x38] sm:$0xff] 0.0
    %29 = vst [vmem:[#allocation2 + $0x40] sm:$0xff] 0.0
    %30 = vst [vmem:[#allocation2 + $0x48] sm:$0xff] 0.0
    %31 = vst [vmem:[#allocation2 + $0x50] sm:$0xff] 0.0
    %32 = vst [vmem:[#allocation2 + $0x58] sm:$0xff] 0.0
    %33 = vst [vmem:[#allocation2 + $0x60] sm:$0xff] 0.0
    %34 = vst [vmem:[#allocation2 + $0x68] sm:$0xff] 0.0
    %35 = vst [vmem:[#allocation2 + $0x70] sm:$0xff] 0.0
    %36 = vst [vmem:[#allocation2 + $0x78] sm:$0xff] 0.0
  $region21: #{unet_forward.8} parent=0 // pred_fallthru
    _
  %v37 = vld [vmem:[#allocation2] sm:$0xff]
  %v38 = vld [vmem:[#allocation2 + $0x8] sm:$0xff]
  %v39 = vld [vmem:[#allocation2 + $0x10] sm:$0xff]
  %v40 = vld [vmem:[#allocation2 + $0x18] sm:$0xff]
  %v41 = vld [vmem:[#allocation2 + $0x20] sm:$0xff]
  %v42 = vld [vmem:[#allocation2 + $0x28] sm:$0xff]
  %v43 = vld [vmem:[#allocation2 + $0x30] sm:$0xff]
  %v44 = vld [vmem:[#allocation2 + $0x38] sm:$0xff]
  %v45 = vld [vmem:[#allocation2 + $0x40] sm:$0xff]
  %v46 = vld [vmem:[#allocation2 + $0x48] sm:$0xff]
  %v47 = vld [vmem:[#allocation2 + $0x50] sm:$0xff]
  %v48 = vld [vmem:[#allocation2 + $0x58] sm:$0xff]
  %v49 = vld [vmem:[#allocation2 + $0x60] sm:$0xff]
  %v50 = vld [vmem:[#allocation2 + $0x68] sm:$0xff]
  %v51 = vld [vmem:[#allocation2 + $0x70] sm:$0xff]
  %v52 = vld [vmem:[#allocation2 + $0x78] sm:$0xff]
  %v53 = vld [vmem:[%s0] sm:$0xf]
  %v54 = vld [vmem:[%s0 + $0x4] sm:$0xf]
  %v55 = vld [vmem:[%s0 + $0x8] sm:$0xf]
  %v56 = vld [vmem:[%s0 + $0xc] sm:$0xf]
  %v57 = vld [vmem:[%s0 + $0x10] sm:$0xf]
  %v58 = vld [vmem:[%s0 + $0x14] sm:$0xf]
  %v59 = vld [vmem:[%s0 + $0x18] sm:$0xf]
  %v60 = vld [vmem:[%s0 + $0x1c] sm:$0xf]
  %v61 = vld [vmem:[%s0 + $0x20] sm:$0xf]
  %v62 = vld [vmem:[%s0 + $0x24] sm:$0xf]
  %v63 = vld [vmem:[%s0 + $0x28] sm:$0xf]
  %v64 = vld [vmem:[%s0 + $0x2c] sm:$0xf]
  %v65 = vld [vmem:[%s0 + $0x30] sm:$0xf]
  %v66 = vld [vmem:[%s0 + $0x34] sm:$0xf]
  %v67 = vld [vmem:[%s0 + $0x38] sm:$0xf]
  %v68 = vld [vmem:[%s0 + $0x3c] sm:$0xf]
  %v69 = vld [vmem:[%s1] sm:$0xf]
  %v70 = vld [vmem:[%s1 + $0x4] sm:$0xf]
  %v71 = vld [vmem:[%s1 + $0x8] sm:$0xf]
  %v72 = vld [vmem:[%s1 + $0xc] sm:$0xf]
  %v73 = vld [vmem:[%s1 + $0x10] sm:$0xf]
  %v74 = vld [vmem:[%s1 + $0x14] sm:$0xf]
  %v75 = vld [vmem:[%s1 + $0x18] sm:$0xf]
  %v76 = vld [vmem:[%s1 + $0x1c] sm:$0xf]
  %v77 = vld [vmem:[%s1 + $0x20] sm:$0xf]
  %v78 = vld [vmem:[%s1 + $0x24] sm:$0xf]
  %v79 = vld [vmem:[%s1 + $0x28] sm:$0xf]
  %v80 = vld [vmem:[%s1 + $0x2c] sm:$0xf]
  %v81 = vld [vmem:[%s1 + $0x30] sm:$0xf]
  %v82 = vld [vmem:[%s1 + $0x34] sm:$0xf]
  %v83 = vld [vmem:[%s1 + $0x38] sm:$0xf]
  %v84 = vld [vmem:[%s1 + $0x3c] sm:$0xf]
  %v101 = vunpack.c.l.b16 %v53
  %v102 = vunpack.c.l.b16 %v54
  %v103 = vunpack.c.l.b16 %v55
  %v104 = vunpack.c.l.b16 %v56
  %v105 = vunpack.c.l.b16 %v57
  %v106 = vunpack.c.l.b16 %v58
  %v107 = vunpack.c.l.b16 %v59
  %v108 = vunpack.c.l.b16 %v60
  %v109 = vunpack.c.l.b16 %v61
  %v110 = vunpack.c.l.b16 %v62
  %v111 = vunpack.c.l.b16 %v63
  %v112 = vunpack.c.l.b16 %v64
  %v113 = vunpack.c.l.b16 %v65
  %v114 = vunpack.c.l.b16 %v66
  %v115 = vunpack.c.l.b16 %v67
  %v116 = vunpack.c.l.b16 %v68
  %v117 = vpack.c.b16 %v102, %v101
  %v118 = vpack.c.b16 %v104, %v103
  %v119 = vpack.c.b16 %v106, %v105
  %v120 = vpack.c.b16 %v108, %v107
  %v121 = vpack.c.b16 %v110, %v109
  %v122 = vpack.c.b16 %v112, %v111
  %v123 = vpack.c.b16 %v114, %v113
  %v124 = vpack.c.b16 %v116, %v115
  %v149 = vunpack.c.l.b16 %v69
  %v150 = vunpack.c.l.b16 %v70
  %v151 = vunpack.c.l.b16 %v71
  %v152 = vunpack.c.l.b16 %v72
  %v153 = vunpack.c.l.b16 %v73
  %v154 = vunpack.c.l.b16 %v74
  %v155 = vunpack.c.l.b16 %v75
  %v156 = vunpack.c.l.b16 %v76
  %v157 = vunpack.c.l.b16 %v77
  %v158 = vunpack.c.l.b16 %v78
  %v159 = vunpack.c.l.b16 %v79
  %v160 = vunpack.c.l.b16 %v80
  %v161 = vunpack.c.l.b16 %v81
  %v162 = vunpack.c.l.b16 %v82
  %v163 = vunpack.c.l.b16 %v83
  %v164 = vunpack.c.l.b16 %v84
  %v165 = vpack.c.b16 %v150, %v149
  %v166 = vpack.c.b16 %v152, %v151
  %v167 = vpack.c.b16 %v154, %v153
  %v168 = vpack.c.b16 %v156, %v155
  %v169 = vpack.c.b16 %v158, %v157
  %v170 = vpack.c.b16 %v160, %v159
  %v171 = vpack.c.b16 %v162, %v161
  %v172 = vpack.c.b16 %v164, %v163
  %181 = vmatpush.bf16.msra.mxu0 %v172
  %182 = vmatpush.bf16.msra.mxu0 %v171
  %183 = vmatpush.bf16.msra.mxu0 %v170
  %184 = vmatpush.bf16.msra.mxu0 %v169
  %185 = vmatpush.bf16.msra.mxu0 %v168
  %186 = vmatpush.bf16.msra.mxu0 %v167
  %187 = vmatpush.bf16.msra.mxu0 %v166
  %188 = vmatpush.bf16.msra.mxu0 %v165
  %189 = vmatmul.bf16.gmra.mxu0 %v117
  %v190 = vpop.f32.mrf.mxu0
  %v191 = vadd.f32 0.0, %v190
  %v192 = vpop.f32.mrf.mxu0
  %v193 = vadd.f32 0.0, %v192
  %194 = vmatmul.bf16.gmra.mxu0 %v118
  %v195 = vpop.f32.mrf.mxu0
  %v196 = vadd.f32 0.0, %v195
  %v197 = vpop.f32.mrf.mxu0
  %v198 = vadd.f32 0.0, %v197
  %199 = vmatmul.bf16.gmra.mxu0 %v119
  %v200 = vpop.f32.mrf.mxu0
  %v201 = vadd.f32 0.0, %v200
  %v202 = vpop.f32.mrf.mxu0
  %v203 = vadd.f32 0.0, %v202
  %204 = vmatmul.bf16.gmra.mxu0 %v120
  %v205 = vpop.f32.mrf.mxu0
  %v206 = vadd.f32 0.0, %v205
  %v207 = vpop.f32.mrf.mxu0
  %v208 = vadd.f32 0.0, %v207
  %209 = vmatmul.bf16.gmra.mxu0 %v121
  %v210 = vpop.f32.mrf.mxu0
  %v211 = vadd.f32 0.0, %v210
  %v212 = vpop.f32.mrf.mxu0
  %v213 = vadd.f32 0.0, %v212
  %214 = vmatmul.bf16.gmra.mxu0 %v122
  %v215 = vpop.f32.mrf.mxu0
  %v216 = vadd.f32 0.0, %v215
  %v217 = vpop.f32.mrf.mxu0
  %v218 = vadd.f32 0.0, %v217
  %219 = vmatmul.bf16.gmra.mxu0 %v123
  %v220 = vpop.f32.mrf.mxu0
  %v221 = vadd.f32 0.0, %v220
  %v222 = vpop.f32.mrf.mxu0
  %v223 = vadd.f32 0.0, %v222
  %224 = vmatmul.bf16.gmra.mxu0 %v124
  %v225 = vpop.f32.mrf.mxu0
  %v226 = vadd.f32 0.0, %v225
  %v227 = vpop.f32.mrf.mxu0
  %v228 = vadd.f32 0.0, %v227
  %229 = vdwg.mxu0
  %v230 = vadd.f32 %v37, %v191
  %v231 = vadd.f32 %v38, %v193
  %v232 = vadd.f32 %v39, %v196
  %v233 = vadd.f32 %v40, %v198
  %v234 = vadd.f32 %v41, %v201
  %v235 = vadd.f32 %v42, %v203
  %v236 = vadd.f32 %v43, %v206
  %v237 = vadd.f32 %v44, %v208
  %v238 = vadd.f32 %v45, %v211
  %v239 = vadd.f32 %v46, %v213
  %v240 = vadd.f32 %v47, %v216
  %v241 = vadd.f32 %v48, %v218
  %v242 = vadd.f32 %v49, %v221
  %v243 = vadd.f32 %v50, %v223
  %v244 = vadd.f32 %v51, %v226
  %v245 = vadd.f32 %v52, %v228
  %246 = vst [vmem:[#allocation2] sm:$0xff] %v230
  %247 = vst [vmem:[#allocation2 + $0x8] sm:$0xff] %v231
  %248 = vst [vmem:[#allocation2 + $0x10] sm:$0xff] %v232
  %249 = vst [vmem:[#allocation2 + $0x18] sm:$0xff] %v233
  %250 = vst [vmem:[#allocation2 + $0x20] sm:$0xff] %v234
  %251 = vst [vmem:[#allocation2 + $0x28] sm:$0xff] %v235
  %252 = vst [vmem:[#allocation2 + $0x30] sm:$0xff] %v236
  %253 = vst [vmem:[#allocation2 + $0x38] sm:$0xff] %v237
  %254 = vst [vmem:[#allocation2 + $0x40] sm:$0xff] %v238
  %255 = vst [vmem:[#allocation2 + $0x48] sm:$0xff] %v239
  %256 = vst [vmem:[#allocation2 + $0x50] sm:$0xff] %v240
  %257 = vst [vmem:[#allocation2 + $0x58] sm:$0xff] %v241
  %258 = vst [vmem:[#allocation2 + $0x60] sm:$0xff] %v242
  %259 = vst [vmem:[#allocation2 + $0x68] sm:$0xff] %v243
  %260 = vst [vmem:[#allocation2 + $0x70] sm:$0xff] %v244
  %261 = vst [vmem:[#allocation2 + $0x78] sm:$0xff] %v245
  // Predicated region
  $region22: #{unet_forward.8} parent=0 // pred_check
    %p262 = pneg %p17
  $region23: #{unet_forward.8} parent=0 // pred_check_branch
    %264 = sbr.rel (%p262) target = $region25
  $region24: #{unet_forward.8} parent=0 // pred_region
    %v265 = vld [vmem:[#allocation2] sm:$0xff]
    %v266 = vld [vmem:[#allocation2 + $0x8] sm:$0xff]
    %v267 = vld [vmem:[#allocation2 + $0x10] sm:$0xff]
    %v268 = vld [vmem:[#allocation2 + $0x18] sm:$0xff]
    %v269 = vld [vmem:[#allocation2 + $0x20] sm:$0xff]
    %v270 = vld [vmem:[#allocation2 + $0x28] sm:$0xff]
    %v271 = vld [vmem:[#allocation2 + $0x30] sm:$0xff]
    %v272 = vld [vmem:[#allocation2 + $0x38] sm:$0xff]
    %v273 = vld [vmem:[#allocation2 + $0x40] sm:$0xff]
    %v274 = vld [vmem:[#allocation2 + $0x48] sm:$0xff]
    %v275 = vld [vmem:[#allocation2 + $0x50] sm:$0xff]
    %v276 = vld [vmem:[#allocation2 + $0x58] sm:$0xff]
    %v277 = vld [vmem:[#allocation2 + $0x60] sm:$0xff]
    %v278 = vld [vmem:[#allocation2 + $0x68] sm:$0xff]
    %v279 = vld [vmem:[#allocation2 + $0x70] sm:$0xff]
    %v280 = vld [vmem:[#allocation2 + $0x78] sm:$0xff]
    %v281 = vld [vmem:[%s2] sm:$0x1]
    %v283 = vperm.slane %v281, 0
    %v285 = vmul.f32 %v265, %v283
    %v286 = vmul.f32 %v266, %v283
    %v287 = vmul.f32 %v267, %v283
    %v288 = vmul.f32 %v268, %v283
    %v289 = vmul.f32 %v269, %v283
    %v290 = vmul.f32 %v270, %v283
    %v291 = vmul.f32 %v271, %v283
    %v292 = vmul.f32 %v272, %v283
    %v293 = vmul.f32 %v273, %v283
    %v294 = vmul.f32 %v274, %v283
    %v295 = vmul.f32 %v275, %v283
    %v296 = vmul.f32 %v276, %v283
    %v297 = vmul.f32 %v277, %v283
    %v298 = vmul.f32 %v278, %v283
    %v299 = vmul.f32 %v279, %v283
    %v300 = vmul.f32 %v280, %v283
    %v301 = vld [vmem:[%s3] sm:$0x1]
    %v303 = vperm.slane %v301, 0
    %v305 = vadd.f32 %v285, %v303
    %v306 = vadd.f32 %v286, %v303
    %v307 = vadd.f32 %v287, %v303
    %v308 = vadd.f32 %v288, %v303
    %v309 = vadd.f32 %v289, %v303
    %v310 = vadd.f32 %v290, %v303
    %v311 = vadd.f32 %v291, %v303
    %v312 = vadd.f32 %v292, %v303
    %v313 = vadd.f32 %v293, %v303
    %v314 = vadd.f32 %v294, %v303
    %v315 = vadd.f32 %v295, %v303
    %v316 = vadd.f32 %v296, %v303
    %v317 = vadd.f32 %v297, %v303
    %v318 = vadd.f32 %v298, %v303
    %v319 = vadd.f32 %v299, %v303
    %v320 = vadd.f32 %v300, %v303
    %v321 = vpack.c.bf16 %v305, %v305
    %v322 = vpack.c.bf16 %v306, %v306
    %v323 = vpack.c.bf16 %v307, %v307
    %v324 = vpack.c.bf16 %v308, %v308
    %v325 = vpack.c.bf16 %v309, %v309
    %v326 = vpack.c.bf16 %v310, %v310
    %v327 = vpack.c.bf16 %v311, %v311
    %v328 = vpack.c.bf16 %v312, %v312
    %v329 = vpack.c.bf16 %v313, %v313
    %v330 = vpack.c.bf16 %v314, %v314
    %v331 = vpack.c.bf16 %v315, %v315
    %v332 = vpack.c.bf16 %v316, %v316
    %v333 = vpack.c.bf16 %v317, %v317
    %v334 = vpack.c.bf16 %v318, %v318
    %v335 = vpack.c.bf16 %v319, %v319
    %v336 = vpack.c.bf16 %v320, %v320
    %337 = vst [vmem:[%s4] sm:$0xf] %v321
    %338 = vst [vmem:[%s4 + $0x4] sm:$0xf] %v322
    %339 = vst [vmem:[%s4 + $0x8] sm:$0xf] %v323
    %340 = vst [vmem:[%s4 + $0xc] sm:$0xf] %v324
    %341 = vst [vmem:[%s4 + $0x10] sm:$0xf] %v325
    %342 = vst [vmem:[%s4 + $0x14] sm:$0xf] %v326
    %343 = vst [vmem:[%s4 + $0x18] sm:$0xf] %v327
    %344 = vst [vmem:[%s4 + $0x1c] sm:$0xf] %v328
    %345 = vst [vmem:[%s4 + $0x20] sm:$0xf] %v329
    %346 = vst [vmem:[%s4 + $0x24] sm:$0xf] %v330
    %347 = vst [vmem:[%s4 + $0x28] sm:$0xf] %v331
    %348 = vst [vmem:[%s4 + $0x2c] sm:$0xf] %v332
    %349 = vst [vmem:[%s4 + $0x30] sm:$0xf] %v333
    %350 = vst [vmem:[%s4 + $0x34] sm:$0xf] %v334
    %351 = vst [vmem:[%s4 + $0x38] sm:$0xf] %v335
    %352 = vst [vmem:[%s4 + $0x3c] sm:$0xf] %v336
  $region25: #{unet_forward.8} parent=0 // pred_fallthru
    _
  // Predicated region
  $region26: #{unet_forward.8} parent=0 // pred_check
    _
  $region27: #{unet_forward.8} parent=0 // pred_check_branch
    %354 = sbr.rel (0) target = $region29
  $region28: #{unet_forward.8} parent=0 // pred_region
    _
  $region29: #{unet_forward.8} parent=0 // pred_fallthru
    _
  // Predicated region
  $region30: #{unet_forward.8} parent=0 // pred_check
    _
  $region31: #{unet_forward.8} parent=0 // pred_check_branch
    %356 = sbr.rel (0) target = $region33
  $region32: #{unet_forward.8} parent=0 // pred_region
    _
  $region33: #{unet_forward.8} parent=0 // pred_fallthru
    _

// kernel: unet_forward.9
$region0: #{unet_forward.9}
  #allocation0 [shape = 'u32[]', space=smem, size = 0x4, offset = 0x4, fixed_abs, tag = 'smem constant byte address 0x4 - core index']
  #allocation1 [shape = 'u32[72,128]{1,0:T(1,128)}', space=vmem, size = 0x9000, scoped, tag = 'internal scratch']
  #allocation2 [shape = 'f32[32,128]{1,0:T(8,128)}', space=vmem, size = 0x4000, scoped, tag = 'scratch operand']
  %s0 = inlined_call_operand.vmem [shape: bf16[1,32,128], index: 0, kind: input, shape index: {}]
  %s1 = inlined_call_operand.vmem [shape: bf16[1,128,128], index: 1, kind: input, shape index: {}]
  %s2 = inlined_call_operand.vmem [shape: f32[1,128], index: 2, kind: input, shape index: {}]
  %s3 = inlined_call_operand.vmem [shape: f32[1,128], index: 3, kind: input, shape index: {}]
  %s4 = inlined_call_operand.vmem [shape: bf16[1,32,128], index: 4, kind: output, shape index: {}]
  %s5 = sld [smem:[#allocation0]]
  $region34: #{unet_forward.9} parent=0
    _
  %s7 = ssub.s32 1, %s5
  %s8 = scalar_select 0, %s7, %s5
  // Predicated region
  $region2: #{unet_forward.9} parent=0 // pred_check
    _
  $region3: #{unet_forward.9} parent=0 // pred_check_branch
    %10 = sbr.rel (0) target = $region5
  $region4: #{unet_forward.9} parent=0 // pred_region
    _
  $region5: #{unet_forward.9} parent=0 // pred_fallthru
    _
  // Predicated region
  $region6: #{unet_forward.9} parent=0 // pred_check
    _
  $region7: #{unet_forward.9} parent=0 // pred_check_branch
    %12 = sbr.rel (0) target = $region9
  $region8: #{unet_forward.9} parent=0 // pred_region
    _
  $region9: #{unet_forward.9} parent=0 // pred_fallthru
    _
  // Predicated region
  $region10: #{unet_forward.9} parent=0 // pred_check
    _
  $region11: #{unet_forward.9} parent=0 // pred_check_branch
    %14 = sbr.rel (0) target = $region13
  $region12: #{unet_forward.9} parent=0 // pred_region
    _
  $region13: #{unet_forward.9} parent=0 // pred_fallthru
    _
  // Predicated region
  $region14: #{unet_forward.9} parent=0 // pred_check
    _
  $region15: #{unet_forward.9} parent=0 // pred_check_branch
    %16 = sbr.rel (0) target = $region17
  $region16: #{unet_forward.9} parent=0 // pred_region
    _
  $region17: #{unet_forward.9} parent=0 // pred_fallthru
    _
  %p17 = scmp.eq.s32.totalorder 0, 0
  // Predicated region
  $region18: #{unet_forward.9} parent=0 // pred_check
    %p18 = pneg %p17
  $region19: #{unet_forward.9} parent=0 // pred_check_branch
    %20 = sbr.rel (%p18) target = $region21
  $region20: #{unet_forward.9} parent=0 // pred_region
    %21 = vst [vmem:[#allocation2] sm:$0xff] 0.0
    %22 = vst [vmem:[#allocation2 + $0x8] sm:$0xff] 0.0
    %23 = vst [vmem:[#allocation2 + $0x10] sm:$0xff] 0.0
    %24 = vst [vmem:[#allocation2 + $0x18] sm:$0xff] 0.0
  $region21: #{unet_forward.9} parent=0 // pred_fallthru
    _
  %v25 = vld [vmem:[#allocation2] sm:$0xff]
  %v26 = vld [vmem:[#allocation2 + $0x8] sm:$0xff]
  %v27 = vld [vmem:[#allocation2 + $0x10] sm:$0xff]
  %v28 = vld [vmem:[#allocation2 + $0x18] sm:$0xff]
  %v29 = vld [vmem:[%s0] sm:$0xf]
  %v30 = vld [vmem:[%s0 + $0x4] sm:$0xf]
  %v31 = vld [vmem:[%s0 + $0x8] sm:$0xf]
  %v32 = vld [vmem:[%s0 + $0xc] sm:$0xf]
  %v33 = vld [vmem:[%s1] sm:$0xf]
  %v34 = vld [vmem:[%s1 + $0x4] sm:$0xf]
  %v35 = vld [vmem:[%s1 + $0x8] sm:$0xf]
  %v36 = vld [vmem:[%s1 + $0xc] sm:$0xf]
  %v37 = vld [vmem:[%s1 + $0x10] sm:$0xf]
  %v38 = vld [vmem:[%s1 + $0x14] sm:$0xf]
  %v39 = vld [vmem:[%s1 + $0x18] sm:$0xf]
  %v40 = vld [vmem:[%s1 + $0x1c] sm:$0xf]
  %v41 = vld [vmem:[%s1 + $0x20] sm:$0xf]
  %v42 = vld [vmem:[%s1 + $0x24] sm:$0xf]
  %v43 = vld [vmem:[%s1 + $0x28] sm:$0xf]
  %v44 = vld [vmem:[%s1 + $0x2c] sm:$0xf]
  %v45 = vld [vmem:[%s1 + $0x30] sm:$0xf]
  %v46 = vld [vmem:[%s1 + $0x34] sm:$0xf]
  %v47 = vld [vmem:[%s1 + $0x38] sm:$0xf]
  %v48 = vld [vmem:[%s1 + $0x3c] sm:$0xf]
  %v53 = vunpack.c.l.b16 %v29
  %v54 = vunpack.c.l.b16 %v30
  %v55 = vunpack.c.l.b16 %v31
  %v56 = vunpack.c.l.b16 %v32
  %v57 = vpack.c.b16 %v54, %v53
  %v58 = vpack.c.b16 %v56, %v55
  %v77 = vunpack.c.l.b16 %v33
  %v78 = vunpack.c.l.b16 %v34
  %v79 = vunpack.c.l.b16 %v35
  %v80 = vunpack.c.l.b16 %v36
  %v81 = vunpack.c.l.b16 %v37
  %v82 = vunpack.c.l.b16 %v38
  %v83 = vunpack.c.l.b16 %v39
  %v84 = vunpack.c.l.b16 %v40
  %v85 = vunpack.c.l.b16 %v41
  %v86 = vunpack.c.l.b16 %v42
  %v87 = vunpack.c.l.b16 %v43
  %v88 = vunpack.c.l.b16 %v44
  %v89 = vunpack.c.l.b16 %v45
  %v90 = vunpack.c.l.b16 %v46
  %v91 = vunpack.c.l.b16 %v47
  %v92 = vunpack.c.l.b16 %v48
  %v93 = vpack.c.b16 %v78, %v77
  %v94 = vpack.c.b16 %v80, %v79
  %v95 = vpack.c.b16 %v82, %v81
  %v96 = vpack.c.b16 %v84, %v83
  %v97 = vpack.c.b16 %v86, %v85
  %v98 = vpack.c.b16 %v88, %v87
  %v99 = vpack.c.b16 %v90, %v89
  %v100 = vpack.c.b16 %v92, %v91
  %109 = vmatpush.bf16.msra.mxu0 %v100
  %110 = vmatpush.bf16.msra.mxu0 %v99
  %111 = vmatpush.bf16.msra.mxu0 %v98
  %112 = vmatpush.bf16.msra.mxu0 %v97
  %113 = vmatpush.bf16.msra.mxu0 %v96
  %114 = vmatpush.bf16.msra.mxu0 %v95
  %115 = vmatpush.bf16.msra.mxu0 %v94
  %116 = vmatpush.bf16.msra.mxu0 %v93
  %117 = vmatmul.bf16.gmra.mxu0 %v57
  %v118 = vpop.f32.mrf.mxu0
  %v119 = vadd.f32 0.0, %v118
  %v120 = vpop.f32.mrf.mxu0
  %v121 = vadd.f32 0.0, %v120
  %122 = vmatmul.bf16.gmra.mxu0 %v58
  %v123 = vpop.f32.mrf.mxu0
  %v124 = vadd.f32 0.0, %v123
  %v125 = vpop.f32.mrf.mxu0
  %v126 = vadd.f32 0.0, %v125
  %127 = vdwg.mxu0
  %v128 = vadd.f32 %v25, %v119
  %v129 = vadd.f32 %v26, %v121
  %v130 = vadd.f32 %v27, %v124
  %v131 = vadd.f32 %v28, %v126
  %132 = vst [vmem:[#allocation2] sm:$0xff] %v128
  %133 = vst [vmem:[#allocation2 + $0x8] sm:$0xff] %v129
  %134 = vst [vmem:[#allocation2 + $0x10] sm:$0xff] %v130
  %135 = vst [vmem:[#allocation2 + $0x18] sm:$0xff] %v131
  // Predicated region
  $region22: #{unet_forward.9} parent=0 // pred_check
    %p136 = pneg %p17
  $region23: #{unet_forward.9} parent=0 // pred_check_branch
    %138 = sbr.rel (%p136) target = $region25
  $region24: #{unet_forward.9} parent=0 // pred_region
    %v139 = vld [vmem:[#allocation2] sm:$0xff]
    %v140 = vld [vmem:[#allocation2 + $0x8] sm:$0xff]
    %v141 = vld [vmem:[#allocation2 + $0x10] sm:$0xff]
    %v142 = vld [vmem:[#allocation2 + $0x18] sm:$0xff]
    %v143 = vld [vmem:[%s2] sm:$0x1]
    %v145 = vperm.slane %v143, 0
    %v147 = vmul.f32 %v139, %v145
    %v148 = vmul.f32 %v140, %v145
    %v149 = vmul.f32 %v141, %v145
    %v150 = vmul.f32 %v142, %v145
    %v151 = vld [vmem:[%s3] sm:$0x1]
    %v153 = vperm.slane %v151, 0
    %v155 = vadd.f32 %v147, %v153
    %v156 = vadd.f32 %v148, %v153
    %v157 = vadd.f32 %v149, %v153
    %v158 = vadd.f32 %v150, %v153
    %v159 = vpack.c.bf16 %v155, %v155
    %v160 = vpack.c.bf16 %v156, %v156
    %v161 = vpack.c.bf16 %v157, %v157
    %v162 = vpack.c.bf16 %v158, %v158
    %163 = vst [vmem:[%s4] sm:$0xf] %v159
    %164 = vst [vmem:[%s4 + $0x4] sm:$0xf] %v160
    %165 = vst [vmem:[%s4 + $0x8] sm:$0xf] %v161
    %166 = vst [vmem:[%s4 + $0xc] sm:$0xf] %v162
  $region25: #{unet_forward.9} parent=0 // pred_fallthru
    _
  // Predicated region
  $region26: #{unet_forward.9} parent=0 // pred_check
    _
  $region27: #{unet_forward.9} parent=0 // pred_check_branch
    %168 = sbr.rel (0) target = $region29
  $region28: #{unet_forward.9} parent=0 // pred_region
    _
  $region29: #{unet_forward.9} parent=0 // pred_fallthru
    _
  // Predicated region
  $region30: #{unet_forward.9} parent=0 // pred_check
    _
  $region31: #{unet_forward.9} parent=0 // pred_check_branch
    %170 = sbr.rel (0) target = $region33
  $region32: #{unet_forward.9} parent=0 // pred_region
    _
  $region33: #{unet_forward.9} parent=0 // pred_fallthru
    _

// kernel: unet_forward.10
$region0: #{unet_forward.10}
  #allocation0 [shape = 'u32[]', space=smem, size = 0x4, offset = 0x4, fixed_abs, tag = 'smem constant byte address 0x4 - core index']
  #allocation1 [shape = 'u32[72,128]{1,0:T(1,128)}', space=vmem, size = 0x9000, scoped, tag = 'internal scratch']
  #allocation2 [shape = 'f32[16,128]{1,0:T(8,128)}', space=vmem, size = 0x2000, scoped, tag = 'scratch operand']
  %s0 = inlined_call_operand.vmem [shape: bf16[1,16,256], index: 0, kind: input, shape index: {}]
  %s1 = inlined_call_operand.vmem [shape: bf16[1,256,128], index: 1, kind: input, shape index: {}]
  %s2 = inlined_call_operand.vmem [shape: f32[1,128], index: 2, kind: input, shape index: {}]
  %s3 = inlined_call_operand.vmem [shape: f32[1,128], index: 3, kind: input, shape index: {}]
  %s4 = inlined_call_operand.vmem [shape: bf16[1,16,128], index: 4, kind: output, shape index: {}]
  %s5 = sld [smem:[#allocation0]]
  $region34: #{unet_forward.10} parent=0
    _
  %s7 = ssub.s32 1, %s5
  %s8 = scalar_select 0, %s7, %s5
  // Predicated region
  $region2: #{unet_forward.10} parent=0 // pred_check
    _
  $region3: #{unet_forward.10} parent=0 // pred_check_branch
    %10 = sbr.rel (0) target = $region5
  $region4: #{unet_forward.10} parent=0 // pred_region
    _
  $region5: #{unet_forward.10} parent=0 // pred_fallthru
    _
  // Predicated region
  $region6: #{unet_forward.10} parent=0 // pred_check
    _
  $region7: #{unet_forward.10} parent=0 // pred_check_branch
    %12 = sbr.rel (0) target = $region9
  $region8: #{unet_forward.10} parent=0 // pred_region
    _
  $region9: #{unet_forward.10} parent=0 // pred_fallthru
    _
  // Predicated region
  $region10: #{unet_forward.10} parent=0 // pred_check
    _
  $region11: #{unet_forward.10} parent=0 // pred_check_branch
    %14 = sbr.rel (0) target = $region13
  $region12: #{unet_forward.10} parent=0 // pred_region
    _
  $region13: #{unet_forward.10} parent=0 // pred_fallthru
    _
  // Predicated region
  $region14: #{unet_forward.10} parent=0 // pred_check
    _
  $region15: #{unet_forward.10} parent=0 // pred_check_branch
    %16 = sbr.rel (0) target = $region17
  $region16: #{unet_forward.10} parent=0 // pred_region
    _
  $region17: #{unet_forward.10} parent=0 // pred_fallthru
    _
  %p17 = scmp.eq.s32.totalorder 0, 0
  // Predicated region
  $region18: #{unet_forward.10} parent=0 // pred_check
    %p18 = pneg %p17
  $region19: #{unet_forward.10} parent=0 // pred_check_branch
    %20 = sbr.rel (%p18) target = $region21
  $region20: #{unet_forward.10} parent=0 // pred_region
    %21 = vst [vmem:[#allocation2] sm:$0xff] 0.0
    %22 = vst [vmem:[#allocation2 + $0x8] sm:$0xff] 0.0
  $region21: #{unet_forward.10} parent=0 // pred_fallthru
    _
  %v23 = vld [vmem:[#allocation2] sm:$0xff]
  %v24 = vld [vmem:[#allocation2 + $0x8] sm:$0xff]
  %v25 = vld [vmem:[%s0] sm:$0xff]
  %v26 = vld [vmem:[%s0 + $0x8] sm:$0xff]
  %v27 = vld [vmem:[%s1] sm:$0xf]
  %v28 = vld [vmem:[%s1 + $0x4] sm:$0xf]
  %v29 = vld [vmem:[%s1 + $0x8] sm:$0xf]
  %v30 = vld [vmem:[%s1 + $0xc] sm:$0xf]
  %v31 = vld [vmem:[%s1 + $0x10] sm:$0xf]
  %v32 = vld [vmem:[%s1 + $0x14] sm:$0xf]
  %v33 = vld [vmem:[%s1 + $0x18] sm:$0xf]
  %v34 = vld [vmem:[%s1 + $0x1c] sm:$0xf]
  %v35 = vld [vmem:[%s1 + $0x20] sm:$0xf]
  %v36 = vld [vmem:[%s1 + $0x24] sm:$0xf]
  %v37 = vld [vmem:[%s1 + $0x28] sm:$0xf]
  %v38 = vld [vmem:[%s1 + $0x2c] sm:$0xf]
  %v39 = vld [vmem:[%s1 + $0x30] sm:$0xf]
  %v40 = vld [vmem:[%s1 + $0x34] sm:$0xf]
  %v41 = vld [vmem:[%s1 + $0x38] sm:$0xf]
  %v42 = vld [vmem:[%s1 + $0x3c] sm:$0xf]
  %v43 = vld [vmem:[%s1 + $0x40] sm:$0xf]
  %v44 = vld [vmem:[%s1 + $0x44] sm:$0xf]
  %v45 = vld [vmem:[%s1 + $0x48] sm:$0xf]
  %v46 = vld [vmem:[%s1 + $0x4c] sm:$0xf]
  %v47 = vld [vmem:[%s1 + $0x50] sm:$0xf]
  %v48 = vld [vmem:[%s1 + $0x54] sm:$0xf]
  %v49 = vld [vmem:[%s1 + $0x58] sm:$0xf]
  %v50 = vld [vmem:[%s1 + $0x5c] sm:$0xf]
  %v51 = vld [vmem:[%s1 + $0x60] sm:$0xf]
  %v52 = vld [vmem:[%s1 + $0x64] sm:$0xf]
  %v53 = vld [vmem:[%s1 + $0x68] sm:$0xf]
  %v54 = vld [vmem:[%s1 + $0x6c] sm:$0xf]
  %v55 = vld [vmem:[%s1 + $0x70] sm:$0xf]
  %v56 = vld [vmem:[%s1 + $0x74] sm:$0xf]
  %v57 = vld [vmem:[%s1 + $0x78] sm:$0xf]
  %v58 = vld [vmem:[%s1 + $0x7c] sm:$0xf]
  %v61 = vunpack.c.l.b16 %v25
  %v62 = vunpack.c.h.b16 %v25
  %v63 = vunpack.c.l.b16 %v26
  %v64 = vunpack.c.h.b16 %v26
  %v65 = vpack.c.b16 %v63, %v61
  %v66 = vpack.c.b16 %v64, %v62
  %v101 = vunpack.c.l.b16 %v27
  %v102 = vunpack.c.l.b16 %v28
  %v103 = vunpack.c.l.b16 %v29
  %v104 = vunpack.c.l.b16 %v30
  %v105 = vunpack.c.l.b16 %v31
  %v106 = vunpack.c.l.b16 %v32
  %v107 = vunpack.c.l.b16 %v33
  %v108 = vunpack.c.l.b16 %v34
  %v109 = vunpack.c.l.b16 %v35
  %v110 = vunpack.c.l.b16 %v36
  %v111 = vunpack.c.l.b16 %v37
  %v112 = vunpack.c.l.b16 %v38
  %v113 = vunpack.c.l.b16 %v39
  %v114 = vunpack.c.l.b16 %v40
  %v115 = vunpack.c.l.b16 %v41
  %v116 = vunpack.c.l.b16 %v42
  %v117 = vunpack.c.l.b16 %v43
  %v118 = vunpack.c.l.b16 %v44
  %v119 = vunpack.c.l.b16 %v45
  %v120 = vunpack.c.l.b16 %v46
  %v121 = vunpack.c.l.b16 %v47
  %v122 = vunpack.c.l.b16 %v48
  %v123 = vunpack.c.l.b16 %v49
  %v124 = vunpack.c.l.b16 %v50
  %v125 = vunpack.c.l.b16 %v51
  %v126 = vunpack.c.l.b16 %v52
  %v127 = vunpack.c.l.b16 %v53
  %v128 = vunpack.c.l.b16 %v54
  %v129 = vunpack.c.l.b16 %v55
  %v130 = vunpack.c.l.b16 %v56
  %v131 = vunpack.c.l.b16 %v57
  %v132 = vunpack.c.l.b16 %v58
  %v133 = vpack.c.b16 %v102, %v101
  %v134 = vpack.c.b16 %v104, %v103
  %v135 = vpack.c.b16 %v106, %v105
  %v136 = vpack.c.b16 %v108, %v107
  %v137 = vpack.c.b16 %v110, %v109
  %v138 = vpack.c.b16 %v112, %v111
  %v139 = vpack.c.b16 %v114, %v113
  %v140 = vpack.c.b16 %v116, %v115
  %v141 = vpack.c.b16 %v118, %v117
  %v142 = vpack.c.b16 %v120, %v119
  %v143 = vpack.c.b16 %v122, %v121
  %v144 = vpack.c.b16 %v124, %v123
  %v145 = vpack.c.b16 %v126, %v125
  %v146 = vpack.c.b16 %v128, %v127
  %v147 = vpack.c.b16 %v130, %v129
  %v148 = vpack.c.b16 %v132, %v131
  %165 = vmatpush.bf16.msra.mxu0 %v140
  %166 = vmatpush.bf16.msra.mxu0 %v139
  %167 = vmatpush.bf16.msra.mxu0 %v138
  %168 = vmatpush.bf16.msra.mxu0 %v137
  %169 = vmatpush.bf16.msra.mxu0 %v136
  %170 = vmatpush.bf16.msra.mxu0 %v135
  %171 = vmatpush.bf16.msra.mxu0 %v134
  %172 = vmatpush.bf16.msra.mxu0 %v133
  %173 = vmatmul.bf16.gmra.mxu0 %v65
  %v174 = vpop.f32.mrf.mxu0
  %v175 = vadd.f32 0.0, %v174
  %v176 = vpop.f32.mrf.mxu0
  %v177 = vadd.f32 0.0, %v176
  %178 = vdwg.mxu0
  %179 = vmatpush.bf16.msra.mxu0 %v148
  %180 = vmatpush.bf16.msra.mxu0 %v147
  %181 = vmatpush.bf16.msra.mxu0 %v146
  %182 = vmatpush.bf16.msra.mxu0 %v145
  %183 = vmatpush.bf16.msra.mxu0 %v144
  %184 = vmatpush.bf16.msra.mxu0 %v143
  %185 = vmatpush.bf16.msra.mxu0 %v142
  %186 = vmatpush.bf16.msra.mxu0 %v141
  %187 = vmatmul.bf16.gmra.mxu0 %v66
  %v188 = vpop.f32.mrf.mxu0
  %v189 = vadd.f32 %v175, %v188
  %v190 = vpop.f32.mrf.mxu0
  %v191 = vadd.f32 %v177, %v190
  %192 = vdwg.mxu0
  %v193 = vadd.f32 %v23, %v189
  %v194 = vadd.f32 %v24, %v191
  %195 = vst [vmem:[#allocation2] sm:$0xff] %v193
  %196 = vst [vmem:[#allocation2 + $0x8] sm:$0xff] %v194
  // Predicated region
  $region22: #{unet_forward.10} parent=0 // pred_check
    %p197 = pneg %p17
  $region23: #{unet_forward.10} parent=0 // pred_check_branch
    %199 = sbr.rel (%p197) target = $region25
  $region24: #{unet_forward.10} parent=0 // pred_region
    %v200 = vld [vmem:[#allocation2] sm:$0xff]
    %v201 = vld [vmem:[#allocation2 + $0x8] sm:$0xff]
    %v202 = vld [vmem:[%s2] sm:$0x1]
    %v204 = vperm.slane %v202, 0
    %v206 = vmul.f32 %v200, %v204
    %v207 = vmul.f32 %v201, %v204
    %v208 = vld [vmem:[%s3] sm:$0x1]
    %v210 = vperm.slane %v208, 0
    %v212 = vadd.f32 %v206, %v210
    %v213 = vadd.f32 %v207, %v210
    %v214 = vpack.c.bf16 %v212, %v212
    %v215 = vpack.c.bf16 %v213, %v213
    %216 = vst [vmem:[%s4] sm:$0xf] %v214
    %217 = vst [vmem:[%s4 + $0x4] sm:$0xf] %v215
  $region25: #{unet_forward.10} parent=0 // pred_fallthru
    _
  // Predicated region
  $region26: #{unet_forward.10} parent=0 // pred_check
    _
  $region27: #{unet_forward.10} parent=0 // pred_check_branch
    %219 = sbr.rel (0) target = $region29
  $region28: #{unet_forward.10} parent=0 // pred_region
    _
  $region29: #{unet_forward.10} parent=0 // pred_fallthru
    _
  // Predicated region
  $region30: #{unet_forward.10} parent=0 // pred_check
    _
  $region31: #{unet_forward.10} parent=0 // pred_check_branch
    %221 = sbr.rel (0) target = $region33
  $region32: #{unet_forward.10} parent=0 // pred_region
    _
  $region33: #{unet_forward.10} parent=0 // pred_fallthru
    _

// kernel: unet_forward.12
$region0: #{unet_forward.12}
  #allocation0 [shape = 'u32[]', space=smem, size = 0x4, offset = 0x4, fixed_abs, tag = 'smem constant byte address 0x4 - core index']
  #allocation1 [shape = 'u32[72,128]{1,0:T(1,128)}', space=vmem, size = 0x9000, scoped, tag = 'internal scratch']
  #allocation2 [shape = 'f32[16,128]{1,0:T(8,128)}', space=vmem, size = 0x2000, scoped, tag = 'scratch operand']
  %s0 = inlined_call_operand.vmem [shape: bf16[4,16,256], index: 0, kind: input, shape index: {}]
  %s1 = inlined_call_operand.vmem [shape: bf16[4,256,128], index: 1, kind: input, shape index: {}]
  %s2 = inlined_call_operand.vmem [shape: f32[1,128], index: 2, kind: input, shape index: {}]
  %s3 = inlined_call_operand.vmem [shape: f32[1,128], index: 3, kind: input, shape index: {}]
  %s4 = inlined_call_operand.vmem [shape: bf16[4,16,128], index: 4, kind: output, shape index: {}]
  %s5 = sld [smem:[#allocation0]]
  $region57: #{unet_forward.12} parent=0
    _
  %s7 = ssub.s32 1, %s5
  %s8 = scalar_select 0, %s7, %s5
  loop: start=0, step=1, limit=6
  $region2: #{unet_forward.12} parent=0 // loop_pre_header
    _
  $region3: #{unet_forward.12} parent=0 // loop_header
    %s10 = sphi 0, %s14
    %p11 = scmp.ge.s32.totalorder %s10, 6
    %s17 = sphi 0, %s43
    %s18 = sphi 0, %s39
    %s19 = sphi 0, %s35
    %s20 = sphi 0, %s31
    %s21 = sphi 0, %s17
    %s22 = sphi 0, %s18
    %s23 = sphi 0, %s19
    %s24 = sphi 0, %s20
    %s25 = sphi 0, %s21
    %s26 = sphi 0, %s22
    %s27 = sphi 0, %s23
    %s28 = sphi 0, %s24
    %s50 = sphi 0, %s52
    %s53 = sphi 0, %s50
    %s54 = sphi 0, %s53
    %s70 = sphi 0, %s54
    %s80 = sphi 0, %s82
    %s83 = sphi 0, %s80
    %s84 = sphi 0, %s83
    %s100 = sphi 0, %s84
    %s106 = sphi 0, %s108
    %s109 = sphi 0, %s106
    %s110 = sphi 0, %s109
    %s126 = sphi 0, %s110
    %s132 = sphi 0, %s134
    %s135 = sphi 0, %s132
    %s136 = sphi 0, %s135
    %s152 = sphi 0, %s136
    %s162 = sphi 0, %s164
    %s165 = sphi 0, %s162
    %s166 = sphi 0, %s165
    %s182 = sphi 0, %s166
  $region4: #{unet_forward.12} parent=0 // loop_header_branch
    %13 = sbr.rel (%p11) target = $region8
  $region5: #{unet_forward.12} parent=0 // loop_body
    %s15 = ssub.s32 %s10, 1
    %s16 = ssub.s32 %s10, 2
    %s29 = sadd.s32 1, %s20
    %p30 = scmp.ge.s32.totalorder %s29, 1
    %s31 = scalar_select %p30, 0, %s29
    %s32 = sadd.s32 1, %s19
    %s33 = scalar_select %p30, %s32, %s19
    %p34 = scmp.ge.s32.totalorder %s33, 1
    %s35 = scalar_select %p34, 0, %s33
    %s36 = sadd.s32 1, %s18
    %s37 = scalar_select %p34, %s36, %s18
    %p38 = scmp.ge.s32.totalorder %s37, 1
    %s39 = scalar_select %p38, 0, %s37
    %s40 = sadd.s32 1, %s17
    %s41 = scalar_select %p38, %s40, %s17
    %p42 = scmp.ge.s32.totalorder %s41, 4
    %s43 = scalar_select %p42, 0, %s41
    %s44 = ssub.s32 %s17, %s43
    %s45 = ssub.s32 %s18, %s39
    %s46 = sor.u32 %s44, %s45
    %s47 = ssub.s32 %s20, %s31
    %s48 = sor.u32 %s46, %s47
    %p49 = scmp.eq.s32.totalorder %s48, 0
    %s51 = sadd.s32 %s50, 1
    %s52 = scalar_select %p49, %s50, %s51
    %p55 = pneg %p49
    %p56 = scmp.eq.s32.totalorder %s10, 3
    %p57 = por %p55, %p56
    %p58 = scmp.ne.s32.totalorder %s50, %s53
    %p59 = scmp.eq.s32.totalorder %s10, 0
    %p60 = por %p58, %p59
    %p61 = scmp.ne.s32.totalorder %s50, %s53
    %p62 = scmp.eq.s32.totalorder %s15, 3
    %p63 = por %p61, %p62
    %p64 = scmp.ne.s32.totalorder %s53, %s54
    %p65 = scmp.eq.s32.totalorder %s15, 0
    %p66 = por %p64, %p65
    %p67 = scmp.ne.s32.totalorder %s53, %s54
    %p68 = scmp.eq.s32.totalorder %s16, 3
    %p69 = por %p67, %p68
    %p71 = scmp.ne.s32.totalorder %s54, %s70
    %p72 = scmp.eq.s32.totalorder %s16, 0
    %p73 = por %p71, %p72
    %s74 = ssub.s32 %s17, %s43
    %s75 = ssub.s32 %s20, %s31
    %s76 = sor.u32 %s74, %s75
    %s77 = ssub.s32 %s19, %s35
    %s78 = sor.u32 %s76, %s77
    %p79 = scmp.eq.s32.totalorder %s78, 0
    %s81 = sadd.s32 %s80, 1
    %s82 = scalar_select %p79, %s80, %s81
    %p85 = pneg %p79
    %p86 = scmp.eq.s32.totalorder %s10, 3
    %p87 = por %p85, %p86
    %p88 = scmp.ne.s32.totalorder %s80, %s83
    %p89 = scmp.eq.s32.totalorder %s10, 0
    %p90 = por %p88, %p89
    %p91 = scmp.ne.s32.totalorder %s80, %s83
    %p92 = scmp.eq.s32.totalorder %s15, 3
    %p93 = por %p91, %p92
    %p94 = scmp.ne.s32.totalorder %s83, %s84
    %p95 = scmp.eq.s32.totalorder %s15, 0
    %p96 = por %p94, %p95
    %p97 = scmp.ne.s32.totalorder %s83, %s84
    %p98 = scmp.eq.s32.totalorder %s16, 3
    %p99 = por %p97, %p98
    %p101 = scmp.ne.s32.totalorder %s84, %s100
    %p102 = scmp.eq.s32.totalorder %s16, 0
    %p103 = por %p101, %p102
    %s104 = ssub.s32 %s19, %s35
    %p105 = scmp.eq.s32.totalorder %s104, 0
    %s107 = sadd.s32 %s106, 1
    %s108 = scalar_select %p105, %s106, %s107
    %p111 = pneg %p105
    %p112 = scmp.eq.s32.totalorder %s10, 3
    %p113 = por %p111, %p112
    %p114 = scmp.ne.s32.totalorder %s106, %s109
    %p115 = scmp.eq.s32.totalorder %s10, 0
    %p116 = por %p114, %p115
    %p117 = scmp.ne.s32.totalorder %s106, %s109
    %p118 = scmp.eq.s32.totalorder %s15, 3
    %p119 = por %p117, %p118
    %p120 = scmp.ne.s32.totalorder %s109, %s110
    %p121 = scmp.eq.s32.totalorder %s15, 0
    %p122 = por %p120, %p121
    %p123 = scmp.ne.s32.totalorder %s109, %s110
    %p124 = scmp.eq.s32.totalorder %s16, 3
    %p125 = por %p123, %p124
    %p127 = scmp.ne.s32.totalorder %s110, %s126
    %p128 = scmp.eq.s32.totalorder %s16, 0
    %p129 = por %p127, %p128
    %s130 = ssub.s32 %s19, %s35
    %p131 = scmp.eq.s32.totalorder %s130, 0
    %s133 = sadd.s32 %s132, 1
    %s134 = scalar_select %p131, %s132, %s133
    %p137 = pneg %p131
    %p138 = scmp.eq.s32.totalorder %s10, 3
    %p139 = por %p137, %p138
    %p140 = scmp.ne.s32.totalorder %s132, %s135
    %p141 = scmp.eq.s32.totalorder %s10, 0
    %p142 = por %p140, %p141
    %p143 = scmp.ne.s32.totalorder %s132, %s135
    %p144 = scmp.eq.s32.totalorder %s15, 3
    %p145 = por %p143, %p144
    %p146 = scmp.ne.s32.totalorder %s135, %s136
    %p147 = scmp.eq.s32.totalorder %s15, 0
    %p148 = por %p146, %p147
    %p149 = scmp.ne.s32.totalorder %s135, %s136
    %p150 = scmp.eq.s32.totalorder %s16, 3
    %p151 = por %p149, %p150
    %p153 = scmp.ne.s32.totalorder %s136, %s152
    %p154 = scmp.eq.s32.totalorder %s16, 0
    %p155 = por %p153, %p154
    %s156 = ssub.s32 %s17, %s43
    %s157 = ssub.s32 %s18, %s39
    %s158 = sor.u32 %s156, %s157
    %s159 = ssub.s32 %s19, %s35
    %s160 = sor.u32 %s158, %s159
    %p161 = scmp.eq.s32.totalorder %s160, 0
    %s163 = sadd.s32 %s162, 1
    %s164 = scalar_select %p161, %s162, %s163
    %p167 = pneg %p161
    %p168 = scmp.eq.s32.totalorder %s10, 3
    %p169 = por %p167, %p168
    %p170 = scmp.ne.s32.totalorder %s162, %s165
    %p171 = scmp.eq.s32.totalorder %s10, 0
    %p172 = por %p170, %p171
    %p173 = scmp.ne.s32.totalorder %s162, %s165
    %p174 = scmp.eq.s32.totalorder %s15, 3
    %p175 = por %p173, %p174
    %p176 = scmp.ne.s32.totalorder %s165, %s166
    %p177 = scmp.eq.s32.totalorder %s15, 0
    %p178 = por %p176, %p177
    %p179 = scmp.ne.s32.totalorder %s165, %s166
    %p180 = scmp.eq.s32.totalorder %s16, 3
    %p181 = por %p179, %p180
    %p183 = scmp.ne.s32.totalorder %s166, %s182
    %p184 = scmp.eq.s32.totalorder %s16, 0
    %p185 = por %p183, %p184
    %p186 = scmp.le.s32.totalorder 1, %s10
    %p187 = scmp.lt.s32.totalorder %s10, 5
    %p188 = pnand %p186, %p187
    %p189 = pneg %p188
    // Predicated region
    $region9: #{unet_forward.12} parent=5 // pred_check
      _
    $region10: #{unet_forward.12} parent=5 // pred_check_branch
      %191 = sbr.rel (%p188) target = $region12
    $region11: #{unet_forward.12} parent=5 // pred_region
      %s192 = ssub.s32 %s10, 1
      // Predicated region
      $region13: #{unet_forward.12} parent=11 // pred_check
        %p193 = pneg %p122
      $region14: #{unet_forward.12} parent=11 // pred_check_branch
        %195 = sbr.rel (%p193) target = $region16
      $region15: #{unet_forward.12} parent=11 // pred_region
        %p196 = scmp.lt.s32.totalorder %s23, 0
        %s197 = scalar_select %p196, %s23, 0
        %s198 = scalar_lea.vmem %s2, %s197
      $region16: #{unet_forward.12} parent=11 // pred_fallthru
        _
      // Predicated region
      $region17: #{unet_forward.12} parent=11 // pred_check
        %p199 = pneg %p148
      $region18: #{unet_forward.12} parent=11 // pred_check_branch
        %201 = sbr.rel (%p199) target = $region20
      $region19: #{unet_forward.12} parent=11 // pred_region
        %p202 = scmp.lt.s32.totalorder %s23, 0
        %s203 = scalar_select %p202, %s23, 0
        %s204 = scalar_lea.vmem %s3, %s203
      $region20: #{unet_forward.12} parent=11 // pred_fallthru
        _
    $region12: #{unet_forward.12} parent=5 // pred_fallthru
      _
    %p205 = scmp.lt.s32.totalorder %s10, 4
    // Predicated region
    $region21: #{unet_forward.12} parent=5 // pred_check
      %p206 = pneg %p205
    $region22: #{unet_forward.12} parent=5 // pred_check_branch
      %208 = sbr.rel (%p206) target = $region24
    $region23: #{unet_forward.12} parent=5 // pred_region
      // Predicated region
      $region25: #{unet_forward.12} parent=23 // pred_check
        %p209 = pneg %p60
      $region26: #{unet_forward.12} parent=23 // pred_check_branch
        %211 = sbr.rel (%p209) target = $region28
      $region27: #{unet_forward.12} parent=23 // pred_region
        %s212 = smul.u32 2, %s18
        %s213 = smul.u32 2, %s20
        %p214 = scmp.lt.s32.totalorder %s17, 3
        %s215 = scalar_select %p214, %s17, 3
        %p216 = scmp.lt.s32.totalorder %s212, 1
        %s217 = scalar_select %p216, %s212, 1
        %p218 = scmp.lt.s32.totalorder %s213, 1
        %s219 = scalar_select %p218, %s213, 1
        %s220 = smul.addr %s217, 2
        %s221 = sadd.s32 %s219, %s220
        %s222 = smul.addr %s215, 4
        %s223 = sadd.s32 %s221, %s222
        %s224 = smul.addr %s223, 4
        %s225 = scalar_lea.vmem %s0, %s224
        %s226 = smul.u32 2, %s18
        %s227 = smul.u32 2, %s20
      $region28: #{unet_forward.12} parent=23 // pred_fallthru
        _
      // Predicated region
      $region29: #{unet_forward.12} parent=23 // pred_check
        %p228 = pneg %p90
      $region30: #{unet_forward.12} parent=23 // pred_check_branch
        %230 = sbr.rel (%p228) target = $region32
      $region31: #{unet_forward.12} parent=23 // pred_region
        %s231 = smul.u32 32, %s20
        %p232 = scmp.lt.s32.totalorder %s17, 3
        %s233 = scalar_select %p232, %s17, 3
        %p234 = scmp.lt.s32.totalorder %s231, 31
        %s235 = scalar_select %p234, %s231, 31
        %p236 = scmp.lt.s32.totalorder %s19, 0
        %s237 = scalar_select %p236, %s19, 0
        %s238 = sadd.s32 %s237, %s235
        %s239 = smul.addr %s233, 32
        %s240 = sadd.s32 %s238, %s239
        %s241 = smul.addr %s240, 4
        %s242 = scalar_lea.vmem %s1, %s241
        %s243 = smul.u32 32, %s20
      $region32: #{unet_forward.12} parent=23 // pred_fallthru
        _
    $region24: #{unet_forward.12} parent=5 // pred_fallthru
      _
    %p244 = scmp.le.s32.totalorder 1, %s10
    %p245 = scmp.lt.s32.totalorder %s10, 5
    %p246 = pnand %p244, %p245
    %p247 = pneg %p246
    // Predicated region
    $region33: #{unet_forward.12} parent=5 // pred_check
      _
    $region34: #{unet_forward.12} parent=5 // pred_check_branch
      %249 = sbr.rel (%p246) target = $region36
    $region35: #{unet_forward.12} parent=5 // pred_region
      %s250 = ssub.s32 %s10, 1
      %s251 = smul.u32 2, %s22
      %s252 = smul.u32 2, %s24
      %p253 = scmp.lt.s32.totalorder %s21, 3
      %s254 = scalar_select %p253, %s21, 3
      %p255 = scmp.lt.s32.totalorder %s251, 1
      %s256 = scalar_select %p255, %s251, 1
      %p257 = scmp.lt.s32.totalorder %s252, 1
      %s258 = scalar_select %p257, %s252, 1
      %s259 = smul.addr %s256, 2
      %s260 = sadd.s32 %s258, %s259
      %s261 = smul.addr %s254, 4
      %s262 = sadd.s32 %s260, %s261
      %s263 = smul.addr %s262, 4
      %s264 = scalar_lea.vmem %s0, %s263
      %p265 = pneg %p66
      %p266 = pneg %p63
      %s267 = smul.u32 32, %s24
      %p268 = scmp.lt.s32.totalorder %s21, 3
      %s269 = scalar_select %p268, %s21, 3
      %p270 = scmp.lt.s32.totalorder %s267, 31
      %s271 = scalar_select %p270, %s267, 31
      %p272 = scmp.lt.s32.totalorder %s23, 0
      %s273 = scalar_select %p272, %s23, 0
      %s274 = sadd.s32 %s273, %s271
      %s275 = smul.addr %s269, 32
      %s276 = sadd.s32 %s274, %s275
      %s277 = smul.addr %s276, 4
      %s278 = scalar_lea.vmem %s1, %s277
      %p279 = pneg %p96
      %p280 = pneg %p93
      %p281 = scmp.lt.s32.totalorder %s23, 0
      %s282 = scalar_select %p281, %s23, 0
      %s283 = scalar_lea.vmem %s2, %s282
      %p284 = pneg %p122
      %p285 = pneg %p119
      %p286 = scmp.lt.s32.totalorder %s23, 0
      %s287 = scalar_select %p286, %s23, 0
      %s288 = scalar_lea.vmem %s3, %s287
      %p289 = pneg %p148
      %p290 = pneg %p145
      %p291 = pneg %p178
      %p292 = pneg %p175
      %s293 = smul.u32 2, %s22
      %p294 = scmp.lt.s32.totalorder %s21, 3
      %s295 = scalar_select %p294, %s21, 3
      %p296 = scmp.lt.s32.totalorder %s293, 1
      %s297 = scalar_select %p296, %s293, 1
      %p298 = scmp.lt.s32.totalorder %s23, 0
      %s299 = scalar_select %p298, %s23, 0
      %s300 = sadd.s32 %s299, %s297
      %s301 = smul.addr %s295, 2
      %s302 = sadd.s32 %s300, %s301
      %s303 = smul.addr %s302, 4
      %s304 = scalar_lea.vmem %s4, %s303
      %s305 = smul.u32 2, %s22
      %s306 = smul.u32 2, %s24
      %p307 = scmp.lt.s32.totalorder %s21, 3
      %s308 = scalar_select %p307, %s21, 3
      %p309 = scmp.lt.s32.totalorder %s305, 1
      %s310 = scalar_select %p309, %s305, 1
      %p311 = scmp.lt.s32.totalorder %s306, 1
      %s312 = scalar_select %p311, %s306, 1
      %s313 = smul.addr %s310, 2
      %s314 = sadd.s32 %s312, %s313
      %s315 = smul.addr %s308, 4
      %s316 = sadd.s32 %s314, %s315
      %s317 = smul.addr %s316, 4
      %s318 = scalar_lea.vmem %s0, %s317
      %s319 = smul.u32 2, %s22
      %s320 = smul.u32 2, %s24
      %s321 = smul.u32 32, %s24
      %p322 = scmp.lt.s32.totalorder %s21, 3
      %s323 = scalar_select %p322, %s21, 3
      %p324 = scmp.lt.s32.totalorder %s321, 31
      %s325 = scalar_select %p324, %s321, 31
      %p326 = scmp.lt.s32.totalorder %s23, 0
      %s327 = scalar_select %p326, %s23, 0
      %s328 = sadd.s32 %s327, %s325
      %s329 = smul.addr %s323, 32
      %s330 = sadd.s32 %s328, %s329
      %s331 = smul.addr %s330, 4
      %s332 = scalar_lea.vmem %s1, %s331
      %s333 = smul.u32 32, %s24
      %p334 = scmp.lt.s32.totalorder %s23, 0
      %s335 = scalar_select %p334, %s23, 0
      %s336 = scalar_lea.vmem %s2, %s335
      %p337 = scmp.lt.s32.totalorder %s23, 0
      %s338 = scalar_select %p337, %s23, 0
      %s339 = scalar_lea.vmem %s3, %s338
      %s340 = smul.u32 2, %s22
      %p341 = scmp.lt.s32.totalorder %s21, 3
      %s342 = scalar_select %p341, %s21, 3
      %p343 = scmp.lt.s32.totalorder %s340, 1
      %s344 = scalar_select %p343, %s340, 1
      %p345 = scmp.lt.s32.totalorder %s23, 0
      %s346 = scalar_select %p345, %s23, 0
      %s347 = sadd.s32 %s346, %s344
      %s348 = smul.addr %s342, 2
      %s349 = sadd.s32 %s347, %s348
      %s350 = smul.addr %s349, 4
      %s351 = scalar_lea.vmem %s4, %s350
      %s352 = smul.u32 2, %s22
      %p353 = scmp.eq.s32.totalorder %s24, 0
      // Predicated region
      $region37: #{unet_forward.12} parent=35 // pred_check
        %p354 = pneg %p353
      $region38: #{unet_forward.12} parent=35 // pred_check_branch
        %356 = sbr.rel (%p354) target = $region40
      $region39: #{unet_forward.12} parent=35 // pred_region
        %357 = vst [vmem:[#allocation2] sm:$0xff] 0.0
        %358 = vst [vmem:[#allocation2 + $0x8] sm:$0xff] 0.0
      $region40: #{unet_forward.12} parent=35 // pred_fallthru
        _
      %v359 = vld [vmem:[#allocation2] sm:$0xff]
      %v360 = vld [vmem:[#allocation2 + $0x8] sm:$0xff]
      %v361 = vld [vmem:[%s318] sm:$0xff]
      %v362 = vld [vmem:[%s318 + $0x8] sm:$0xff]
      %v363 = vld [vmem:[%s332] sm:$0xf]
      %v364 = vld [vmem:[%s332 + $0x4] sm:$0xf]
      %v365 = vld [vmem:[%s332 + $0x8] sm:$0xf]
      %v366 = vld [vmem:[%s332 + $0xc] sm:$0xf]
      %v367 = vld [vmem:[%s332 + $0x10] sm:$0xf]
      %v368 = vld [vmem:[%s332 + $0x14] sm:$0xf]
      %v369 = vld [vmem:[%s332 + $0x18] sm:$0xf]
      %v370 = vld [vmem:[%s332 + $0x1c] sm:$0xf]
      %v371 = vld [vmem:[%s332 + $0x20] sm:$0xf]
      %v372 = vld [vmem:[%s332 + $0x24] sm:$0xf]
      %v373 = vld [vmem:[%s332 + $0x28] sm:$0xf]
      %v374 = vld [vmem:[%s332 + $0x2c] sm:$0xf]
      %v375 = vld [vmem:[%s332 + $0x30] sm:$0xf]
      %v376 = vld [vmem:[%s332 + $0x34] sm:$0xf]
      %v377 = vld [vmem:[%s332 + $0x38] sm:$0xf]
      %v378 = vld [vmem:[%s332 + $0x3c] sm:$0xf]
      %v379 = vld [vmem:[%s332 + $0x40] sm:$0xf]
      %v380 = vld [vmem:[%s332 + $0x44] sm:$0xf]
      %v381 = vld [vmem:[%s332 + $0x48] sm:$0xf]
      %v382 = vld [vmem:[%s332 + $0x4c] sm:$0xf]
      %v383 = vld [vmem:[%s332 + $0x50] sm:$0xf]
      %v384 = vld [vmem:[%s332 + $0x54] sm:$0xf]
      %v385 = vld [vmem:[%s332 + $0x58] sm:$0xf]
      %v386 = vld [vmem:[%s332 + $0x5c] sm:$0xf]
      %v387 = vld [vmem:[%s332 + $0x60] sm:$0xf]
      %v388 = vld [vmem:[%s332 + $0x64] sm:$0xf]
      %v389 = vld [vmem:[%s332 + $0x68] sm:$0xf]
      %v390 = vld [vmem:[%s332 + $0x6c] sm:$0xf]
      %v391 = vld [vmem:[%s332 + $0x70] sm:$0xf]
      %v392 = vld [vmem:[%s332 + $0x74] sm:$0xf]
      %v393 = vld [vmem:[%s332 + $0x78] sm:$0xf]
      %v394 = vld [vmem:[%s332 + $0x7c] sm:$0xf]
      %v397 = vunpack.c.l.b16 %v361
      %v398 = vunpack.c.h.b16 %v361
      %v399 = vunpack.c.l.b16 %v362
      %v400 = vunpack.c.h.b16 %v362
      %v401 = vpack.c.b16 %v399, %v397
      %v402 = vpack.c.b16 %v400, %v398
      %v437 = vunpack.c.l.b16 %v363
      %v438 = vunpack.c.l.b16 %v364
      %v439 = vunpack.c.l.b16 %v365
      %v440 = vunpack.c.l.b16 %v366
      %v441 = vunpack.c.l.b16 %v367
      %v442 = vunpack.c.l.b16 %v368
      %v443 = vunpack.c.l.b16 %v369
      %v444 = vunpack.c.l.b16 %v370
      %v445 = vunpack.c.l.b16 %v371
      %v446 = vunpack.c.l.b16 %v372
      %v447 = vunpack.c.l.b16 %v373
      %v448 = vunpack.c.l.b16 %v374
      %v449 = vunpack.c.l.b16 %v375
      %v450 = vunpack.c.l.b16 %v376
      %v451 = vunpack.c.l.b16 %v377
      %v452 = vunpack.c.l.b16 %v378
      %v453 = vunpack.c.l.b16 %v379
      %v454 = vunpack.c.l.b16 %v380
      %v455 = vunpack.c.l.b16 %v381
      %v456 = vunpack.c.l.b16 %v382
      %v457 = vunpack.c.l.b16 %v383
      %v458 = vunpack.c.l.b16 %v384
      %v459 = vunpack.c.l.b16 %v385
      %v460 = vunpack.c.l.b16 %v386
      %v461 = vunpack.c.l.b16 %v387
      %v462 = vunpack.c.l.b16 %v388
      %v463 = vunpack.c.l.b16 %v389
      %v464 = vunpack.c.l.b16 %v390
      %v465 = vunpack.c.l.b16 %v391
      %v466 = vunpack.c.l.b16 %v392
      %v467 = vunpack.c.l.b16 %v393
      %v468 = vunpack.c.l.b16 %v394
      %v469 = vpack.c.b16 %v438, %v437
      %v470 = vpack.c.b16 %v440, %v439
      %v471 = vpack.c.b16 %v442, %v441
      %v472 = vpack.c.b16 %v444, %v443
      %v473 = vpack.c.b16 %v446, %v445
      %v474 = vpack.c.b16 %v448, %v447
      %v475 = vpack.c.b16 %v450, %v449
      %v476 = vpack.c.b16 %v452, %v451
      %v477 = vpack.c.b16 %v454, %v453
      %v478 = vpack.c.b16 %v456, %v455
      %v479 = vpack.c.b16 %v458, %v457
      %v480 = vpack.c.b16 %v460, %v459
      %v481 = vpack.c.b16 %v462, %v461
      %v482 = vpack.c.b16 %v464, %v463
      %v483 = vpack.c.b16 %v466, %v465
      %v484 = vpack.c.b16 %v468, %v467
      %501 = vmatpush.bf16.msra.mxu0 %v476
      %502 = vmatpush.bf16.msra.mxu0 %v475
      %503 = vmatpush.bf16.msra.mxu0 %v474
      %504 = vmatpush.bf16.msra.mxu0 %v473
      %505 = vmatpush.bf16.msra.mxu0 %v472
      %506 = vmatpush.bf16.msra.mxu0 %v471
      %507 = vmatpush.bf16.msra.mxu0 %v470
      %508 = vmatpush.bf16.msra.mxu0 %v469
      %509 = vmatmul.bf16.gmra.mxu0 %v401
      %v510 = vpop.f32.mrf.mxu0
      %v511 = vadd.f32 0.0, %v510
      %v512 = vpop.f32.mrf.mxu0
      %v513 = vadd.f32 0.0, %v512
      %514 = vdwg.mxu0
      %515 = vmatpush.bf16.msra.mxu0 %v484
      %516 = vmatpush.bf16.msra.mxu0 %v483
      %517 = vmatpush.bf16.msra.mxu0 %v482
      %518 = vmatpush.bf16.msra.mxu0 %v481
      %519 = vmatpush.bf16.msra.mxu0 %v480
      %520 = vmatpush.bf16.msra.mxu0 %v479
      %521 = vmatpush.bf16.msra.mxu0 %v478
      %522 = vmatpush.bf16.msra.mxu0 %v477
      %523 = vmatmul.bf16.gmra.mxu0 %v402
      %v524 = vpop.f32.mrf.mxu0
      %v525 = vadd.f32 %v511, %v524
      %v526 = vpop.f32.mrf.mxu0
      %v527 = vadd.f32 %v513, %v526
      %528 = vdwg.mxu0
      %v529 = vadd.f32 %v359, %v525
      %v530 = vadd.f32 %v360, %v527
      %531 = vst [vmem:[#allocation2] sm:$0xff] %v529
      %532 = vst [vmem:[#allocation2 + $0x8] sm:$0xff] %v530
      // Predicated region
      $region41: #{unet_forward.12} parent=35 // pred_check
        %p533 = pneg %p353
      $region42: #{unet_forward.12} parent=35 // pred_check_branch
        %535 = sbr.rel (%p533) target = $region44
      $region43: #{unet_forward.12} parent=35 // pred_region
        %v536 = vld [vmem:[#allocation2] sm:$0xff]
        %v537 = vld [vmem:[#allocation2 + $0x8] sm:$0xff]
        %v538 = vld [vmem:[%s336] sm:$0x1]
        %v540 = vperm.slane %v538, 0
        %v542 = vmul.f32 %v536, %v540
        %v543 = vmul.f32 %v537, %v540
        %v544 = vld [vmem:[%s339] sm:$0x1]
        %v546 = vperm.slane %v544, 0
        %v548 = vadd.f32 %v542, %v546
        %v549 = vadd.f32 %v543, %v546
        %v550 = vpack.c.bf16 %v548, %v548
        %v551 = vpack.c.bf16 %v549, %v549
        %552 = vst [vmem:[%s351] sm:$0xf] %v550
        %553 = vst [vmem:[%s351 + $0x4] sm:$0xf] %v551
      $region44: #{unet_forward.12} parent=35 // pred_fallthru
        _
      %s554 = smul.u32 2, %s22
      %p555 = scmp.lt.s32.totalorder %s21, 3
      %s556 = scalar_select %p555, %s21, 3
      %p557 = scmp.lt.s32.totalorder %s554, 1
      %s558 = scalar_select %p557, %s554, 1
      %p559 = scmp.lt.s32.totalorder %s23, 0
      %s560 = scalar_select %p559, %s23, 0
      %s561 = sadd.s32 %s560, %s558
      %s562 = smul.addr %s556, 2
      %s563 = sadd.s32 %s561, %s562
      %s564 = smul.addr %s563, 4
      %s565 = scalar_lea.vmem %s4, %s564
      // Predicated region
      $region45: #{unet_forward.12} parent=35 // pred_check
        %p566 = pneg %p175
      $region46: #{unet_forward.12} parent=35 // pred_check_branch
        %568 = sbr.rel (%p566) target = $region48
      $region47: #{unet_forward.12} parent=35 // pred_region
        %s569 = smul.u32 2, %s22
      $region48: #{unet_forward.12} parent=35 // pred_fallthru
        _
    $region36: #{unet_forward.12} parent=5 // pred_fallthru
      _
    %p570 = scmp.le.s32.totalorder 2, %s10
    // Predicated region
    $region49: #{unet_forward.12} parent=5 // pred_check
      %p571 = pneg %p570
    $region50: #{unet_forward.12} parent=5 // pred_check_branch
      %573 = sbr.rel (%p571) target = $region52
    $region51: #{unet_forward.12} parent=5 // pred_region
      %s574 = ssub.s32 %s10, 2
      // Predicated region
      $region53: #{unet_forward.12} parent=51 // pred_check
        %p575 = pneg %p181
      $region54: #{unet_forward.12} parent=51 // pred_check_branch
        %577 = sbr.rel (%p575) target = $region56
      $region55: #{unet_forward.12} parent=51 // pred_region
        %s578 = smul.u32 2, %s26
        %p579 = scmp.lt.s32.totalorder %s25, 3
        %s580 = scalar_select %p579, %s25, 3
        %p581 = scmp.lt.s32.totalorder %s578, 1
        %s582 = scalar_select %p581, %s578, 1
        %p583 = scmp.lt.s32.totalorder %s27, 0
        %s584 = scalar_select %p583, %s27, 0
        %s585 = sadd.s32 %s584, %s582
        %s586 = smul.addr %s580, 2
        %s587 = sadd.s32 %s585, %s586
        %s588 = smul.addr %s587, 4
        %s589 = scalar_lea.vmem %s4, %s588
      $region56: #{unet_forward.12} parent=51 // pred_fallthru
        _
    $region52: #{unet_forward.12} parent=5 // pred_fallthru
      _
  $region6: #{unet_forward.12} parent=0 // loop_footer
    %s14 = sadd.s32 1, %s10
  $region7: #{unet_forward.12} parent=0 // loop_footer_branch
    %9 = sbr.rel target = $region3
  $region8: #{unet_forward.12} parent=0 // loop_exit
    _

// kernel: unet_forward.11
$region0: #{unet_forward.11}
  #allocation0 [shape = 'u32[]', space=smem, size = 0x4, offset = 0x4, fixed_abs, tag = 'smem constant byte address 0x4 - core index']
  #allocation1 [shape = 'u32[72,128]{1,0:T(1,128)}', space=vmem, size = 0x9000, scoped, tag = 'internal scratch']
  #allocation2 [shape = 'f32[16,128]{1,0:T(8,128)}', space=vmem, size = 0x2000, scoped, tag = 'scratch operand']
  %s0 = inlined_call_operand.vmem [shape: bf16[1,16,512], index: 0, kind: input, shape index: {}]
  %s1 = inlined_call_operand.vmem [shape: bf16[1,512,128], index: 1, kind: input, shape index: {}]
  %s2 = inlined_call_operand.vmem [shape: f32[1,128], index: 2, kind: input, shape index: {}]
  %s3 = inlined_call_operand.vmem [shape: f32[1,128], index: 3, kind: input, shape index: {}]
  %s4 = inlined_call_operand.vmem [shape: bf16[1,16,128], index: 4, kind: output, shape index: {}]
  %s5 = sld [smem:[#allocation0]]
  $region34: #{unet_forward.11} parent=0
    _
  %s7 = ssub.s32 1, %s5
  %s8 = scalar_select 0, %s7, %s5
  // Predicated region
  $region2: #{unet_forward.11} parent=0 // pred_check
    _
  $region3: #{unet_forward.11} parent=0 // pred_check_branch
    %10 = sbr.rel (0) target = $region5
  $region4: #{unet_forward.11} parent=0 // pred_region
    _
  $region5: #{unet_forward.11} parent=0 // pred_fallthru
    _
  // Predicated region
  $region6: #{unet_forward.11} parent=0 // pred_check
    _
  $region7: #{unet_forward.11} parent=0 // pred_check_branch
    %12 = sbr.rel (0) target = $region9
  $region8: #{unet_forward.11} parent=0 // pred_region
    _
  $region9: #{unet_forward.11} parent=0 // pred_fallthru
    _
  // Predicated region
  $region10: #{unet_forward.11} parent=0 // pred_check
    _
  $region11: #{unet_forward.11} parent=0 // pred_check_branch
    %14 = sbr.rel (0) target = $region13
  $region12: #{unet_forward.11} parent=0 // pred_region
    _
  $region13: #{unet_forward.11} parent=0 // pred_fallthru
    _
  // Predicated region
  $region14: #{unet_forward.11} parent=0 // pred_check
    _
  $region15: #{unet_forward.11} parent=0 // pred_check_branch
    %16 = sbr.rel (0) target = $region17
  $region16: #{unet_forward.11} parent=0 // pred_region
    _
  $region17: #{unet_forward.11} parent=0 // pred_fallthru
    _
  %p17 = scmp.eq.s32.totalorder 0, 0
  // Predicated region
  $region18: #{unet_forward.11} parent=0 // pred_check
    %p18 = pneg %p17
  $region19: #{unet_forward.11} parent=0 // pred_check_branch
    %20 = sbr.rel (%p18) target = $region21
  $region20: #{unet_forward.11} parent=0 // pred_region
    %21 = vst [vmem:[#allocation2] sm:$0xff] 0.0
    %22 = vst [vmem:[#allocation2 + $0x8] sm:$0xff] 0.0
  $region21: #{unet_forward.11} parent=0 // pred_fallthru
    _
  %v23 = vld [vmem:[#allocation2] sm:$0xff]
  %v24 = vld [vmem:[#allocation2 + $0x8] sm:$0xff]
  %v25 = vld [vmem:[%s0] sm:$0xff]
  %v26 = vld [vmem:[%s0 + $0x8] sm:$0xff]
  %v27 = vld [vmem:[%s0 + $0x10] sm:$0xff]
  %v28 = vld [vmem:[%s0 + $0x18] sm:$0xff]
  %v29 = vld [vmem:[%s1] sm:$0xf]
  %v30 = vld [vmem:[%s1 + $0x4] sm:$0xf]
  %v31 = vld [vmem:[%s1 + $0x8] sm:$0xf]
  %v32 = vld [vmem:[%s1 + $0xc] sm:$0xf]
  %v33 = vld [vmem:[%s1 + $0x10] sm:$0xf]
  %v34 = vld [vmem:[%s1 + $0x14] sm:$0xf]
  %v35 = vld [vmem:[%s1 + $0x18] sm:$0xf]
  %v36 = vld [vmem:[%s1 + $0x1c] sm:$0xf]
  %v37 = vld [vmem:[%s1 + $0x20] sm:$0xf]
  %v38 = vld [vmem:[%s1 + $0x24] sm:$0xf]
  %v39 = vld [vmem:[%s1 + $0x28] sm:$0xf]
  %v40 = vld [vmem:[%s1 + $0x2c] sm:$0xf]
  %v41 = vld [vmem:[%s1 + $0x30] sm:$0xf]
  %v42 = vld [vmem:[%s1 + $0x34] sm:$0xf]
  %v43 = vld [vmem:[%s1 + $0x38] sm:$0xf]
  %v44 = vld [vmem:[%s1 + $0x3c] sm:$0xf]
  %v45 = vld [vmem:[%s1 + $0x40] sm:$0xf]
  %v46 = vld [vmem:[%s1 + $0x44] sm:$0xf]
  %v47 = vld [vmem:[%s1 + $0x48] sm:$0xf]
  %v48 = vld [vmem:[%s1 + $0x4c] sm:$0xf]
  %v49 = vld [vmem:[%s1 + $0x50] sm:$0xf]
  %v50 = vld [vmem:[%s1 + $0x54] sm:$0xf]
  %v51 = vld [vmem:[%s1 + $0x58] sm:$0xf]
  %v52 = vld [vmem:[%s1 + $0x5c] sm:$0xf]
  %v53 = vld [vmem:[%s1 + $0x60] sm:$0xf]
  %v54 = vld [vmem:[%s1 + $0x64] sm:$0xf]
  %v55 = vld [vmem:[%s1 + $0x68] sm:$0xf]
  %v56 = vld [vmem:[%s1 + $0x6c] sm:$0xf]
  %v57 = vld [vmem:[%s1 + $0x70] sm:$0xf]
  %v58 = vld [vmem:[%s1 + $0x74] sm:$0xf]
  %v59 = vld [vmem:[%s1 + $0x78] sm:$0xf]
  %v60 = vld [vmem:[%s1 + $0x7c] sm:$0xf]
  %v61 = vld [vmem:[%s1 + $0x80] sm:$0xf]
  %v62 = vld [vmem:[%s1 + $0x84] sm:$0xf]
  %v63 = vld [vmem:[%s1 + $0x88] sm:$0xf]
  %v64 = vld [vmem:[%s1 + $0x8c] sm:$0xf]
  %v65 = vld [vmem:[%s1 + $0x90] sm:$0xf]
  %v66 = vld [vmem:[%s1 + $0x94] sm:$0xf]
  %v67 = vld [vmem:[%s1 + $0x98] sm:$0xf]
  %v68 = vld [vmem:[%s1 + $0x9c] sm:$0xf]
  %v69 = vld [vmem:[%s1 + $0xa0] sm:$0xf]
  %v70 = vld [vmem:[%s1 + $0xa4] sm:$0xf]
  %v71 = vld [vmem:[%s1 + $0xa8] sm:$0xf]
  %v72 = vld [vmem:[%s1 + $0xac] sm:$0xf]
  %v73 = vld [vmem:[%s1 + $0xb0] sm:$0xf]
  %v74 = vld [vmem:[%s1 + $0xb4] sm:$0xf]
  %v75 = vld [vmem:[%s1 + $0xb8] sm:$0xf]
  %v76 = vld [vmem:[%s1 + $0xbc] sm:$0xf]
  %v77 = vld [vmem:[%s1 + $0xc0] sm:$0xf]
  %v78 = vld [vmem:[%s1 + $0xc4] sm:$0xf]
  %v79 = vld [vmem:[%s1 + $0xc8] sm:$0xf]
  %v80 = vld [vmem:[%s1 + $0xcc] sm:$0xf]
  %v81 = vld [vmem:[%s1 + $0xd0] sm:$0xf]
  %v82 = vld [vmem:[%s1 + $0xd4] sm:$0xf]
  %v83 = vld [vmem:[%s1 + $0xd8] sm:$0xf]
  %v84 = vld [vmem:[%s1 + $0xdc] sm:$0xf]
  %v85 = vld [vmem:[%s1 + $0xe0] sm:$0xf]
  %v86 = vld [vmem:[%s1 + $0xe4] sm:$0xf]
  %v87 = vld [vmem:[%s1 + $0xe8] sm:$0xf]
  %v88 = vld [vmem:[%s1 + $0xec] sm:$0xf]
  %v89 = vld [vmem:[%s1 + $0xf0] sm:$0xf]
  %v90 = vld [vmem:[%s1 + $0xf4] sm:$0xf]
  %v91 = vld [vmem:[%s1 + $0xf8] sm:$0xf]
  %v92 = vld [vmem:[%s1 + $0xfc] sm:$0xf]
  %v97 = vunpack.c.l.b16 %v25
  %v98 = vunpack.c.h.b16 %v25
  %v99 = vunpack.c.l.b16 %v26
  %v100 = vunpack.c.h.b16 %v26
  %v101 = vunpack.c.l.b16 %v27
  %v102 = vunpack.c.h.b16 %v27
  %v103 = vunpack.c.l.b16 %v28
  %v104 = vunpack.c.h.b16 %v28
  %v105 = vpack.c.b16 %v101, %v97
  %v106 = vpack.c.b16 %v102, %v98
  %v107 = vpack.c.b16 %v103, %v99
  %v108 = vpack.c.b16 %v104, %v100
  %v177 = vunpack.c.l.b16 %v29
  %v178 = vunpack.c.l.b16 %v30
  %v179 = vunpack.c.l.b16 %v31
  %v180 = vunpack.c.l.b16 %v32
  %v181 = vunpack.c.l.b16 %v33
  %v182 = vunpack.c.l.b16 %v34
  %v183 = vunpack.c.l.b16 %v35
  %v184 = vunpack.c.l.b16 %v36
  %v185 = vunpack.c.l.b16 %v37
  %v186 = vunpack.c.l.b16 %v38
  %v187 = vunpack.c.l.b16 %v39
  %v188 = vunpack.c.l.b16 %v40
  %v189 = vunpack.c.l.b16 %v41
  %v190 = vunpack.c.l.b16 %v42
  %v191 = vunpack.c.l.b16 %v43
  %v192 = vunpack.c.l.b16 %v44
  %v193 = vunpack.c.l.b16 %v45
  %v194 = vunpack.c.l.b16 %v46
  %v195 = vunpack.c.l.b16 %v47
  %v196 = vunpack.c.l.b16 %v48
  %v197 = vunpack.c.l.b16 %v49
  %v198 = vunpack.c.l.b16 %v50
  %v199 = vunpack.c.l.b16 %v51
  %v200 = vunpack.c.l.b16 %v52
  %v201 = vunpack.c.l.b16 %v53
  %v202 = vunpack.c.l.b16 %v54
  %v203 = vunpack.c.l.b16 %v55
  %v204 = vunpack.c.l.b16 %v56
  %v205 = vunpack.c.l.b16 %v57
  %v206 = vunpack.c.l.b16 %v58
  %v207 = vunpack.c.l.b16 %v59
  %v208 = vunpack.c.l.b16 %v60
  %v209 = vunpack.c.l.b16 %v61
  %v210 = vunpack.c.l.b16 %v62
  %v211 = vunpack.c.l.b16 %v63
  %v212 = vunpack.c.l.b16 %v64
  %v213 = vunpack.c.l.b16 %v65
  %v214 = vunpack.c.l.b16 %v66
  %v215 = vunpack.c.l.b16 %v67
  %v216 = vunpack.c.l.b16 %v68
  %v217 = vunpack.c.l.b16 %v69
  %v218 = vunpack.c.l.b16 %v70
  %v219 = vunpack.c.l.b16 %v71
  %v220 = vunpack.c.l.b16 %v72
  %v221 = vunpack.c.l.b16 %v73
  %v222 = vunpack.c.l.b16 %v74
  %v223 = vunpack.c.l.b16 %v75
  %v224 = vunpack.c.l.b16 %v76
  %v225 = vunpack.c.l.b16 %v77
  %v226 = vunpack.c.l.b16 %v78
  %v227 = vunpack.c.l.b16 %v79
  %v228 = vunpack.c.l.b16 %v80
  %v229 = vunpack.c.l.b16 %v81
  %v230 = vunpack.c.l.b16 %v82
  %v231 = vunpack.c.l.b16 %v83
  %v232 = vunpack.c.l.b16 %v84
  %v233 = vunpack.c.l.b16 %v85
  %v234 = vunpack.c.l.b16 %v86
  %v235 = vunpack.c.l.b16 %v87
  %v236 = vunpack.c.l.b16 %v88
  %v237 = vunpack.c.l.b16 %v89
  %v238 = vunpack.c.l.b16 %v90
  %v239 = vunpack.c.l.b16 %v91
  %v240 = vunpack.c.l.b16 %v92
  %v241 = vpack.c.b16 %v178, %v177
  %v242 = vpack.c.b16 %v180, %v179
  %v243 = vpack.c.b16 %v182, %v181
  %v244 = vpack.c.b16 %v184, %v183
  %v245 = vpack.c.b16 %v186, %v185
  %v246 = vpack.c.b16 %v188, %v187
  %v247 = vpack.c.b16 %v190, %v189
  %v248 = vpack.c.b16 %v192, %v191
  %v249 = vpack.c.b16 %v194, %v193
  %v250 = vpack.c.b16 %v196, %v195
  %v251 = vpack.c.b16 %v198, %v197
  %v252 = vpack.c.b16 %v200, %v199
  %v253 = vpack.c.b16 %v202, %v201
  %v254 = vpack.c.b16 %v204, %v203
  %v255 = vpack.c.b16 %v206, %v205
  %v256 = vpack.c.b16 %v208, %v207
  %v257 = vpack.c.b16 %v210, %v209
  %v258 = vpack.c.b16 %v212, %v211
  %v259 = vpack.c.b16 %v214, %v213
  %v260 = vpack.c.b16 %v216, %v215
  %v261 = vpack.c.b16 %v218, %v217
  %v262 = vpack.c.b16 %v220, %v219
  %v263 = vpack.c.b16 %v222, %v221
  %v264 = vpack.c.b16 %v224, %v223
  %v265 = vpack.c.b16 %v226, %v225
  %v266 = vpack.c.b16 %v228, %v227
  %v267 = vpack.c.b16 %v230, %v229
  %v268 = vpack.c.b16 %v232, %v231
  %v269 = vpack.c.b16 %v234, %v233
  %v270 = vpack.c.b16 %v236, %v235
  %v271 = vpack.c.b16 %v238, %v237
  %v272 = vpack.c.b16 %v240, %v239
  %305 = vmatpush.bf16.msra.mxu0 %v248
  %306 = vmatpush.bf16.msra.mxu0 %v247
  %307 = vmatpush.bf16.msra.mxu0 %v246
  %308 = vmatpush.bf16.msra.mxu0 %v245
  %309 = vmatpush.bf16.msra.mxu0 %v244
  %310 = vmatpush.bf16.msra.mxu0 %v243
  %311 = vmatpush.bf16.msra.mxu0 %v242
  %312 = vmatpush.bf16.msra.mxu0 %v241
  %313 = vmatmul.bf16.gmra.mxu0 %v105
  %v314 = vpop.f32.mrf.mxu0
  %v315 = vadd.f32 0.0, %v314
  %v316 = vpop.f32.mrf.mxu0
  %v317 = vadd.f32 0.0, %v316
  %318 = vdwg.mxu0
  %319 = vmatpush.bf16.msra.mxu0 %v256
  %320 = vmatpush.bf16.msra.mxu0 %v255
  %321 = vmatpush.bf16.msra.mxu0 %v254
  %322 = vmatpush.bf16.msra.mxu0 %v253
  %323 = vmatpush.bf16.msra.mxu0 %v252
  %324 = vmatpush.bf16.msra.mxu0 %v251
  %325 = vmatpush.bf16.msra.mxu0 %v250
  %326 = vmatpush.bf16.msra.mxu0 %v249
  %327 = vmatmul.bf16.gmra.mxu0 %v106
  %v328 = vpop.f32.mrf.mxu0
  %v329 = vadd.f32 %v315, %v328
  %v330 = vpop.f32.mrf.mxu0
  %v331 = vadd.f32 %v317, %v330
  %332 = vdwg.mxu0
  %333 = vmatpush.bf16.msra.mxu0 %v264
  %334 = vmatpush.bf16.msra.mxu0 %v263
  %335 = vmatpush.bf16.msra.mxu0 %v262
  %336 = vmatpush.bf16.msra.mxu0 %v261
  %337 = vmatpush.bf16.msra.mxu0 %v260
  %338 = vmatpush.bf16.msra.mxu0 %v259
  %339 = vmatpush.bf16.msra.mxu0 %v258
  %340 = vmatpush.bf16.msra.mxu0 %v257
  %341 = vmatmul.bf16.gmra.mxu0 %v107
  %v342 = vpop.f32.mrf.mxu0
  %v343 = vadd.f32 %v329, %v342
  %v344 = vpop.f32.mrf.mxu0
  %v345 = vadd.f32 %v331, %v344
  %346 = vdwg.mxu0
  %347 = vmatpush.bf16.msra.mxu0 %v272
  %348 = vmatpush.bf16.msra.mxu0 %v271
  %349 = vmatpush.bf16.msra.mxu0 %v270
  %350 = vmatpush.bf16.msra.mxu0 %v269
  %351 = vmatpush.bf16.msra.mxu0 %v268
  %352 = vmatpush.bf16.msra.mxu0 %v267
  %353 = vmatpush.bf16.msra.mxu0 %v266
  %354 = vmatpush.bf16.msra.mxu0 %v265
  %355 = vmatmul.bf16.gmra.mxu0 %v108
  %v356 = vpop.f32.mrf.mxu0
  %v357 = vadd.f32 %v343, %v356
  %v358 = vpop.f32.mrf.mxu0
  %v359 = vadd.f32 %v345, %v358
  %360 = vdwg.mxu0
  %v361 = vadd.f32 %v23, %v357
  %v362 = vadd.f32 %v24, %v359
  %363 = vst [vmem:[#allocation2] sm:$0xff] %v361
  %364 = vst [vmem:[#allocation2 + $0x8] sm:$0xff] %v362
  // Predicated region
  $region22: #{unet_forward.11} parent=0 // pred_check
    %p365 = pneg %p17
  $region23: #{unet_forward.11} parent=0 // pred_check_branch
    %367 = sbr.rel (%p365) target = $region25
  $region24: #{unet_forward.11} parent=0 // pred_region
    %v368 = vld [vmem:[#allocation2] sm:$0xff]
    %v369 = vld [vmem:[#allocation2 + $0x8] sm:$0xff]
    %v370 = vld [vmem:[%s2] sm:$0x1]
    %v372 = vperm.slane %v370, 0
    %v374 = vmul.f32 %v368, %v372
    %v375 = vmul.f32 %v369, %v372
    %v376 = vld [vmem:[%s3] sm:$0x1]
    %v378 = vperm.slane %v376, 0
    %v380 = vadd.f32 %v374, %v378
    %v381 = vadd.f32 %v375, %v378
    %v382 = vpack.c.bf16 %v380, %v380
    %v383 = vpack.c.bf16 %v381, %v381
    %384 = vst [vmem:[%s4] sm:$0xf] %v382
    %385 = vst [vmem:[%s4 + $0x4] sm:$0xf] %v383
  $region25: #{unet_forward.11} parent=0 // pred_fallthru
    _
  // Predicated region
  $region26: #{unet_forward.11} parent=0 // pred_check
    _
  $region27: #{unet_forward.11} parent=0 // pred_check_branch
    %387 = sbr.rel (0) target = $region29
  $region28: #{unet_forward.11} parent=0 // pred_region
    _
  $region29: #{unet_forward.11} parent=0 // pred_fallthru
    _
  // Predicated region
  $region30: #{unet_forward.11} parent=0 // pred_check
    _
  $region31: #{unet_forward.11} parent=0 // pred_check_branch
    %389 = sbr.rel (0) target = $region33
  $region32: #{unet_forward.11} parent=0 // pred_region
    _
  $region33: #{unet_forward.11} parent=0 // pred_fallthru
    _

// kernel: unet_forward.14
$region0: #{unet_forward.14}
  #allocation0 [shape = 'u32[]', space=smem, size = 0x4, offset = 0x4, fixed_abs, tag = 'smem constant byte address 0x4 - core index']
  #allocation1 [shape = 'u32[72,128]{1,0:T(1,128)}', space=vmem, size = 0x9000, scoped, tag = 'internal scratch']
  #allocation2 [shape = 'f32[32,128]{1,0:T(8,128)}', space=vmem, size = 0x4000, scoped, tag = 'scratch operand']
  %s0 = inlined_call_operand.vmem [shape: bf16[4,32,128], index: 0, kind: input, shape index: {}]
  %s1 = inlined_call_operand.vmem [shape: bf16[4,128,128], index: 1, kind: input, shape index: {}]
  %s2 = inlined_call_operand.vmem [shape: f32[1,128], index: 2, kind: input, shape index: {}]
  %s3 = inlined_call_operand.vmem [shape: f32[1,128], index: 3, kind: input, shape index: {}]
  %s4 = inlined_call_operand.vmem [shape: bf16[4,32,128], index: 4, kind: output, shape index: {}]
  %s5 = sld [smem:[#allocation0]]
  $region57: #{unet_forward.14} parent=0
    _
  %s7 = ssub.s32 1, %s5
  %s8 = scalar_select 0, %s7, %s5
  loop: start=0, step=1, limit=6
  $region2: #{unet_forward.14} parent=0 // loop_pre_header
    _
  $region3: #{unet_forward.14} parent=0 // loop_header
    %s10 = sphi 0, %s14
    %p11 = scmp.ge.s32.totalorder %s10, 6
    %s17 = sphi 0, %s43
    %s18 = sphi 0, %s39
    %s19 = sphi 0, %s35
    %s20 = sphi 0, %s31
    %s21 = sphi 0, %s17
    %s22 = sphi 0, %s18
    %s23 = sphi 0, %s19
    %s24 = sphi 0, %s20
    %s25 = sphi 0, %s21
    %s26 = sphi 0, %s22
    %s27 = sphi 0, %s23
    %s28 = sphi 0, %s24
    %s50 = sphi 0, %s52
    %s53 = sphi 0, %s50
    %s54 = sphi 0, %s53
    %s70 = sphi 0, %s54
    %s80 = sphi 0, %s82
    %s83 = sphi 0, %s80
    %s84 = sphi 0, %s83
    %s100 = sphi 0, %s84
    %s106 = sphi 0, %s108
    %s109 = sphi 0, %s106
    %s110 = sphi 0, %s109
    %s126 = sphi 0, %s110
    %s132 = sphi 0, %s134
    %s135 = sphi 0, %s132
    %s136 = sphi 0, %s135
    %s152 = sphi 0, %s136
    %s162 = sphi 0, %s164
    %s165 = sphi 0, %s162
    %s166 = sphi 0, %s165
    %s182 = sphi 0, %s166
  $region4: #{unet_forward.14} parent=0 // loop_header_branch
    %13 = sbr.rel (%p11) target = $region8
  $region5: #{unet_forward.14} parent=0 // loop_body
    %s15 = ssub.s32 %s10, 1
    %s16 = ssub.s32 %s10, 2
    %s29 = sadd.s32 1, %s20
    %p30 = scmp.ge.s32.totalorder %s29, 1
    %s31 = scalar_select %p30, 0, %s29
    %s32 = sadd.s32 1, %s19
    %s33 = scalar_select %p30, %s32, %s19
    %p34 = scmp.ge.s32.totalorder %s33, 1
    %s35 = scalar_select %p34, 0, %s33
    %s36 = sadd.s32 1, %s18
    %s37 = scalar_select %p34, %s36, %s18
    %p38 = scmp.ge.s32.totalorder %s37, 1
    %s39 = scalar_select %p38, 0, %s37
    %s40 = sadd.s32 1, %s17
    %s41 = scalar_select %p38, %s40, %s17
    %p42 = scmp.ge.s32.totalorder %s41, 4
    %s43 = scalar_select %p42, 0, %s41
    %s44 = ssub.s32 %s17, %s43
    %s45 = ssub.s32 %s18, %s39
    %s46 = sor.u32 %s44, %s45
    %s47 = ssub.s32 %s20, %s31
    %s48 = sor.u32 %s46, %s47
    %p49 = scmp.eq.s32.totalorder %s48, 0
    %s51 = sadd.s32 %s50, 1
    %s52 = scalar_select %p49, %s50, %s51
    %p55 = pneg %p49
    %p56 = scmp.eq.s32.totalorder %s10, 3
    %p57 = por %p55, %p56
    %p58 = scmp.ne.s32.totalorder %s50, %s53
    %p59 = scmp.eq.s32.totalorder %s10, 0
    %p60 = por %p58, %p59
    %p61 = scmp.ne.s32.totalorder %s50, %s53
    %p62 = scmp.eq.s32.totalorder %s15, 3
    %p63 = por %p61, %p62
    %p64 = scmp.ne.s32.totalorder %s53, %s54
    %p65 = scmp.eq.s32.totalorder %s15, 0
    %p66 = por %p64, %p65
    %p67 = scmp.ne.s32.totalorder %s53, %s54
    %p68 = scmp.eq.s32.totalorder %s16, 3
    %p69 = por %p67, %p68
    %p71 = scmp.ne.s32.totalorder %s54, %s70
    %p72 = scmp.eq.s32.totalorder %s16, 0
    %p73 = por %p71, %p72
    %s74 = ssub.s32 %s17, %s43
    %s75 = ssub.s32 %s20, %s31
    %s76 = sor.u32 %s74, %s75
    %s77 = ssub.s32 %s19, %s35
    %s78 = sor.u32 %s76, %s77
    %p79 = scmp.eq.s32.totalorder %s78, 0
    %s81 = sadd.s32 %s80, 1
    %s82 = scalar_select %p79, %s80, %s81
    %p85 = pneg %p79
    %p86 = scmp.eq.s32.totalorder %s10, 3
    %p87 = por %p85, %p86
    %p88 = scmp.ne.s32.totalorder %s80, %s83
    %p89 = scmp.eq.s32.totalorder %s10, 0
    %p90 = por %p88, %p89
    %p91 = scmp.ne.s32.totalorder %s80, %s83
    %p92 = scmp.eq.s32.totalorder %s15, 3
    %p93 = por %p91, %p92
    %p94 = scmp.ne.s32.totalorder %s83, %s84
    %p95 = scmp.eq.s32.totalorder %s15, 0
    %p96 = por %p94, %p95
    %p97 = scmp.ne.s32.totalorder %s83, %s84
    %p98 = scmp.eq.s32.totalorder %s16, 3
    %p99 = por %p97, %p98
    %p101 = scmp.ne.s32.totalorder %s84, %s100
    %p102 = scmp.eq.s32.totalorder %s16, 0
    %p103 = por %p101, %p102
    %s104 = ssub.s32 %s19, %s35
    %p105 = scmp.eq.s32.totalorder %s104, 0
    %s107 = sadd.s32 %s106, 1
    %s108 = scalar_select %p105, %s106, %s107
    %p111 = pneg %p105
    %p112 = scmp.eq.s32.totalorder %s10, 3
    %p113 = por %p111, %p112
    %p114 = scmp.ne.s32.totalorder %s106, %s109
    %p115 = scmp.eq.s32.totalorder %s10, 0
    %p116 = por %p114, %p115
    %p117 = scmp.ne.s32.totalorder %s106, %s109
    %p118 = scmp.eq.s32.totalorder %s15, 3
    %p119 = por %p117, %p118
    %p120 = scmp.ne.s32.totalorder %s109, %s110
    %p121 = scmp.eq.s32.totalorder %s15, 0
    %p122 = por %p120, %p121
    %p123 = scmp.ne.s32.totalorder %s109, %s110
    %p124 = scmp.eq.s32.totalorder %s16, 3
    %p125 = por %p123, %p124
    %p127 = scmp.ne.s32.totalorder %s110, %s126
    %p128 = scmp.eq.s32.totalorder %s16, 0
    %p129 = por %p127, %p128
    %s130 = ssub.s32 %s19, %s35
    %p131 = scmp.eq.s32.totalorder %s130, 0
    %s133 = sadd.s32 %s132, 1
    %s134 = scalar_select %p131, %s132, %s133
    %p137 = pneg %p131
    %p138 = scmp.eq.s32.totalorder %s10, 3
    %p139 = por %p137, %p138
    %p140 = scmp.ne.s32.totalorder %s132, %s135
    %p141 = scmp.eq.s32.totalorder %s10, 0
    %p142 = por %p140, %p141
    %p143 = scmp.ne.s32.totalorder %s132, %s135
    %p144 = scmp.eq.s32.totalorder %s15, 3
    %p145 = por %p143, %p144
    %p146 = scmp.ne.s32.totalorder %s135, %s136
    %p147 = scmp.eq.s32.totalorder %s15, 0
    %p148 = por %p146, %p147
    %p149 = scmp.ne.s32.totalorder %s135, %s136
    %p150 = scmp.eq.s32.totalorder %s16, 3
    %p151 = por %p149, %p150
    %p153 = scmp.ne.s32.totalorder %s136, %s152
    %p154 = scmp.eq.s32.totalorder %s16, 0
    %p155 = por %p153, %p154
    %s156 = ssub.s32 %s17, %s43
    %s157 = ssub.s32 %s18, %s39
    %s158 = sor.u32 %s156, %s157
    %s159 = ssub.s32 %s19, %s35
    %s160 = sor.u32 %s158, %s159
    %p161 = scmp.eq.s32.totalorder %s160, 0
    %s163 = sadd.s32 %s162, 1
    %s164 = scalar_select %p161, %s162, %s163
    %p167 = pneg %p161
    %p168 = scmp.eq.s32.totalorder %s10, 3
    %p169 = por %p167, %p168
    %p170 = scmp.ne.s32.totalorder %s162, %s165
    %p171 = scmp.eq.s32.totalorder %s10, 0
    %p172 = por %p170, %p171
    %p173 = scmp.ne.s32.totalorder %s162, %s165
    %p174 = scmp.eq.s32.totalorder %s15, 3
    %p175 = por %p173, %p174
    %p176 = scmp.ne.s32.totalorder %s165, %s166
    %p177 = scmp.eq.s32.totalorder %s15, 0
    %p178 = por %p176, %p177
    %p179 = scmp.ne.s32.totalorder %s165, %s166
    %p180 = scmp.eq.s32.totalorder %s16, 3
    %p181 = por %p179, %p180
    %p183 = scmp.ne.s32.totalorder %s166, %s182
    %p184 = scmp.eq.s32.totalorder %s16, 0
    %p185 = por %p183, %p184
    %p186 = scmp.le.s32.totalorder 1, %s10
    %p187 = scmp.lt.s32.totalorder %s10, 5
    %p188 = pnand %p186, %p187
    %p189 = pneg %p188
    // Predicated region
    $region9: #{unet_forward.14} parent=5 // pred_check
      _
    $region10: #{unet_forward.14} parent=5 // pred_check_branch
      %191 = sbr.rel (%p188) target = $region12
    $region11: #{unet_forward.14} parent=5 // pred_region
      %s192 = ssub.s32 %s10, 1
      // Predicated region
      $region13: #{unet_forward.14} parent=11 // pred_check
        %p193 = pneg %p122
      $region14: #{unet_forward.14} parent=11 // pred_check_branch
        %195 = sbr.rel (%p193) target = $region16
      $region15: #{unet_forward.14} parent=11 // pred_region
        %p196 = scmp.lt.s32.totalorder %s23, 0
        %s197 = scalar_select %p196, %s23, 0
        %s198 = scalar_lea.vmem %s2, %s197
      $region16: #{unet_forward.14} parent=11 // pred_fallthru
        _
      // Predicated region
      $region17: #{unet_forward.14} parent=11 // pred_check
        %p199 = pneg %p148
      $region18: #{unet_forward.14} parent=11 // pred_check_branch
        %201 = sbr.rel (%p199) target = $region20
      $region19: #{unet_forward.14} parent=11 // pred_region
        %p202 = scmp.lt.s32.totalorder %s23, 0
        %s203 = scalar_select %p202, %s23, 0
        %s204 = scalar_lea.vmem %s3, %s203
      $region20: #{unet_forward.14} parent=11 // pred_fallthru
        _
    $region12: #{unet_forward.14} parent=5 // pred_fallthru
      _
    %p205 = scmp.lt.s32.totalorder %s10, 4
    // Predicated region
    $region21: #{unet_forward.14} parent=5 // pred_check
      %p206 = pneg %p205
    $region22: #{unet_forward.14} parent=5 // pred_check_branch
      %208 = sbr.rel (%p206) target = $region24
    $region23: #{unet_forward.14} parent=5 // pred_region
      // Predicated region
      $region25: #{unet_forward.14} parent=23 // pred_check
        %p209 = pneg %p60
      $region26: #{unet_forward.14} parent=23 // pred_check_branch
        %211 = sbr.rel (%p209) target = $region28
      $region27: #{unet_forward.14} parent=23 // pred_region
        %s212 = smul.u32 4, %s18
        %p213 = scmp.lt.s32.totalorder %s17, 3
        %s214 = scalar_select %p213, %s17, 3
        %p215 = scmp.lt.s32.totalorder %s212, 3
        %s216 = scalar_select %p215, %s212, 3
        %p217 = scmp.lt.s32.totalorder %s20, 0
        %s218 = scalar_select %p217, %s20, 0
        %s219 = sadd.s32 %s218, %s216
        %s220 = smul.addr %s214, 4
        %s221 = sadd.s32 %s219, %s220
        %s222 = smul.addr %s221, 4
        %s223 = scalar_lea.vmem %s0, %s222
        %s224 = smul.u32 4, %s18
      $region28: #{unet_forward.14} parent=23 // pred_fallthru
        _
      // Predicated region
      $region29: #{unet_forward.14} parent=23 // pred_check
        %p225 = pneg %p90
      $region30: #{unet_forward.14} parent=23 // pred_check_branch
        %227 = sbr.rel (%p225) target = $region32
      $region31: #{unet_forward.14} parent=23 // pred_region
        %s228 = smul.u32 16, %s20
        %p229 = scmp.lt.s32.totalorder %s17, 3
        %s230 = scalar_select %p229, %s17, 3
        %p231 = scmp.lt.s32.totalorder %s228, 15
        %s232 = scalar_select %p231, %s228, 15
        %p233 = scmp.lt.s32.totalorder %s19, 0
        %s234 = scalar_select %p233, %s19, 0
        %s235 = sadd.s32 %s234, %s232
        %s236 = smul.addr %s230, 16
        %s237 = sadd.s32 %s235, %s236
        %s238 = smul.addr %s237, 4
        %s239 = scalar_lea.vmem %s1, %s238
        %s240 = smul.u32 16, %s20
      $region32: #{unet_forward.14} parent=23 // pred_fallthru
        _
    $region24: #{unet_forward.14} parent=5 // pred_fallthru
      _
    %p241 = scmp.le.s32.totalorder 1, %s10
    %p242 = scmp.lt.s32.totalorder %s10, 5
    %p243 = pnand %p241, %p242
    %p244 = pneg %p243
    // Predicated region
    $region33: #{unet_forward.14} parent=5 // pred_check
      _
    $region34: #{unet_forward.14} parent=5 // pred_check_branch
      %246 = sbr.rel (%p243) target = $region36
    $region35: #{unet_forward.14} parent=5 // pred_region
      %s247 = ssub.s32 %s10, 1
      %s248 = smul.u32 4, %s22
      %p249 = scmp.lt.s32.totalorder %s21, 3
      %s250 = scalar_select %p249, %s21, 3
      %p251 = scmp.lt.s32.totalorder %s248, 3
      %s252 = scalar_select %p251, %s248, 3
      %p253 = scmp.lt.s32.totalorder %s24, 0
      %s254 = scalar_select %p253, %s24, 0
      %s255 = sadd.s32 %s254, %s252
      %s256 = smul.addr %s250, 4
      %s257 = sadd.s32 %s255, %s256
      %s258 = smul.addr %s257, 4
      %s259 = scalar_lea.vmem %s0, %s258
      %p260 = pneg %p66
      %p261 = pneg %p63
      %s262 = smul.u32 16, %s24
      %p263 = scmp.lt.s32.totalorder %s21, 3
      %s264 = scalar_select %p263, %s21, 3
      %p265 = scmp.lt.s32.totalorder %s262, 15
      %s266 = scalar_select %p265, %s262, 15
      %p267 = scmp.lt.s32.totalorder %s23, 0
      %s268 = scalar_select %p267, %s23, 0
      %s269 = sadd.s32 %s268, %s266
      %s270 = smul.addr %s264, 16
      %s271 = sadd.s32 %s269, %s270
      %s272 = smul.addr %s271, 4
      %s273 = scalar_lea.vmem %s1, %s272
      %p274 = pneg %p96
      %p275 = pneg %p93
      %p276 = scmp.lt.s32.totalorder %s23, 0
      %s277 = scalar_select %p276, %s23, 0
      %s278 = scalar_lea.vmem %s2, %s277
      %p279 = pneg %p122
      %p280 = pneg %p119
      %p281 = scmp.lt.s32.totalorder %s23, 0
      %s282 = scalar_select %p281, %s23, 0
      %s283 = scalar_lea.vmem %s3, %s282
      %p284 = pneg %p148
      %p285 = pneg %p145
      %p286 = pneg %p178
      %p287 = pneg %p175
      %s288 = smul.u32 4, %s22
      %p289 = scmp.lt.s32.totalorder %s21, 3
      %s290 = scalar_select %p289, %s21, 3
      %p291 = scmp.lt.s32.totalorder %s288, 3
      %s292 = scalar_select %p291, %s288, 3
      %p293 = scmp.lt.s32.totalorder %s23, 0
      %s294 = scalar_select %p293, %s23, 0
      %s295 = sadd.s32 %s294, %s292
      %s296 = smul.addr %s290, 4
      %s297 = sadd.s32 %s295, %s296
      %s298 = smul.addr %s297, 4
      %s299 = scalar_lea.vmem %s4, %s298
      %s300 = smul.u32 4, %s22
      %p301 = scmp.lt.s32.totalorder %s21, 3
      %s302 = scalar_select %p301, %s21, 3
      %p303 = scmp.lt.s32.totalorder %s300, 3
      %s304 = scalar_select %p303, %s300, 3
      %p305 = scmp.lt.s32.totalorder %s24, 0
      %s306 = scalar_select %p305, %s24, 0
      %s307 = sadd.s32 %s306, %s304
      %s308 = smul.addr %s302, 4
      %s309 = sadd.s32 %s307, %s308
      %s310 = smul.addr %s309, 4
      %s311 = scalar_lea.vmem %s0, %s310
      %s312 = smul.u32 4, %s22
      %s313 = smul.u32 16, %s24
      %p314 = scmp.lt.s32.totalorder %s21, 3
      %s315 = scalar_select %p314, %s21, 3
      %p316 = scmp.lt.s32.totalorder %s313, 15
      %s317 = scalar_select %p316, %s313, 15
      %p318 = scmp.lt.s32.totalorder %s23, 0
      %s319 = scalar_select %p318, %s23, 0
      %s320 = sadd.s32 %s319, %s317
      %s321 = smul.addr %s315, 16
      %s322 = sadd.s32 %s320, %s321
      %s323 = smul.addr %s322, 4
      %s324 = scalar_lea.vmem %s1, %s323
      %s325 = smul.u32 16, %s24
      %p326 = scmp.lt.s32.totalorder %s23, 0
      %s327 = scalar_select %p326, %s23, 0
      %s328 = scalar_lea.vmem %s2, %s327
      %p329 = scmp.lt.s32.totalorder %s23, 0
      %s330 = scalar_select %p329, %s23, 0
      %s331 = scalar_lea.vmem %s3, %s330
      %s332 = smul.u32 4, %s22
      %p333 = scmp.lt.s32.totalorder %s21, 3
      %s334 = scalar_select %p333, %s21, 3
      %p335 = scmp.lt.s32.totalorder %s332, 3
      %s336 = scalar_select %p335, %s332, 3
      %p337 = scmp.lt.s32.totalorder %s23, 0
      %s338 = scalar_select %p337, %s23, 0
      %s339 = sadd.s32 %s338, %s336
      %s340 = smul.addr %s334, 4
      %s341 = sadd.s32 %s339, %s340
      %s342 = smul.addr %s341, 4
      %s343 = scalar_lea.vmem %s4, %s342
      %s344 = smul.u32 4, %s22
      %p345 = scmp.eq.s32.totalorder %s24, 0
      // Predicated region
      $region37: #{unet_forward.14} parent=35 // pred_check
        %p346 = pneg %p345
      $region38: #{unet_forward.14} parent=35 // pred_check_branch
        %348 = sbr.rel (%p346) target = $region40
      $region39: #{unet_forward.14} parent=35 // pred_region
        %349 = vst [vmem:[#allocation2] sm:$0xff] 0.0
        %350 = vst [vmem:[#allocation2 + $0x8] sm:$0xff] 0.0
        %351 = vst [vmem:[#allocation2 + $0x10] sm:$0xff] 0.0
        %352 = vst [vmem:[#allocation2 + $0x18] sm:$0xff] 0.0
      $region40: #{unet_forward.14} parent=35 // pred_fallthru
        _
      %v353 = vld [vmem:[#allocation2] sm:$0xff]
      %v354 = vld [vmem:[#allocation2 + $0x8] sm:$0xff]
      %v355 = vld [vmem:[#allocation2 + $0x10] sm:$0xff]
      %v356 = vld [vmem:[#allocation2 + $0x18] sm:$0xff]
      %v357 = vld [vmem:[%s311] sm:$0xf]
      %v358 = vld [vmem:[%s311 + $0x4] sm:$0xf]
      %v359 = vld [vmem:[%s311 + $0x8] sm:$0xf]
      %v360 = vld [vmem:[%s311 + $0xc] sm:$0xf]
      %v361 = vld [vmem:[%s324] sm:$0xf]
      %v362 = vld [vmem:[%s324 + $0x4] sm:$0xf]
      %v363 = vld [vmem:[%s324 + $0x8] sm:$0xf]
      %v364 = vld [vmem:[%s324 + $0xc] sm:$0xf]
      %v365 = vld [vmem:[%s324 + $0x10] sm:$0xf]
      %v366 = vld [vmem:[%s324 + $0x14] sm:$0xf]
      %v367 = vld [vmem:[%s324 + $0x18] sm:$0xf]
      %v368 = vld [vmem:[%s324 + $0x1c] sm:$0xf]
      %v369 = vld [vmem:[%s324 + $0x20] sm:$0xf]
      %v370 = vld [vmem:[%s324 + $0x24] sm:$0xf]
      %v371 = vld [vmem:[%s324 + $0x28] sm:$0xf]
      %v372 = vld [vmem:[%s324 + $0x2c] sm:$0xf]
      %v373 = vld [vmem:[%s324 + $0x30] sm:$0xf]
      %v374 = vld [vmem:[%s324 + $0x34] sm:$0xf]
      %v375 = vld [vmem:[%s324 + $0x38] sm:$0xf]
      %v376 = vld [vmem:[%s324 + $0x3c] sm:$0xf]
      %v381 = vunpack.c.l.b16 %v357
      %v382 = vunpack.c.l.b16 %v358
      %v383 = vunpack.c.l.b16 %v359
      %v384 = vunpack.c.l.b16 %v360
      %v385 = vpack.c.b16 %v382, %v381
      %v386 = vpack.c.b16 %v384, %v383
      %v405 = vunpack.c.l.b16 %v361
      %v406 = vunpack.c.l.b16 %v362
      %v407 = vunpack.c.l.b16 %v363
      %v408 = vunpack.c.l.b16 %v364
      %v409 = vunpack.c.l.b16 %v365
      %v410 = vunpack.c.l.b16 %v366
      %v411 = vunpack.c.l.b16 %v367
      %v412 = vunpack.c.l.b16 %v368
      %v413 = vunpack.c.l.b16 %v369
      %v414 = vunpack.c.l.b16 %v370
      %v415 = vunpack.c.l.b16 %v371
      %v416 = vunpack.c.l.b16 %v372
      %v417 = vunpack.c.l.b16 %v373
      %v418 = vunpack.c.l.b16 %v374
      %v419 = vunpack.c.l.b16 %v375
      %v420 = vunpack.c.l.b16 %v376
      %v421 = vpack.c.b16 %v406, %v405
      %v422 = vpack.c.b16 %v408, %v407
      %v423 = vpack.c.b16 %v410, %v409
      %v424 = vpack.c.b16 %v412, %v411
      %v425 = vpack.c.b16 %v414, %v413
      %v426 = vpack.c.b16 %v416, %v415
      %v427 = vpack.c.b16 %v418, %v417
      %v428 = vpack.c.b16 %v420, %v419
      %437 = vmatpush.bf16.msra.mxu0 %v428
      %438 = vmatpush.bf16.msra.mxu0 %v427
      %439 = vmatpush.bf16.msra.mxu0 %v426
      %440 = vmatpush.bf16.msra.mxu0 %v425
      %441 = vmatpush.bf16.msra.mxu0 %v424
      %442 = vmatpush.bf16.msra.mxu0 %v423
      %443 = vmatpush.bf16.msra.mxu0 %v422
      %444 = vmatpush.bf16.msra.mxu0 %v421
      %445 = vmatmul.bf16.gmra.mxu0 %v385
      %v446 = vpop.f32.mrf.mxu0
      %v447 = vadd.f32 0.0, %v446
      %v448 = vpop.f32.mrf.mxu0
      %v449 = vadd.f32 0.0, %v448
      %450 = vmatmul.bf16.gmra.mxu0 %v386
      %v451 = vpop.f32.mrf.mxu0
      %v452 = vadd.f32 0.0, %v451
      %v453 = vpop.f32.mrf.mxu0
      %v454 = vadd.f32 0.0, %v453
      %455 = vdwg.mxu0
      %v456 = vadd.f32 %v353, %v447
      %v457 = vadd.f32 %v354, %v449
      %v458 = vadd.f32 %v355, %v452
      %v459 = vadd.f32 %v356, %v454
      %460 = vst [vmem:[#allocation2] sm:$0xff] %v456
      %461 = vst [vmem:[#allocation2 + $0x8] sm:$0xff] %v457
      %462 = vst [vmem:[#allocation2 + $0x10] sm:$0xff] %v458
      %463 = vst [vmem:[#allocation2 + $0x18] sm:$0xff] %v459
      // Predicated region
      $region41: #{unet_forward.14} parent=35 // pred_check
        %p464 = pneg %p345
      $region42: #{unet_forward.14} parent=35 // pred_check_branch
        %466 = sbr.rel (%p464) target = $region44
      $region43: #{unet_forward.14} parent=35 // pred_region
        %v467 = vld [vmem:[#allocation2] sm:$0xff]
        %v468 = vld [vmem:[#allocation2 + $0x8] sm:$0xff]
        %v469 = vld [vmem:[#allocation2 + $0x10] sm:$0xff]
        %v470 = vld [vmem:[#allocation2 + $0x18] sm:$0xff]
        %v471 = vld [vmem:[%s328] sm:$0x1]
        %v473 = vperm.slane %v471, 0
        %v475 = vmul.f32 %v467, %v473
        %v476 = vmul.f32 %v468, %v473
        %v477 = vmul.f32 %v469, %v473
        %v478 = vmul.f32 %v470, %v473
        %v479 = vld [vmem:[%s331] sm:$0x1]
        %v481 = vperm.slane %v479, 0
        %v483 = vadd.f32 %v475, %v481
        %v484 = vadd.f32 %v476, %v481
        %v485 = vadd.f32 %v477, %v481
        %v486 = vadd.f32 %v478, %v481
        %v487 = vpack.c.bf16 %v483, %v483
        %v488 = vpack.c.bf16 %v484, %v484
        %v489 = vpack.c.bf16 %v485, %v485
        %v490 = vpack.c.bf16 %v486, %v486
        %491 = vst [vmem:[%s343] sm:$0xf] %v487
        %492 = vst [vmem:[%s343 + $0x4] sm:$0xf] %v488
        %493 = vst [vmem:[%s343 + $0x8] sm:$0xf] %v489
        %494 = vst [vmem:[%s343 + $0xc] sm:$0xf] %v490
      $region44: #{unet_forward.14} parent=35 // pred_fallthru
        _
      %s495 = smul.u32 4, %s22
      %p496 = scmp.lt.s32.totalorder %s21, 3
      %s497 = scalar_select %p496, %s21, 3
      %p498 = scmp.lt.s32.totalorder %s495, 3
      %s499 = scalar_select %p498, %s495, 3
      %p500 = scmp.lt.s32.totalorder %s23, 0
      %s501 = scalar_select %p500, %s23, 0
      %s502 = sadd.s32 %s501, %s499
      %s503 = smul.addr %s497, 4
      %s504 = sadd.s32 %s502, %s503
      %s505 = smul.addr %s504, 4
      %s506 = scalar_lea.vmem %s4, %s505
      // Predicated region
      $region45: #{unet_forward.14} parent=35 // pred_check
        %p507 = pneg %p175
      $region46: #{unet_forward.14} parent=35 // pred_check_branch
        %509 = sbr.rel (%p507) target = $region48
      $region47: #{unet_forward.14} parent=35 // pred_region
        %s510 = smul.u32 4, %s22
      $region48: #{unet_forward.14} parent=35 // pred_fallthru
        _
    $region36: #{unet_forward.14} parent=5 // pred_fallthru
      _
    %p511 = scmp.le.s32.totalorder 2, %s10
    // Predicated region
    $region49: #{unet_forward.14} parent=5 // pred_check
      %p512 = pneg %p511
    $region50: #{unet_forward.14} parent=5 // pred_check_branch
      %514 = sbr.rel (%p512) target = $region52
    $region51: #{unet_forward.14} parent=5 // pred_region
      %s515 = ssub.s32 %s10, 2
      // Predicated region
      $region53: #{unet_forward.14} parent=51 // pred_check
        %p516 = pneg %p181
      $region54: #{unet_forward.14} parent=51 // pred_check_branch
        %518 = sbr.rel (%p516) target = $region56
      $region55: #{unet_forward.14} parent=51 // pred_region
        %s519 = smul.u32 4, %s26
        %p520 = scmp.lt.s32.totalorder %s25, 3
        %s521 = scalar_select %p520, %s25, 3
        %p522 = scmp.lt.s32.totalorder %s519, 3
        %s523 = scalar_select %p522, %s519, 3
        %p524 = scmp.lt.s32.totalorder %s27, 0
        %s525 = scalar_select %p524, %s27, 0
        %s526 = sadd.s32 %s525, %s523
        %s527 = smul.addr %s521, 4
        %s528 = sadd.s32 %s526, %s527
        %s529 = smul.addr %s528, 4
        %s530 = scalar_lea.vmem %s4, %s529
      $region56: #{unet_forward.14} parent=51 // pred_fallthru
        _
    $region52: #{unet_forward.14} parent=5 // pred_fallthru
      _
  $region6: #{unet_forward.14} parent=0 // loop_footer
    %s14 = sadd.s32 1, %s10
  $region7: #{unet_forward.14} parent=0 // loop_footer_branch
    %9 = sbr.rel target = $region3
  $region8: #{unet_forward.14} parent=0 // loop_exit
    _

// kernel: unet_forward.15
$region0: #{unet_forward.15}
  #allocation0 [shape = 'u32[]', space=smem, size = 0x4, offset = 0x4, fixed_abs, tag = 'smem constant byte address 0x4 - core index']
  #allocation1 [shape = 'u32[72,128]{1,0:T(1,128)}', space=vmem, size = 0x9000, scoped, tag = 'internal scratch']
  #allocation2 [shape = 'f32[128,128]{1,0:T(8,128)}', space=vmem, size = 0x10000, scoped, tag = 'scratch operand']
  %s0 = inlined_call_operand.vmem [shape: bf16[4,128,128], index: 0, kind: input, shape index: {}]
  %s1 = inlined_call_operand.vmem [shape: bf16[4,128,128], index: 1, kind: input, shape index: {}]
  %s2 = inlined_call_operand.vmem [shape: f32[1,128], index: 2, kind: input, shape index: {}]
  %s3 = inlined_call_operand.vmem [shape: f32[1,128], index: 3, kind: input, shape index: {}]
  %s4 = inlined_call_operand.vmem [shape: bf16[4,128,128], index: 4, kind: output, shape index: {}]
  %s5 = sld [smem:[#allocation0]]
  $region57: #{unet_forward.15} parent=0
    _
  %s7 = ssub.s32 1, %s5
  %s8 = scalar_select 0, %s7, %s5
  loop: start=0, step=1, limit=6
  $region2: #{unet_forward.15} parent=0 // loop_pre_header
    _
  $region3: #{unet_forward.15} parent=0 // loop_header
    %s10 = sphi 0, %s14
    %p11 = scmp.ge.s32.totalorder %s10, 6
    %s17 = sphi 0, %s43
    %s18 = sphi 0, %s39
    %s19 = sphi 0, %s35
    %s20 = sphi 0, %s31
    %s21 = sphi 0, %s17
    %s22 = sphi 0, %s18
    %s23 = sphi 0, %s19
    %s24 = sphi 0, %s20
    %s25 = sphi 0, %s21
    %s26 = sphi 0, %s22
    %s27 = sphi 0, %s23
    %s28 = sphi 0, %s24
    %s50 = sphi 0, %s52
    %s53 = sphi 0, %s50
    %s54 = sphi 0, %s53
    %s70 = sphi 0, %s54
    %s80 = sphi 0, %s82
    %s83 = sphi 0, %s80
    %s84 = sphi 0, %s83
    %s100 = sphi 0, %s84
    %s106 = sphi 0, %s108
    %s109 = sphi 0, %s106
    %s110 = sphi 0, %s109
    %s126 = sphi 0, %s110
    %s132 = sphi 0, %s134
    %s135 = sphi 0, %s132
    %s136 = sphi 0, %s135
    %s152 = sphi 0, %s136
    %s162 = sphi 0, %s164
    %s165 = sphi 0, %s162
    %s166 = sphi 0, %s165
    %s182 = sphi 0, %s166
  $region4: #{unet_forward.15} parent=0 // loop_header_branch
    %13 = sbr.rel (%p11) target = $region8
  $region5: #{unet_forward.15} parent=0 // loop_body
    %s15 = ssub.s32 %s10, 1
    %s16 = ssub.s32 %s10, 2
    %s29 = sadd.s32 1, %s20
    %p30 = scmp.ge.s32.totalorder %s29, 1
    %s31 = scalar_select %p30, 0, %s29
    %s32 = sadd.s32 1, %s19
    %s33 = scalar_select %p30, %s32, %s19
    %p34 = scmp.ge.s32.totalorder %s33, 1
    %s35 = scalar_select %p34, 0, %s33
    %s36 = sadd.s32 1, %s18
    %s37 = scalar_select %p34, %s36, %s18
    %p38 = scmp.ge.s32.totalorder %s37, 1
    %s39 = scalar_select %p38, 0, %s37
    %s40 = sadd.s32 1, %s17
    %s41 = scalar_select %p38, %s40, %s17
    %p42 = scmp.ge.s32.totalorder %s41, 4
    %s43 = scalar_select %p42, 0, %s41
    %s44 = ssub.s32 %s17, %s43
    %s45 = ssub.s32 %s18, %s39
    %s46 = sor.u32 %s44, %s45
    %s47 = ssub.s32 %s20, %s31
    %s48 = sor.u32 %s46, %s47
    %p49 = scmp.eq.s32.totalorder %s48, 0
    %s51 = sadd.s32 %s50, 1
    %s52 = scalar_select %p49, %s50, %s51
    %p55 = pneg %p49
    %p56 = scmp.eq.s32.totalorder %s10, 3
    %p57 = por %p55, %p56
    %p58 = scmp.ne.s32.totalorder %s50, %s53
    %p59 = scmp.eq.s32.totalorder %s10, 0
    %p60 = por %p58, %p59
    %p61 = scmp.ne.s32.totalorder %s50, %s53
    %p62 = scmp.eq.s32.totalorder %s15, 3
    %p63 = por %p61, %p62
    %p64 = scmp.ne.s32.totalorder %s53, %s54
    %p65 = scmp.eq.s32.totalorder %s15, 0
    %p66 = por %p64, %p65
    %p67 = scmp.ne.s32.totalorder %s53, %s54
    %p68 = scmp.eq.s32.totalorder %s16, 3
    %p69 = por %p67, %p68
    %p71 = scmp.ne.s32.totalorder %s54, %s70
    %p72 = scmp.eq.s32.totalorder %s16, 0
    %p73 = por %p71, %p72
    %s74 = ssub.s32 %s17, %s43
    %s75 = ssub.s32 %s20, %s31
    %s76 = sor.u32 %s74, %s75
    %s77 = ssub.s32 %s19, %s35
    %s78 = sor.u32 %s76, %s77
    %p79 = scmp.eq.s32.totalorder %s78, 0
    %s81 = sadd.s32 %s80, 1
    %s82 = scalar_select %p79, %s80, %s81
    %p85 = pneg %p79
    %p86 = scmp.eq.s32.totalorder %s10, 3
    %p87 = por %p85, %p86
    %p88 = scmp.ne.s32.totalorder %s80, %s83
    %p89 = scmp.eq.s32.totalorder %s10, 0
    %p90 = por %p88, %p89
    %p91 = scmp.ne.s32.totalorder %s80, %s83
    %p92 = scmp.eq.s32.totalorder %s15, 3
    %p93 = por %p91, %p92
    %p94 = scmp.ne.s32.totalorder %s83, %s84
    %p95 = scmp.eq.s32.totalorder %s15, 0
    %p96 = por %p94, %p95
    %p97 = scmp.ne.s32.totalorder %s83, %s84
    %p98 = scmp.eq.s32.totalorder %s16, 3
    %p99 = por %p97, %p98
    %p101 = scmp.ne.s32.totalorder %s84, %s100
    %p102 = scmp.eq.s32.totalorder %s16, 0
    %p103 = por %p101, %p102
    %s104 = ssub.s32 %s19, %s35
    %p105 = scmp.eq.s32.totalorder %s104, 0
    %s107 = sadd.s32 %s106, 1
    %s108 = scalar_select %p105, %s106, %s107
    %p111 = pneg %p105
    %p112 = scmp.eq.s32.totalorder %s10, 3
    %p113 = por %p111, %p112
    %p114 = scmp.ne.s32.totalorder %s106, %s109
    %p115 = scmp.eq.s32.totalorder %s10, 0
    %p116 = por %p114, %p115
    %p117 = scmp.ne.s32.totalorder %s106, %s109
    %p118 = scmp.eq.s32.totalorder %s15, 3
    %p119 = por %p117, %p118
    %p120 = scmp.ne.s32.totalorder %s109, %s110
    %p121 = scmp.eq.s32.totalorder %s15, 0
    %p122 = por %p120, %p121
    %p123 = scmp.ne.s32.totalorder %s109, %s110
    %p124 = scmp.eq.s32.totalorder %s16, 3
    %p125 = por %p123, %p124
    %p127 = scmp.ne.s32.totalorder %s110, %s126
    %p128 = scmp.eq.s32.totalorder %s16, 0
    %p129 = por %p127, %p128
    %s130 = ssub.s32 %s19, %s35
    %p131 = scmp.eq.s32.totalorder %s130, 0
    %s133 = sadd.s32 %s132, 1
    %s134 = scalar_select %p131, %s132, %s133
    %p137 = pneg %p131
    %p138 = scmp.eq.s32.totalorder %s10, 3
    %p139 = por %p137, %p138
    %p140 = scmp.ne.s32.totalorder %s132, %s135
    %p141 = scmp.eq.s32.totalorder %s10, 0
    %p142 = por %p140, %p141
    %p143 = scmp.ne.s32.totalorder %s132, %s135
    %p144 = scmp.eq.s32.totalorder %s15, 3
    %p145 = por %p143, %p144
    %p146 = scmp.ne.s32.totalorder %s135, %s136
    %p147 = scmp.eq.s32.totalorder %s15, 0
    %p148 = por %p146, %p147
    %p149 = scmp.ne.s32.totalorder %s135, %s136
    %p150 = scmp.eq.s32.totalorder %s16, 3
    %p151 = por %p149, %p150
    %p153 = scmp.ne.s32.totalorder %s136, %s152
    %p154 = scmp.eq.s32.totalorder %s16, 0
    %p155 = por %p153, %p154
    %s156 = ssub.s32 %s17, %s43
    %s157 = ssub.s32 %s18, %s39
    %s158 = sor.u32 %s156, %s157
    %s159 = ssub.s32 %s19, %s35
    %s160 = sor.u32 %s158, %s159
    %p161 = scmp.eq.s32.totalorder %s160, 0
    %s163 = sadd.s32 %s162, 1
    %s164 = scalar_select %p161, %s162, %s163
    %p167 = pneg %p161
    %p168 = scmp.eq.s32.totalorder %s10, 3
    %p169 = por %p167, %p168
    %p170 = scmp.ne.s32.totalorder %s162, %s165
    %p171 = scmp.eq.s32.totalorder %s10, 0
    %p172 = por %p170, %p171
    %p173 = scmp.ne.s32.totalorder %s162, %s165
    %p174 = scmp.eq.s32.totalorder %s15, 3
    %p175 = por %p173, %p174
    %p176 = scmp.ne.s32.totalorder %s165, %s166
    %p177 = scmp.eq.s32.totalorder %s15, 0
    %p178 = por %p176, %p177
    %p179 = scmp.ne.s32.totalorder %s165, %s166
    %p180 = scmp.eq.s32.totalorder %s16, 3
    %p181 = por %p179, %p180
    %p183 = scmp.ne.s32.totalorder %s166, %s182
    %p184 = scmp.eq.s32.totalorder %s16, 0
    %p185 = por %p183, %p184
    %p186 = scmp.le.s32.totalorder 1, %s10
    %p187 = scmp.lt.s32.totalorder %s10, 5
    %p188 = pnand %p186, %p187
    %p189 = pneg %p188
    // Predicated region
    $region9: #{unet_forward.15} parent=5 // pred_check
      _
    $region10: #{unet_forward.15} parent=5 // pred_check_branch
      %191 = sbr.rel (%p188) target = $region12
    $region11: #{unet_forward.15} parent=5 // pred_region
      %s192 = ssub.s32 %s10, 1
      // Predicated region
      $region13: #{unet_forward.15} parent=11 // pred_check
        %p193 = pneg %p122
      $region14: #{unet_forward.15} parent=11 // pred_check_branch
        %195 = sbr.rel (%p193) target = $region16
      $region15: #{unet_forward.15} parent=11 // pred_region
        %p196 = scmp.lt.s32.totalorder %s23, 0
        %s197 = scalar_select %p196, %s23, 0
        %s198 = scalar_lea.vmem %s2, %s197
      $region16: #{unet_forward.15} parent=11 // pred_fallthru
        _
      // Predicated region
      $region17: #{unet_forward.15} parent=11 // pred_check
        %p199 = pneg %p148
      $region18: #{unet_forward.15} parent=11 // pred_check_branch
        %201 = sbr.rel (%p199) target = $region20
      $region19: #{unet_forward.15} parent=11 // pred_region
        %p202 = scmp.lt.s32.totalorder %s23, 0
        %s203 = scalar_select %p202, %s23, 0
        %s204 = scalar_lea.vmem %s3, %s203
      $region20: #{unet_forward.15} parent=11 // pred_fallthru
        _
    $region12: #{unet_forward.15} parent=5 // pred_fallthru
      _
    %p205 = scmp.lt.s32.totalorder %s10, 4
    // Predicated region
    $region21: #{unet_forward.15} parent=5 // pred_check
      %p206 = pneg %p205
    $region22: #{unet_forward.15} parent=5 // pred_check_branch
      %208 = sbr.rel (%p206) target = $region24
    $region23: #{unet_forward.15} parent=5 // pred_region
      // Predicated region
      $region25: #{unet_forward.15} parent=23 // pred_check
        %p209 = pneg %p60
      $region26: #{unet_forward.15} parent=23 // pred_check_branch
        %211 = sbr.rel (%p209) target = $region28
      $region27: #{unet_forward.15} parent=23 // pred_region
        %s212 = smul.u32 16, %s18
        %p213 = scmp.lt.s32.totalorder %s17, 3
        %s214 = scalar_select %p213, %s17, 3
        %p215 = scmp.lt.s32.totalorder %s212, 15
        %s216 = scalar_select %p215, %s212, 15
        %p217 = scmp.lt.s32.totalorder %s20, 0
        %s218 = scalar_select %p217, %s20, 0
        %s219 = sadd.s32 %s218, %s216
        %s220 = smul.addr %s214, 16
        %s221 = sadd.s32 %s219, %s220
        %s222 = smul.addr %s221, 4
        %s223 = scalar_lea.vmem %s0, %s222
        %s224 = smul.u32 16, %s18
      $region28: #{unet_forward.15} parent=23 // pred_fallthru
        _
      // Predicated region
      $region29: #{unet_forward.15} parent=23 // pred_check
        %p225 = pneg %p90
      $region30: #{unet_forward.15} parent=23 // pred_check_branch
        %227 = sbr.rel (%p225) target = $region32
      $region31: #{unet_forward.15} parent=23 // pred_region
        %s228 = smul.u32 16, %s20
        %p229 = scmp.lt.s32.totalorder %s17, 3
        %s230 = scalar_select %p229, %s17, 3
        %p231 = scmp.lt.s32.totalorder %s228, 15
        %s232 = scalar_select %p231, %s228, 15
        %p233 = scmp.lt.s32.totalorder %s19, 0
        %s234 = scalar_select %p233, %s19, 0
        %s235 = sadd.s32 %s234, %s232
        %s236 = smul.addr %s230, 16
        %s237 = sadd.s32 %s235, %s236
        %s238 = smul.addr %s237, 4
        %s239 = scalar_lea.vmem %s1, %s238
        %s240 = smul.u32 16, %s20
      $region32: #{unet_forward.15} parent=23 // pred_fallthru
        _
    $region24: #{unet_forward.15} parent=5 // pred_fallthru
      _
    %p241 = scmp.le.s32.totalorder 1, %s10
    %p242 = scmp.lt.s32.totalorder %s10, 5
    %p243 = pnand %p241, %p242
    %p244 = pneg %p243
    // Predicated region
    $region33: #{unet_forward.15} parent=5 // pred_check
      _
    $region34: #{unet_forward.15} parent=5 // pred_check_branch
      %246 = sbr.rel (%p243) target = $region36
    $region35: #{unet_forward.15} parent=5 // pred_region
      %s247 = ssub.s32 %s10, 1
      %s248 = smul.u32 16, %s22
      %p249 = scmp.lt.s32.totalorder %s21, 3
      %s250 = scalar_select %p249, %s21, 3
      %p251 = scmp.lt.s32.totalorder %s248, 15
      %s252 = scalar_select %p251, %s248, 15
      %p253 = scmp.lt.s32.totalorder %s24, 0
      %s254 = scalar_select %p253, %s24, 0
      %s255 = sadd.s32 %s254, %s252
      %s256 = smul.addr %s250, 16
      %s257 = sadd.s32 %s255, %s256
      %s258 = smul.addr %s257, 4
      %s259 = scalar_lea.vmem %s0, %s258
      %p260 = pneg %p66
      %p261 = pneg %p63
      %s262 = smul.u32 16, %s24
      %p263 = scmp.lt.s32.totalorder %s21, 3
      %s264 = scalar_select %p263, %s21, 3
      %p265 = scmp.lt.s32.totalorder %s262, 15
      %s266 = scalar_select %p265, %s262, 15
      %p267 = scmp.lt.s32.totalorder %s23, 0
      %s268 = scalar_select %p267, %s23, 0
      %s269 = sadd.s32 %s268, %s266
      %s270 = smul.addr %s264, 16
      %s271 = sadd.s32 %s269, %s270
      %s272 = smul.addr %s271, 4
      %s273 = scalar_lea.vmem %s1, %s272
      %p274 = pneg %p96
      %p275 = pneg %p93
      %p276 = scmp.lt.s32.totalorder %s23, 0
      %s277 = scalar_select %p276, %s23, 0
      %s278 = scalar_lea.vmem %s2, %s277
      %p279 = pneg %p122
      %p280 = pneg %p119
      %p281 = scmp.lt.s32.totalorder %s23, 0
      %s282 = scalar_select %p281, %s23, 0
      %s283 = scalar_lea.vmem %s3, %s282
      %p284 = pneg %p148
      %p285 = pneg %p145
      %p286 = pneg %p178
      %p287 = pneg %p175
      %s288 = smul.u32 16, %s22
      %p289 = scmp.lt.s32.totalorder %s21, 3
      %s290 = scalar_select %p289, %s21, 3
      %p291 = scmp.lt.s32.totalorder %s288, 15
      %s292 = scalar_select %p291, %s288, 15
      %p293 = scmp.lt.s32.totalorder %s23, 0
      %s294 = scalar_select %p293, %s23, 0
      %s295 = sadd.s32 %s294, %s292
      %s296 = smul.addr %s290, 16
      %s297 = sadd.s32 %s295, %s296
      %s298 = smul.addr %s297, 4
      %s299 = scalar_lea.vmem %s4, %s298
      %s300 = smul.u32 16, %s22
      %p301 = scmp.lt.s32.totalorder %s21, 3
      %s302 = scalar_select %p301, %s21, 3
      %p303 = scmp.lt.s32.totalorder %s300, 15
      %s304 = scalar_select %p303, %s300, 15
      %p305 = scmp.lt.s32.totalorder %s24, 0
      %s306 = scalar_select %p305, %s24, 0
      %s307 = sadd.s32 %s306, %s304
      %s308 = smul.addr %s302, 16
      %s309 = sadd.s32 %s307, %s308
      %s310 = smul.addr %s309, 4
      %s311 = scalar_lea.vmem %s0, %s310
      %s312 = smul.u32 16, %s22
      %s313 = smul.u32 16, %s24
      %p314 = scmp.lt.s32.totalorder %s21, 3
      %s315 = scalar_select %p314, %s21, 3
      %p316 = scmp.lt.s32.totalorder %s313, 15
      %s317 = scalar_select %p316, %s313, 15
      %p318 = scmp.lt.s32.totalorder %s23, 0
      %s319 = scalar_select %p318, %s23, 0
      %s320 = sadd.s32 %s319, %s317
      %s321 = smul.addr %s315, 16
      %s322 = sadd.s32 %s320, %s321
      %s323 = smul.addr %s322, 4
      %s324 = scalar_lea.vmem %s1, %s323
      %s325 = smul.u32 16, %s24
      %p326 = scmp.lt.s32.totalorder %s23, 0
      %s327 = scalar_select %p326, %s23, 0
      %s328 = scalar_lea.vmem %s2, %s327
      %p329 = scmp.lt.s32.totalorder %s23, 0
      %s330 = scalar_select %p329, %s23, 0
      %s331 = scalar_lea.vmem %s3, %s330
      %s332 = smul.u32 16, %s22
      %p333 = scmp.lt.s32.totalorder %s21, 3
      %s334 = scalar_select %p333, %s21, 3
      %p335 = scmp.lt.s32.totalorder %s332, 15
      %s336 = scalar_select %p335, %s332, 15
      %p337 = scmp.lt.s32.totalorder %s23, 0
      %s338 = scalar_select %p337, %s23, 0
      %s339 = sadd.s32 %s338, %s336
      %s340 = smul.addr %s334, 16
      %s341 = sadd.s32 %s339, %s340
      %s342 = smul.addr %s341, 4
      %s343 = scalar_lea.vmem %s4, %s342
      %s344 = smul.u32 16, %s22
      %p345 = scmp.eq.s32.totalorder %s24, 0
      // Predicated region
      $region37: #{unet_forward.15} parent=35 // pred_check
        %p346 = pneg %p345
      $region38: #{unet_forward.15} parent=35 // pred_check_branch
        %348 = sbr.rel (%p346) target = $region40
      $region39: #{unet_forward.15} parent=35 // pred_region
        %349 = vst [vmem:[#allocation2] sm:$0xff] 0.0
        %350 = vst [vmem:[#allocation2 + $0x8] sm:$0xff] 0.0
        %351 = vst [vmem:[#allocation2 + $0x10] sm:$0xff] 0.0
        %352 = vst [vmem:[#allocation2 + $0x18] sm:$0xff] 0.0
        %353 = vst [vmem:[#allocation2 + $0x20] sm:$0xff] 0.0
        %354 = vst [vmem:[#allocation2 + $0x28] sm:$0xff] 0.0
        %355 = vst [vmem:[#allocation2 + $0x30] sm:$0xff] 0.0
        %356 = vst [vmem:[#allocation2 + $0x38] sm:$0xff] 0.0
        %357 = vst [vmem:[#allocation2 + $0x40] sm:$0xff] 0.0
        %358 = vst [vmem:[#allocation2 + $0x48] sm:$0xff] 0.0
        %359 = vst [vmem:[#allocation2 + $0x50] sm:$0xff] 0.0
        %360 = vst [vmem:[#allocation2 + $0x58] sm:$0xff] 0.0
        %361 = vst [vmem:[#allocation2 + $0x60] sm:$0xff] 0.0
        %362 = vst [vmem:[#allocation2 + $0x68] sm:$0xff] 0.0
        %363 = vst [vmem:[#allocation2 + $0x70] sm:$0xff] 0.0
        %364 = vst [vmem:[#allocation2 + $0x78] sm:$0xff] 0.0
      $region40: #{unet_forward.15} parent=35 // pred_fallthru
        _
      %v365 = vld [vmem:[#allocation2] sm:$0xff]
      %v366 = vld [vmem:[#allocation2 + $0x8] sm:$0xff]
      %v367 = vld [vmem:[#allocation2 + $0x10] sm:$0xff]
      %v368 = vld [vmem:[#allocation2 + $0x18] sm:$0xff]
      %v369 = vld [vmem:[#allocation2 + $0x20] sm:$0xff]
      %v370 = vld [vmem:[#allocation2 + $0x28] sm:$0xff]
      %v371 = vld [vmem:[#allocation2 + $0x30] sm:$0xff]
      %v372 = vld [vmem:[#allocation2 + $0x38] sm:$0xff]
      %v373 = vld [vmem:[#allocation2 + $0x40] sm:$0xff]
      %v374 = vld [vmem:[#allocation2 + $0x48] sm:$0xff]
      %v375 = vld [vmem:[#allocation2 + $0x50] sm:$0xff]
      %v376 = vld [vmem:[#allocation2 + $0x58] sm:$0xff]
      %v377 = vld [vmem:[#allocation2 + $0x60] sm:$0xff]
      %v378 = vld [vmem:[#allocation2 + $0x68] sm:$0xff]
      %v379 = vld [vmem:[#allocation2 + $0x70] sm:$0xff]
      %v380 = vld [vmem:[#allocation2 + $0x78] sm:$0xff]
      %v381 = vld [vmem:[%s311] sm:$0xf]
      %v382 = vld [vmem:[%s311 + $0x4] sm:$0xf]
      %v383 = vld [vmem:[%s311 + $0x8] sm:$0xf]
      %v384 = vld [vmem:[%s311 + $0xc] sm:$0xf]
      %v385 = vld [vmem:[%s311 + $0x10] sm:$0xf]
      %v386 = vld [vmem:[%s311 + $0x14] sm:$0xf]
      %v387 = vld [vmem:[%s311 + $0x18] sm:$0xf]
      %v388 = vld [vmem:[%s311 + $0x1c] sm:$0xf]
      %v389 = vld [vmem:[%s311 + $0x20] sm:$0xf]
      %v390 = vld [vmem:[%s311 + $0x24] sm:$0xf]
      %v391 = vld [vmem:[%s311 + $0x28] sm:$0xf]
      %v392 = vld [vmem:[%s311 + $0x2c] sm:$0xf]
      %v393 = vld [vmem:[%s311 + $0x30] sm:$0xf]
      %v394 = vld [vmem:[%s311 + $0x34] sm:$0xf]
      %v395 = vld [vmem:[%s311 + $0x38] sm:$0xf]
      %v396 = vld [vmem:[%s311 + $0x3c] sm:$0xf]
      %v397 = vld [vmem:[%s324] sm:$0xf]
      %v398 = vld [vmem:[%s324 + $0x4] sm:$0xf]
      %v399 = vld [vmem:[%s324 + $0x8] sm:$0xf]
      %v400 = vld [vmem:[%s324 + $0xc] sm:$0xf]
      %v401 = vld [vmem:[%s324 + $0x10] sm:$0xf]
      %v402 = vld [vmem:[%s324 + $0x14] sm:$0xf]
      %v403 = vld [vmem:[%s324 + $0x18] sm:$0xf]
      %v404 = vld [vmem:[%s324 + $0x1c] sm:$0xf]
      %v405 = vld [vmem:[%s324 + $0x20] sm:$0xf]
      %v406 = vld [vmem:[%s324 + $0x24] sm:$0xf]
      %v407 = vld [vmem:[%s324 + $0x28] sm:$0xf]
      %v408 = vld [vmem:[%s324 + $0x2c] sm:$0xf]
      %v409 = vld [vmem:[%s324 + $0x30] sm:$0xf]
      %v410 = vld [vmem:[%s324 + $0x34] sm:$0xf]
      %v411 = vld [vmem:[%s324 + $0x38] sm:$0xf]
      %v412 = vld [vmem:[%s324 + $0x3c] sm:$0xf]
      %v429 = vunpack.c.l.b16 %v381
      %v430 = vunpack.c.l.b16 %v382
      %v431 = vunpack.c.l.b16 %v383
      %v432 = vunpack.c.l.b16 %v384
      %v433 = vunpack.c.l.b16 %v385
      %v434 = vunpack.c.l.b16 %v386
      %v435 = vunpack.c.l.b16 %v387
      %v436 = vunpack.c.l.b16 %v388
      %v437 = vunpack.c.l.b16 %v389
      %v438 = vunpack.c.l.b16 %v390
      %v439 = vunpack.c.l.b16 %v391
      %v440 = vunpack.c.l.b16 %v392
      %v441 = vunpack.c.l.b16 %v393
      %v442 = vunpack.c.l.b16 %v394
      %v443 = vunpack.c.l.b16 %v395
      %v444 = vunpack.c.l.b16 %v396
      %v445 = vpack.c.b16 %v430, %v429
      %v446 = vpack.c.b16 %v432, %v431
      %v447 = vpack.c.b16 %v434, %v433
      %v448 = vpack.c.b16 %v436, %v435
      %v449 = vpack.c.b16 %v438, %v437
      %v450 = vpack.c.b16 %v440, %v439
      %v451 = vpack.c.b16 %v442, %v441
      %v452 = vpack.c.b16 %v444, %v443
      %v477 = vunpack.c.l.b16 %v397
      %v478 = vunpack.c.l.b16 %v398
      %v479 = vunpack.c.l.b16 %v399
      %v480 = vunpack.c.l.b16 %v400
      %v481 = vunpack.c.l.b16 %v401
      %v482 = vunpack.c.l.b16 %v402
      %v483 = vunpack.c.l.b16 %v403
      %v484 = vunpack.c.l.b16 %v404
      %v485 = vunpack.c.l.b16 %v405
      %v486 = vunpack.c.l.b16 %v406
      %v487 = vunpack.c.l.b16 %v407
      %v488 = vunpack.c.l.b16 %v408
      %v489 = vunpack.c.l.b16 %v409
      %v490 = vunpack.c.l.b16 %v410
      %v491 = vunpack.c.l.b16 %v411
      %v492 = vunpack.c.l.b16 %v412
      %v493 = vpack.c.b16 %v478, %v477
      %v494 = vpack.c.b16 %v480, %v479
      %v495 = vpack.c.b16 %v482, %v481
      %v496 = vpack.c.b16 %v484, %v483
      %v497 = vpack.c.b16 %v486, %v485
      %v498 = vpack.c.b16 %v488, %v487
      %v499 = vpack.c.b16 %v490, %v489
      %v500 = vpack.c.b16 %v492, %v491
      %509 = vmatpush.bf16.msra.mxu0 %v500
      %510 = vmatpush.bf16.msra.mxu0 %v499
      %511 = vmatpush.bf16.msra.mxu0 %v498
      %512 = vmatpush.bf16.msra.mxu0 %v497
      %513 = vmatpush.bf16.msra.mxu0 %v496
      %514 = vmatpush.bf16.msra.mxu0 %v495
      %515 = vmatpush.bf16.msra.mxu0 %v494
      %516 = vmatpush.bf16.msra.mxu0 %v493
      %517 = vmatmul.bf16.gmra.mxu0 %v445
      %v518 = vpop.f32.mrf.mxu0
      %v519 = vadd.f32 0.0, %v518
      %v520 = vpop.f32.mrf.mxu0
      %v521 = vadd.f32 0.0, %v520
      %522 = vmatmul.bf16.gmra.mxu0 %v446
      %v523 = vpop.f32.mrf.mxu0
      %v524 = vadd.f32 0.0, %v523
      %v525 = vpop.f32.mrf.mxu0
      %v526 = vadd.f32 0.0, %v525
      %527 = vmatmul.bf16.gmra.mxu0 %v447
      %v528 = vpop.f32.mrf.mxu0
      %v529 = vadd.f32 0.0, %v528
      %v530 = vpop.f32.mrf.mxu0
      %v531 = vadd.f32 0.0, %v530
      %532 = vmatmul.bf16.gmra.mxu0 %v448
      %v533 = vpop.f32.mrf.mxu0
      %v534 = vadd.f32 0.0, %v533
      %v535 = vpop.f32.mrf.mxu0
      %v536 = vadd.f32 0.0, %v535
      %537 = vmatmul.bf16.gmra.mxu0 %v449
      %v538 = vpop.f32.mrf.mxu0
      %v539 = vadd.f32 0.0, %v538
      %v540 = vpop.f32.mrf.mxu0
      %v541 = vadd.f32 0.0, %v540
      %542 = vmatmul.bf16.gmra.mxu0 %v450
      %v543 = vpop.f32.mrf.mxu0
      %v544 = vadd.f32 0.0, %v543
      %v545 = vpop.f32.mrf.mxu0
      %v546 = vadd.f32 0.0, %v545
      %547 = vmatmul.bf16.gmra.mxu0 %v451
      %v548 = vpop.f32.mrf.mxu0
      %v549 = vadd.f32 0.0, %v548
      %v550 = vpop.f32.mrf.mxu0
      %v551 = vadd.f32 0.0, %v550
      %552 = vmatmul.bf16.gmra.mxu0 %v452
      %v553 = vpop.f32.mrf.mxu0
      %v554 = vadd.f32 0.0, %v553
      %v555 = vpop.f32.mrf.mxu0
      %v556 = vadd.f32 0.0, %v555
      %557 = vdwg.mxu0
      %v558 = vadd.f32 %v365, %v519
      %v559 = vadd.f32 %v366, %v521
      %v560 = vadd.f32 %v367, %v524
      %v561 = vadd.f32 %v368, %v526
      %v562 = vadd.f32 %v369, %v529
      %v563 = vadd.f32 %v370, %v531
      %v564 = vadd.f32 %v371, %v534
      %v565 = vadd.f32 %v372, %v536
      %v566 = vadd.f32 %v373, %v539
      %v567 = vadd.f32 %v374, %v541
      %v568 = vadd.f32 %v375, %v544
      %v569 = vadd.f32 %v376, %v546
      %v570 = vadd.f32 %v377, %v549
      %v571 = vadd.f32 %v378, %v551
      %v572 = vadd.f32 %v379, %v554
      %v573 = vadd.f32 %v380, %v556
      %574 = vst [vmem:[#allocation2] sm:$0xff] %v558
      %575 = vst [vmem:[#allocation2 + $0x8] sm:$0xff] %v559
      %576 = vst [vmem:[#allocation2 + $0x10] sm:$0xff] %v560
      %577 = vst [vmem:[#allocation2 + $0x18] sm:$0xff] %v561
      %578 = vst [vmem:[#allocation2 + $0x20] sm:$0xff] %v562
      %579 = vst [vmem:[#allocation2 + $0x28] sm:$0xff] %v563
      %580 = vst [vmem:[#allocation2 + $0x30] sm:$0xff] %v564
      %581 = vst [vmem:[#allocation2 + $0x38] sm:$0xff] %v565
      %582 = vst [vmem:[#allocation2 + $0x40] sm:$0xff] %v566
      %583 = vst [vmem:[#allocation2 + $0x48] sm:$0xff] %v567
      %584 = vst [vmem:[#allocation2 + $0x50] sm:$0xff] %v568
      %585 = vst [vmem:[#allocation2 + $0x58] sm:$0xff] %v569
      %586 = vst [vmem:[#allocation2 + $0x60] sm:$0xff] %v570
      %587 = vst [vmem:[#allocation2 + $0x68] sm:$0xff] %v571
      %588 = vst [vmem:[#allocation2 + $0x70] sm:$0xff] %v572
      %589 = vst [vmem:[#allocation2 + $0x78] sm:$0xff] %v573
      // Predicated region
      $region41: #{unet_forward.15} parent=35 // pred_check
        %p590 = pneg %p345
      $region42: #{unet_forward.15} parent=35 // pred_check_branch
        %592 = sbr.rel (%p590) target = $region44
      $region43: #{unet_forward.15} parent=35 // pred_region
        %v593 = vld [vmem:[#allocation2] sm:$0xff]
        %v594 = vld [vmem:[#allocation2 + $0x8] sm:$0xff]
        %v595 = vld [vmem:[#allocation2 + $0x10] sm:$0xff]
        %v596 = vld [vmem:[#allocation2 + $0x18] sm:$0xff]
        %v597 = vld [vmem:[#allocation2 + $0x20] sm:$0xff]
        %v598 = vld [vmem:[#allocation2 + $0x28] sm:$0xff]
        %v599 = vld [vmem:[#allocation2 + $0x30] sm:$0xff]
        %v600 = vld [vmem:[#allocation2 + $0x38] sm:$0xff]
        %v601 = vld [vmem:[#allocation2 + $0x40] sm:$0xff]
        %v602 = vld [vmem:[#allocation2 + $0x48] sm:$0xff]
        %v603 = vld [vmem:[#allocation2 + $0x50] sm:$0xff]
        %v604 = vld [vmem:[#allocation2 + $0x58] sm:$0xff]
        %v605 = vld [vmem:[#allocation2 + $0x60] sm:$0xff]
        %v606 = vld [vmem:[#allocation2 + $0x68] sm:$0xff]
        %v607 = vld [vmem:[#allocation2 + $0x70] sm:$0xff]
        %v608 = vld [vmem:[#allocation2 + $0x78] sm:$0xff]
        %v609 = vld [vmem:[%s328] sm:$0x1]
        %v611 = vperm.slane %v609, 0
        %v613 = vmul.f32 %v593, %v611
        %v614 = vmul.f32 %v594, %v611
        %v615 = vmul.f32 %v595, %v611
        %v616 = vmul.f32 %v596, %v611
        %v617 = vmul.f32 %v597, %v611
        %v618 = vmul.f32 %v598, %v611
        %v619 = vmul.f32 %v599, %v611
        %v620 = vmul.f32 %v600, %v611
        %v621 = vmul.f32 %v601, %v611
        %v622 = vmul.f32 %v602, %v611
        %v623 = vmul.f32 %v603, %v611
        %v624 = vmul.f32 %v604, %v611
        %v625 = vmul.f32 %v605, %v611
        %v626 = vmul.f32 %v606, %v611
        %v627 = vmul.f32 %v607, %v611
        %v628 = vmul.f32 %v608, %v611
        %v629 = vld [vmem:[%s331] sm:$0x1]
        %v631 = vperm.slane %v629, 0
        %v633 = vadd.f32 %v613, %v631
        %v634 = vadd.f32 %v614, %v631
        %v635 = vadd.f32 %v615, %v631
        %v636 = vadd.f32 %v616, %v631
        %v637 = vadd.f32 %v617, %v631
        %v638 = vadd.f32 %v618, %v631
        %v639 = vadd.f32 %v619, %v631
        %v640 = vadd.f32 %v620, %v631
        %v641 = vadd.f32 %v621, %v631
        %v642 = vadd.f32 %v622, %v631
        %v643 = vadd.f32 %v623, %v631
        %v644 = vadd.f32 %v624, %v631
        %v645 = vadd.f32 %v625, %v631
        %v646 = vadd.f32 %v626, %v631
        %v647 = vadd.f32 %v627, %v631
        %v648 = vadd.f32 %v628, %v631
        %v649 = vtanh.pop %v633
        %v650 = vtanh.pop %v634
        %v651 = vtanh.pop %v635
        %v652 = vtanh.pop %v636
        %v653 = vtanh.pop %v637
        %v654 = vtanh.pop %v638
        %v655 = vtanh.pop %v639
        %v656 = vtanh.pop %v640
        %v657 = vtanh.pop %v641
        %v658 = vtanh.pop %v642
        %v659 = vtanh.pop %v643
        %v660 = vtanh.pop %v644
        %v661 = vtanh.pop %v645
        %v662 = vtanh.pop %v646
        %v663 = vtanh.pop %v647
        %v664 = vtanh.pop %v648
        %v665 = vpack.c.bf16 %v649, %v649
        %v666 = vpack.c.bf16 %v650, %v650
        %v667 = vpack.c.bf16 %v651, %v651
        %v668 = vpack.c.bf16 %v652, %v652
        %v669 = vpack.c.bf16 %v653, %v653
        %v670 = vpack.c.bf16 %v654, %v654
        %v671 = vpack.c.bf16 %v655, %v655
        %v672 = vpack.c.bf16 %v656, %v656
        %v673 = vpack.c.bf16 %v657, %v657
        %v674 = vpack.c.bf16 %v658, %v658
        %v675 = vpack.c.bf16 %v659, %v659
        %v676 = vpack.c.bf16 %v660, %v660
        %v677 = vpack.c.bf16 %v661, %v661
        %v678 = vpack.c.bf16 %v662, %v662
        %v679 = vpack.c.bf16 %v663, %v663
        %v680 = vpack.c.bf16 %v664, %v664
        %681 = vst [vmem:[%s343] sm:$0xf] %v665
        %682 = vst [vmem:[%s343 + $0x4] sm:$0xf] %v666
        %683 = vst [vmem:[%s343 + $0x8] sm:$0xf] %v667
        %684 = vst [vmem:[%s343 + $0xc] sm:$0xf] %v668
        %685 = vst [vmem:[%s343 + $0x10] sm:$0xf] %v669
        %686 = vst [vmem:[%s343 + $0x14] sm:$0xf] %v670
        %687 = vst [vmem:[%s343 + $0x18] sm:$0xf] %v671
        %688 = vst [vmem:[%s343 + $0x1c] sm:$0xf] %v672
        %689 = vst [vmem:[%s343 + $0x20] sm:$0xf] %v673
        %690 = vst [vmem:[%s343 + $0x24] sm:$0xf] %v674
        %691 = vst [vmem:[%s343 + $0x28] sm:$0xf] %v675
        %692 = vst [vmem:[%s343 + $0x2c] sm:$0xf] %v676
        %693 = vst [vmem:[%s343 + $0x30] sm:$0xf] %v677
        %694 = vst [vmem:[%s343 + $0x34] sm:$0xf] %v678
        %695 = vst [vmem:[%s343 + $0x38] sm:$0xf] %v679
        %696 = vst [vmem:[%s343 + $0x3c] sm:$0xf] %v680
      $region44: #{unet_forward.15} parent=35 // pred_fallthru
        _
      %s697 = smul.u32 16, %s22
      %p698 = scmp.lt.s32.totalorder %s21, 3
      %s699 = scalar_select %p698, %s21, 3
      %p700 = scmp.lt.s32.totalorder %s697, 15
      %s701 = scalar_select %p700, %s697, 15
      %p702 = scmp.lt.s32.totalorder %s23, 0
      %s703 = scalar_select %p702, %s23, 0
      %s704 = sadd.s32 %s703, %s701
      %s705 = smul.addr %s699, 16
      %s706 = sadd.s32 %s704, %s705
      %s707 = smul.addr %s706, 4
      %s708 = scalar_lea.vmem %s4, %s707
      // Predicated region
      $region45: #{unet_forward.15} parent=35 // pred_check
        %p709 = pneg %p175
      $region46: #{unet_forward.15} parent=35 // pred_check_branch
        %711 = sbr.rel (%p709) target = $region48
      $region47: #{unet_forward.15} parent=35 // pred_region
        %s712 = smul.u32 16, %s22
      $region48: #{unet_forward.15} parent=35 // pred_fallthru
        _
    $region36: #{unet_forward.15} parent=5 // pred_fallthru
      _
    %p713 = scmp.le.s32.totalorder 2, %s10
    // Predicated region
    $region49: #{unet_forward.15} parent=5 // pred_check
      %p714 = pneg %p713
    $region50: #{unet_forward.15} parent=5 // pred_check_branch
      %716 = sbr.rel (%p714) target = $region52
    $region51: #{unet_forward.15} parent=5 // pred_region
      %s717 = ssub.s32 %s10, 2
      // Predicated region
      $region53: #{unet_forward.15} parent=51 // pred_check
        %p718 = pneg %p181
      $region54: #{unet_forward.15} parent=51 // pred_check_branch
        %720 = sbr.rel (%p718) target = $region56
      $region55: #{unet_forward.15} parent=51 // pred_region
        %s721 = smul.u32 16, %s26
        %p722 = scmp.lt.s32.totalorder %s25, 3
        %s723 = scalar_select %p722, %s25, 3
        %p724 = scmp.lt.s32.totalorder %s721, 15
        %s725 = scalar_select %p724, %s721, 15
        %p726 = scmp.lt.s32.totalorder %s27, 0
        %s727 = scalar_select %p726, %s27, 0
        %s728 = sadd.s32 %s727, %s725
        %s729 = smul.addr %s723, 16
        %s730 = sadd.s32 %s728, %s729
        %s731 = smul.addr %s730, 4
        %s732 = scalar_lea.vmem %s4, %s731
      $region56: #{unet_forward.15} parent=51 // pred_fallthru
        _
    $region52: #{unet_forward.15} parent=5 // pred_fallthru
      _
  $region6: #{unet_forward.15} parent=0 // loop_footer
    %s14 = sadd.s32 1, %s10
  $region7: #{unet_forward.15} parent=0 // loop_footer_branch
    %9 = sbr.rel target = $region3
  $region8: #{unet_forward.15} parent=0 // loop_exit
    _

</llo_original>
